<compile_context>
chip_gen: v5e
topology: v5e:2x2
jax: 0.10.0
libtpu: 0.0.40
codegen_flags: <defaults>
</compile_context>

<pallas_src>
import functools

import jax
import jax.numpy as jnp
from jax import lax
from jax.experimental import pallas as pl
from jax.experimental.pallas import tpu as pltpu

# fixed ConvNetTrad hyper-parameters
KH1, KW1 = 4, 20          # conv1 kernel
PH, PW = 2, 4             # maxpool kernel == stride
KH2, KW2 = 2, 4           # conv2 kernel
F1 = 64                   # conv1 feature maps
F2 = 64                   # conv2 feature maps
FC1_N, FC2_N = 32, 128
N_PAD = 128               # lane-dense padded logit width
NEG = -1e30               # pad-logit bias (exp underflows to exactly 0)


def conv_dims(n_features, n_frames):
    h1, w1 = n_features - KH1 + 1, n_frames - KW1 + 1          # conv1 out
    h2, w2 = (h1 - PH) // PH + 1, (w1 - PW) // PW + 1          # pool out (floor)
    h3, w3 = h2 - KH2 + 1, w2 - KW2 + 1                        # conv2 out
    return dict(h1=h1, w1=w1, h2=h2, w2=w2, h3=h3, w3=w3)


# ---------------------------------------------------------------------------
# Fused Pallas kernel: conv1 + pool + conv2 + fc1/fc2/fc3 + softmax
# ---------------------------------------------------------------------------
def _make_fused_kernel(*, bp, h2, w2, h3, w3):
    group_rows = h2 * w2 * bp          # rows per pooling-offset group
    n_groups = PH * PW                 # 8
    s_spatial = h3 * w3                # conv2 spatial positions

    def kernel(p1_ref, w1_ref, w2_ref, wf1_ref, wf2_ref, wf3_ref, bias_ref, out_ref):
        # consolidated bias slab: row0=b1, row1=b2, row2=bf1, row3=bf2, row4=bf3(-1e30 pad)
        biases = bias_ref[...]                               # (8,128) f32, one vreg
        b1 = biases[0:1, 0:F1]
        b2 = biases[1:2, 0:F2]
        bf1 = biases[2:3, 0:FC1_N]
        bf2 = biases[3:4, 0:FC2_N]
        bf3 = biases[4:5, :]

        # ---- conv1: one long bf16 matmul over all 8 pool-offset groups -------
        a_all = jnp.dot(p1_ref[...], w1_ref[...],
                        preferred_element_type=jnp.float32)   # (8*group_rows, 64) f32
        # 2x4 max-pool = max tree over the 8 contiguous row groups
        pooled = a_all[0:group_rows, :]
        for g in range(1, n_groups):
            pooled = jnp.maximum(pooled, a_all[g * group_rows:(g + 1) * group_rows, :])
        # bias + relu hoisted past the pool (per-channel bias, monotone relu), f32
        pooled = jnp.maximum(pooled + b1, 0.0)                # rows = (ph, pw, b)

        # ---- conv2 (2x4): 8-tap accumulated matmuls, no 512-lane concat ------
        y2 = None
        for dh in range(KH2):
            for dw in range(KW2):
                t = dh * KW2 + dw
                blocks = [
                    pooled[((hh + dh) * w2 + dw) * bp:((hh + dh) * w2 + dw + w3) * bp, :]
                    for hh in range(h3)
                ]                                             # sublane-aligned slices
                tap = jnp.concatenate(blocks, axis=0).astype(jnp.bfloat16)  # (h3*w3*bp, 64)
                part = jnp.dot(tap, w2_ref[pl.ds(t * F1, F1), :],
                               preferred_element_type=jnp.float32)
                y2 = part if y2 is None else y2 + part
        y2 = jnp.maximum(y2 + b2, 0.0)                        # rows = (h3, w3, b), f32

        # ---- torch NCHW flatten folded into fc1's pre-permuted weights -------
        yb = jnp.concatenate(
            [y2[s * bp:(s + 1) * bp, :] for s in range(s_spatial)],
            axis=1).astype(jnp.bfloat16)                      # (bp, 64*S)

        z1 = jnp.dot(yb, wf1_ref[...], preferred_element_type=jnp.float32) + bf1
        # dropout_layer1 (p=0.2): identity at inference
        z2 = jnp.dot(z1.astype(jnp.bfloat16), wf2_ref[...],
                     preferred_element_type=jnp.float32) + bf2
        z2 = jnp.maximum(z2, 0.0)
        # dropout_layer2 (p=0.5): identity at inference
        logits = jnp.dot(z2.astype(jnp.bfloat16), wf3_ref[...],
                         preferred_element_type=jnp.float32) + bf3

        # softmax over the 128-lane slab (padded lanes carry -1e30 -> exp == 0)
        m = jnp.max(logits, axis=1, keepdims=True)
        e = jnp.exp(logits - m)
        denom = jnp.sum(e, axis=1, keepdims=True)
        # exact reciprocal: rows must sum to 1 (approx=True drifted past 1e-3)
        out_ref[...] = e * pl.reciprocal(denom, approx=False)

    return kernel


# ---------------------------------------------------------------------------
# Wrapper glue
# ---------------------------------------------------------------------------
def _im2col_conv1_pooled_order(x, bp, dims, ck_pad):
    """conv1 im2col, rows ordered (pool_dh, pool_dw, ph, pw, batch), bf16, K padded."""
    b, c, hh, ww = x.shape
    h1, w1, h2, w2 = dims["h1"], dims["w1"], dims["h2"], dims["w2"]
    ck = c * KH1 * KW1
    xp = jnp.zeros((bp, c, hh, ww), jnp.float32).at[:b].set(x.astype(jnp.float32))
    # (bp, c, h1, w1, kh*kw); patch-element index = dh*KW1 + dw
    wins = jnp.stack([xp[:, :, dh:dh + h1, dw:dw + w1]
                      for dh in range(KH1) for dw in range(KW1)], axis=-1)
    # -> (bp, h1, w1, c*kh*kw): column order (c, dh, dw) == torch conv-weight flatten
    wins = wins.transpose(0, 2, 3, 1, 4).reshape(bp, h1, w1, ck)
    # keep only the region the max-pool consumes and regroup for pooling
    wins = wins[:, :h2 * PH, :w2 * PW, :].reshape(bp, h2, PH, w2, PW, ck)
    # -> rows (pool_dh, pool_dw, ph, pw, b)
    wins = wins.transpose(2, 4, 1, 3, 0, 5).reshape(PH * PW * h2 * w2 * bp, ck)
    # lane-dense K (80 -> 128) + bf16: halves HBM->VMEM bytes, one 128-deep MXU pass
    wins = jnp.pad(wins, ((0, 0), (0, ck_pad - ck))).astype(jnp.bfloat16)
    return wins


@functools.partial(jax.jit, static_argnames=("n_classes",))
def forward(packed, x, n_classes):
    b, c, hh, ww = x.shape
    dims = conv_dims(hh, ww)
    h2, w2, h3, w3 = dims["h2"], dims["w2"], dims["h3"], dims["w3"]
    bp = max(8, -(-b // 8) * 8)                      # pad batch to 8 sublanes
    ck_pad = packed["w1"].shape[0]

    patches = _im2col_conv1_pooled_order(x, bp, dims, ck_pad)
    kernel = _make_fused_kernel(bp=bp, h2=h2, w2=w2, h3=h3, w3=w3)

    args = (patches,
            packed["w1"], packed["w2"], packed["wf1"],
            packed["wf2"], packed["wf3"], packed["bias"])
    out_pad = pl.pallas_call(
        kernel,
        out_shape=jax.ShapeDtypeStruct((bp, N_PAD), jnp.float32),
        in_specs=[pl.BlockSpec(memory_space=pltpu.MemorySpace.VMEM) for _ in args],
        out_specs=pl.BlockSpec(memory_space=pltpu.MemorySpace.VMEM),
    )(*args)
    return out_pad[:b, :n_classes]


# ---------------------------------------------------------------------------
# Parameters: torch-layout init + one-time repack into kernel matmul layouts
# ---------------------------------------------------------------------------
def init_params(key, n_classes, data_size):
    c, n_features, n_frames = data_size
    d = conv_dims(n_features, n_frames)
    fc_in = F2 * d["h3"] * d["w3"]

    def uni(k, shape, fan_in):
        bound = fan_in ** -0.5
        return jax.random.uniform(k, shape, jnp.float32, -bound, bound)

    ks = jax.random.split(key, 10)
    return {
        "conv1_w": uni(ks[0], (F1, c, KH1, KW1), c * KH1 * KW1),
        "conv1_b": uni(ks[1], (F1,), c * KH1 * KW1),
        "conv2_w": uni(ks[2], (F2, F1, KH2, KW2), F1 * KH2 * KW2),
        "conv2_b": uni(ks[3], (F2,), F1 * KH2 * KW2),
        "fc1_w": uni(ks[4], (FC1_N, fc_in), fc_in),
        "fc1_b": uni(ks[5], (FC1_N,), fc_in),
        "fc2_w": uni(ks[6], (FC2_N, FC1_N), FC1_N),
        "fc2_b": uni(ks[7], (FC2_N,), FC1_N),
        "fc3_w": uni(ks[8], (n_classes, FC2_N), FC2_N),
        "fc3_b": uni(ks[9], (n_classes,), FC2_N),
    }


def pack_params(raw, n_classes, data_size):
    """One-time repack of torch-layout params into the kernel's bf16 matmul layouts."""
    c, n_features, n_frames = data_size
    d = conv_dims(n_features, n_frames)
    s = d["h3"] * d["w3"]
    ck = c * KH1 * KW1
    ck_pad = -(-ck // 128) * 128
    assert n_classes <= N_PAD

    # conv1: (F1, C, kh, kw) -> (C*kh*kw, F1), column order (c, dh, dw); K padded to 128
    w1 = raw["conv1_w"].reshape(F1, ck).T
    w1 = jnp.pad(w1, ((0, ck_pad - ck), (0, 0)))
    # fc3: pad to a lane-dense 128-wide logit slab (pad lanes get bias = -1e30)
    wf3 = jnp.zeros((FC2_N, N_PAD), jnp.float32).at[:, :n_classes].set(raw["fc3_w"].T)

    # consolidated (8,128) f32 bias slab: one DMA instead of five tiny ones
    bias = jnp.zeros((8, 128), jnp.float32)
    bias = bias.at[0, :F1].set(raw["conv1_b"])
    bias = bias.at[1, :F2].set(raw["conv2_b"])
    bias = bias.at[2, :FC1_N].set(raw["fc1_b"])
    bias = bias.at[3, :FC2_N].set(raw["fc2_b"])
    bias = bias.at[4, :].set(NEG)
    bias = bias.at[4, :n_classes].set(raw["fc3_b"])

    return {
        "w1": w1.astype(jnp.bfloat16),
        # conv2: (F2, F1, kh, kw) -> (kh, kw, F1, F2) -> (kh*kw*F1, F2)
        "w2": raw["conv2_w"].transpose(2, 3, 1, 0).reshape(KH2 * KW2 * F1, F2)
                 .astype(jnp.bfloat16),
        # fc1: torch flatten is (f, h3, w3); kernel feeds (s, f) -> permute rows once
        "wf1": raw["fc1_w"].reshape(FC1_N, F2, s).transpose(2, 1, 0).reshape(s * F2, FC1_N)
                  .astype(jnp.bfloat16),
        "wf2": raw["fc2_w"].T.astype(jnp.bfloat16),
        "wf3": wf3.astype(jnp.bfloat16),
        "bias": bias,
    }


# ---------------------------------------------------------------------------
# Plain-XLA reference of the original torch forward (for the runtime check)
# ---------------------------------------------------------------------------
def reference_forward(raw, x):
    hp = lax.Precision.HIGHEST
    y = lax.conv_general_dilated(x, raw["conv1_w"], (1, 1), "VALID",
                                 dimension_numbers=("NCHW", "OIHW", "NCHW"), precision=hp)
    y = jnp.maximum(y + raw["conv1_b"][None, :, None, None], 0.0)
    y = lax.reduce_window(y, -jnp.inf, lax.max, (1, 1, PH, PW), (1, 1, PH, PW), "VALID")
    y = lax.conv_general_dilated(y, raw["conv2_w"], (1, 1), "VALID",
                                 dimension_numbers=("NCHW", "OIHW", "NCHW"), precision=hp)
    y = jnp.maximum(y + raw["conv2_b"][None, :, None, None], 0.0)
    h = y.reshape(y.shape[0], -1)
    h = jnp.dot(h, raw["fc1_w"].T, precision=hp) + raw["fc1_b"]
    h = jnp.maximum(jnp.dot(h, raw["fc2_w"].T, precision=hp) + raw["fc2_b"], 0.0)
    logits = jnp.dot(h, raw["fc3_w"].T, precision=hp) + raw["fc3_b"]
    return jax.nn.softmax(logits, axis=1)


# ---------------------------------------------------------------------------
if __name__ == "__main__":
    n_classes = 10
    data_size = (1, 13, 50)        # (n_channels, n_features [MFCC], n_frames)
    batch = 2

    key = jax.random.PRNGKey(0)
    k_param, k_x = jax.random.split(key)
    raw = init_params(k_param, n_classes, data_size)
    packed = pack_params(raw, n_classes, data_size)

    x = jax.random.normal(k_x, (batch,) + data_size, dtype=jnp.float32)

    out = forward(packed, x, n_classes)
    out = jax.block_until_ready(out)

    assert out.shape == (batch, n_classes)
    assert bool(jnp.all(jnp.isfinite(out)))
    # exact-reciprocal softmax: rows sum to 1 up to f32 rounding
    assert bool(jnp.allclose(jnp.sum(out, axis=1), 1.0, atol=1e-3))

    # semantics check against a plain-XLA f32 reference of the torch forward
    # (kernel uses bf16 MXU operands with f32 accumulation)
    ref = reference_forward(raw, x)
    assert bool(jnp.allclose(out, ref, atol=2e-2, rtol=2e-2)), \
        f"max abs diff {float(jnp.max(jnp.abs(out - ref)))}"

    print("KERNEL_OK")
</pallas_src>

<mosaic_0001>
module attributes {stable_mosaic.version = 11 : i64} {
  func.func @kernel(%arg0: memref<2240x128xbf16, #tpu.memory_space<vmem>>, %arg1: memref<128x64xbf16, #tpu.memory_space<vmem>>, %arg2: memref<512x64xbf16, #tpu.memory_space<vmem>>, %arg3: memref<1024x32xbf16, #tpu.memory_space<vmem>>, %arg4: memref<32x128xbf16, #tpu.memory_space<vmem>>, %arg5: memref<128x128xbf16, #tpu.memory_space<vmem>>, %arg6: memref<8x128xf32, #tpu.memory_space<vmem>>, %arg7: memref<8x128xf32, #tpu.memory_space<vmem>>) attributes {dimension_semantics = [], scalar_prefetch = 0 : i64, scratch_operands = 0 : i64, tpu.core_type = #tpu.core_type<tc>} {
    %c0 = arith.constant 0 : index
    %c0_0 = arith.constant 0 : index
    %0 = vector.load %arg6[%c0, %c0_0] : memref<8x128xf32, #tpu.memory_space<vmem>>, vector<8x128xf32>
    %1 = vector.extract_strided_slice %0 {offsets = [0, 0], sizes = [1, 64], strides = [1, 1]} : vector<8x128xf32> to vector<1x64xf32>
    %2 = vector.extract_strided_slice %0 {offsets = [1, 0], sizes = [1, 64], strides = [1, 1]} : vector<8x128xf32> to vector<1x64xf32>
    %3 = vector.extract_strided_slice %0 {offsets = [2, 0], sizes = [1, 32], strides = [1, 1]} : vector<8x128xf32> to vector<1x32xf32>
    %4 = vector.extract_strided_slice %0 {offsets = [3, 0], sizes = [1, 128], strides = [1, 1]} : vector<8x128xf32> to vector<1x128xf32>
    %5 = vector.extract_strided_slice %0 {offsets = [4, 0], sizes = [1, 128], strides = [1, 1]} : vector<8x128xf32> to vector<1x128xf32>
    %c0_1 = arith.constant 0 : index
    %c0_2 = arith.constant 0 : index
    %6 = vector.load %arg0[%c0_1, %c0_2] : memref<2240x128xbf16, #tpu.memory_space<vmem>>, vector<2240x128xbf16>
    %c0_3 = arith.constant 0 : index
    %c0_4 = arith.constant 0 : index
    %7 = vector.load %arg1[%c0_3, %c0_4] : memref<128x64xbf16, #tpu.memory_space<vmem>>, vector<128x64xbf16>
    %cst = arith.constant dense<0.000000e+00> : vector<2240x64xf32>
    %8 = tpu.matmul %6, %7, %cst {dimension_numbers = #tpu.dot_dimension_numbers<[1], [0], [0], [1], [0, 0, 1, 1], [], []>} : vector<2240x128xbf16>, vector<128x64xbf16>, vector<2240x64xf32> -> vector<2240x64xf32>
    %9 = vector.extract_strided_slice %8 {offsets = [0, 0], sizes = [280, 64], strides = [1, 1]} : vector<2240x64xf32> to vector<280x64xf32>
    %10 = vector.extract_strided_slice %8 {offsets = [280, 0], sizes = [280, 64], strides = [1, 1]} : vector<2240x64xf32> to vector<280x64xf32>
    %11 = arith.maximumf %9, %10 : vector<280x64xf32>
    %12 = vector.extract_strided_slice %8 {offsets = [560, 0], sizes = [280, 64], strides = [1, 1]} : vector<2240x64xf32> to vector<280x64xf32>
    %13 = arith.maximumf %11, %12 : vector<280x64xf32>
    %14 = vector.extract_strided_slice %8 {offsets = [840, 0], sizes = [280, 64], strides = [1, 1]} : vector<2240x64xf32> to vector<280x64xf32>
    %15 = arith.maximumf %13, %14 : vector<280x64xf32>
    %16 = vector.extract_strided_slice %8 {offsets = [1120, 0], sizes = [280, 64], strides = [1, 1]} : vector<2240x64xf32> to vector<280x64xf32>
    %17 = arith.maximumf %15, %16 : vector<280x64xf32>
    %18 = vector.extract_strided_slice %8 {offsets = [1400, 0], sizes = [280, 64], strides = [1, 1]} : vector<2240x64xf32> to vector<280x64xf32>
    %19 = arith.maximumf %17, %18 : vector<280x64xf32>
    %20 = vector.extract_strided_slice %8 {offsets = [1680, 0], sizes = [280, 64], strides = [1, 1]} : vector<2240x64xf32> to vector<280x64xf32>
    %21 = arith.maximumf %19, %20 : vector<280x64xf32>
    %22 = vector.extract_strided_slice %8 {offsets = [1960, 0], sizes = [280, 64], strides = [1, 1]} : vector<2240x64xf32> to vector<280x64xf32>
    %23 = arith.maximumf %21, %22 : vector<280x64xf32>
    %24 = vector.broadcast %1 : vector<1x64xf32> to vector<280x64xf32>
    %25 = arith.addf %23, %24 : vector<280x64xf32>
    %cst_5 = arith.constant 0.000000e+00 : f32
    %26 = vector.broadcast %cst_5 : f32 to vector<280x64xf32>
    %27 = arith.maximumf %25, %26 : vector<280x64xf32>
    %28 = vector.extract_strided_slice %27 {offsets = [0, 0], sizes = [32, 64], strides = [1, 1]} : vector<280x64xf32> to vector<32x64xf32>
    %29 = vector.extract_strided_slice %27 {offsets = [56, 0], sizes = [32, 64], strides = [1, 1]} : vector<280x64xf32> to vector<32x64xf32>
    %30 = vector.extract_strided_slice %27 {offsets = [112, 0], sizes = [32, 64], strides = [1, 1]} : vector<280x64xf32> to vector<32x64xf32>
    %31 = vector.extract_strided_slice %27 {offsets = [168, 0], sizes = [32, 64], strides = [1, 1]} : vector<280x64xf32> to vector<32x64xf32>
    %32 = tpu.concatenate %28, %29, %30, %31 in 0 : vector<32x64xf32>, vector<32x64xf32>, vector<32x64xf32>, vector<32x64xf32> -> vector<128x64xf32>
    %33 = arith.truncf %32 : vector<128x64xf32> to vector<128x64xbf16>
    %c0_6 = arith.constant 0 : index
    %c0_7 = arith.constant 0 : index
    %34 = vector.load %arg2[%c0_6, %c0_7] : memref<512x64xbf16, #tpu.memory_space<vmem>>, vector<64x64xbf16>
    %cst_8 = arith.constant dense<0.000000e+00> : vector<128x64xf32>
    %35 = tpu.matmul %33, %34, %cst_8 {dimension_numbers = #tpu.dot_dimension_numbers<[1], [0], [0], [1], [0, 0, 1, 1], [], []>} : vector<128x64xbf16>, vector<64x64xbf16>, vector<128x64xf32> -> vector<128x64xf32>
    %36 = vector.extract_strided_slice %27 {offsets = [8, 0], sizes = [32, 64], strides = [1, 1]} : vector<280x64xf32> to vector<32x64xf32>
    %37 = vector.extract_strided_slice %27 {offsets = [64, 0], sizes = [32, 64], strides = [1, 1]} : vector<280x64xf32> to vector<32x64xf32>
    %38 = vector.extract_strided_slice %27 {offsets = [120, 0], sizes = [32, 64], strides = [1, 1]} : vector<280x64xf32> to vector<32x64xf32>
    %39 = vector.extract_strided_slice %27 {offsets = [176, 0], sizes = [32, 64], strides = [1, 1]} : vector<280x64xf32> to vector<32x64xf32>
    %40 = tpu.concatenate %36, %37, %38, %39 in 0 : vector<32x64xf32>, vector<32x64xf32>, vector<32x64xf32>, vector<32x64xf32> -> vector<128x64xf32>
    %41 = arith.truncf %40 : vector<128x64xf32> to vector<128x64xbf16>
    %c64 = arith.constant 64 : index
    %c0_9 = arith.constant 0 : index
    %42 = vector.load %arg2[%c64, %c0_9] : memref<512x64xbf16, #tpu.memory_space<vmem>>, vector<64x64xbf16>
    %cst_10 = arith.constant dense<0.000000e+00> : vector<128x64xf32>
    %43 = tpu.matmul %41, %42, %cst_10 {dimension_numbers = #tpu.dot_dimension_numbers<[1], [0], [0], [1], [0, 0, 1, 1], [], []>} : vector<128x64xbf16>, vector<64x64xbf16>, vector<128x64xf32> -> vector<128x64xf32>
    %44 = arith.addf %35, %43 : vector<128x64xf32>
    %45 = vector.extract_strided_slice %27 {offsets = [16, 0], sizes = [32, 64], strides = [1, 1]} : vector<280x64xf32> to vector<32x64xf32>
    %46 = vector.extract_strided_slice %27 {offsets = [72, 0], sizes = [32, 64], strides = [1, 1]} : vector<280x64xf32> to vector<32x64xf32>
    %47 = vector.extract_strided_slice %27 {offsets = [128, 0], sizes = [32, 64], strides = [1, 1]} : vector<280x64xf32> to vector<32x64xf32>
    %48 = vector.extract_strided_slice %27 {offsets = [184, 0], sizes = [32, 64], strides = [1, 1]} : vector<280x64xf32> to vector<32x64xf32>
    %49 = tpu.concatenate %45, %46, %47, %48 in 0 : vector<32x64xf32>, vector<32x64xf32>, vector<32x64xf32>, vector<32x64xf32> -> vector<128x64xf32>
    %50 = arith.truncf %49 : vector<128x64xf32> to vector<128x64xbf16>
    %c128 = arith.constant 128 : index
    %c0_11 = arith.constant 0 : index
    %51 = vector.load %arg2[%c128, %c0_11] : memref<512x64xbf16, #tpu.memory_space<vmem>>, vector<64x64xbf16>
    %cst_12 = arith.constant dense<0.000000e+00> : vector<128x64xf32>
    %52 = tpu.matmul %50, %51, %cst_12 {dimension_numbers = #tpu.dot_dimension_numbers<[1], [0], [0], [1], [0, 0, 1, 1], [], []>} : vector<128x64xbf16>, vector<64x64xbf16>, vector<128x64xf32> -> vector<128x64xf32>
    %53 = arith.addf %44, %52 : vector<128x64xf32>
    %54 = vector.extract_strided_slice %27 {offsets = [24, 0], sizes = [32, 64], strides = [1, 1]} : vector<280x64xf32> to vector<32x64xf32>
    %55 = vector.extract_strided_slice %27 {offsets = [80, 0], sizes = [32, 64], strides = [1, 1]} : vector<280x64xf32> to vector<32x64xf32>
    %56 = vector.extract_strided_slice %27 {offsets = [136, 0], sizes = [32, 64], strides = [1, 1]} : vector<280x64xf32> to vector<32x64xf32>
    %57 = vector.extract_strided_slice %27 {offsets = [192, 0], sizes = [32, 64], strides = [1, 1]} : vector<280x64xf32> to vector<32x64xf32>
    %58 = tpu.concatenate %54, %55, %56, %57 in 0 : vector<32x64xf32>, vector<32x64xf32>, vector<32x64xf32>, vector<32x64xf32> -> vector<128x64xf32>
    %59 = arith.truncf %58 : vector<128x64xf32> to vector<128x64xbf16>
    %c192 = arith.constant 192 : index
    %c0_13 = arith.constant 0 : index
    %60 = vector.load %arg2[%c192, %c0_13] : memref<512x64xbf16, #tpu.memory_space<vmem>>, vector<64x64xbf16>
    %cst_14 = arith.constant dense<0.000000e+00> : vector<128x64xf32>
    %61 = tpu.matmul %59, %60, %cst_14 {dimension_numbers = #tpu.dot_dimension_numbers<[1], [0], [0], [1], [0, 0, 1, 1], [], []>} : vector<128x64xbf16>, vector<64x64xbf16>, vector<128x64xf32> -> vector<128x64xf32>
    %62 = arith.addf %53, %61 : vector<128x64xf32>
    %63 = vector.extract_strided_slice %27 {offsets = [56, 0], sizes = [32, 64], strides = [1, 1]} : vector<280x64xf32> to vector<32x64xf32>
    %64 = vector.extract_strided_slice %27 {offsets = [112, 0], sizes = [32, 64], strides = [1, 1]} : vector<280x64xf32> to vector<32x64xf32>
    %65 = vector.extract_strided_slice %27 {offsets = [168, 0], sizes = [32, 64], strides = [1, 1]} : vector<280x64xf32> to vector<32x64xf32>
    %66 = vector.extract_strided_slice %27 {offsets = [224, 0], sizes = [32, 64], strides = [1, 1]} : vector<280x64xf32> to vector<32x64xf32>
    %67 = tpu.concatenate %63, %64, %65, %66 in 0 : vector<32x64xf32>, vector<32x64xf32>, vector<32x64xf32>, vector<32x64xf32> -> vector<128x64xf32>
    %68 = arith.truncf %67 : vector<128x64xf32> to vector<128x64xbf16>
    %c256 = arith.constant 256 : index
    %c0_15 = arith.constant 0 : index
    %69 = vector.load %arg2[%c256, %c0_15] : memref<512x64xbf16, #tpu.memory_space<vmem>>, vector<64x64xbf16>
    %cst_16 = arith.constant dense<0.000000e+00> : vector<128x64xf32>
    %70 = tpu.matmul %68, %69, %cst_16 {dimension_numbers = #tpu.dot_dimension_numbers<[1], [0], [0], [1], [0, 0, 1, 1], [], []>} : vector<128x64xbf16>, vector<64x64xbf16>, vector<128x64xf32> -> vector<128x64xf32>
    %71 = arith.addf %62, %70 : vector<128x64xf32>
    %72 = vector.extract_strided_slice %27 {offsets = [64, 0], sizes = [32, 64], strides = [1, 1]} : vector<280x64xf32> to vector<32x64xf32>
    %73 = vector.extract_strided_slice %27 {offsets = [120, 0], sizes = [32, 64], strides = [1, 1]} : vector<280x64xf32> to vector<32x64xf32>
    %74 = vector.extract_strided_slice %27 {offsets = [176, 0], sizes = [32, 64], strides = [1, 1]} : vector<280x64xf32> to vector<32x64xf32>
    %75 = vector.extract_strided_slice %27 {offsets = [232, 0], sizes = [32, 64], strides = [1, 1]} : vector<280x64xf32> to vector<32x64xf32>
    %76 = tpu.concatenate %72, %73, %74, %75 in 0 : vector<32x64xf32>, vector<32x64xf32>, vector<32x64xf32>, vector<32x64xf32> -> vector<128x64xf32>
    %77 = arith.truncf %76 : vector<128x64xf32> to vector<128x64xbf16>
    %c320 = arith.constant 320 : index
    %c0_17 = arith.constant 0 : index
    %78 = vector.load %arg2[%c320, %c0_17] : memref<512x64xbf16, #tpu.memory_space<vmem>>, vector<64x64xbf16>
    %cst_18 = arith.constant dense<0.000000e+00> : vector<128x64xf32>
    %79 = tpu.matmul %77, %78, %cst_18 {dimension_numbers = #tpu.dot_dimension_numbers<[1], [0], [0], [1], [0, 0, 1, 1], [], []>} : vector<128x64xbf16>, vector<64x64xbf16>, vector<128x64xf32> -> vector<128x64xf32>
    %80 = arith.addf %71, %79 : vector<128x64xf32>
    %81 = vector.extract_strided_slice %27 {offsets = [72, 0], sizes = [32, 64], strides = [1, 1]} : vector<280x64xf32> to vector<32x64xf32>
    %82 = vector.extract_strided_slice %27 {offsets = [128, 0], sizes = [32, 64], strides = [1, 1]} : vector<280x64xf32> to vector<32x64xf32>
    %83 = vector.extract_strided_slice %27 {offsets = [184, 0], sizes = [32, 64], strides = [1, 1]} : vector<280x64xf32> to vector<32x64xf32>
    %84 = vector.extract_strided_slice %27 {offsets = [240, 0], sizes = [32, 64], strides = [1, 1]} : vector<280x64xf32> to vector<32x64xf32>
    %85 = tpu.concatenate %81, %82, %83, %84 in 0 : vector<32x64xf32>, vector<32x64xf32>, vector<32x64xf32>, vector<32x64xf32> -> vector<128x64xf32>
    %86 = arith.truncf %85 : vector<128x64xf32> to vector<128x64xbf16>
    %c384 = arith.constant 384 : index
    %c0_19 = arith.constant 0 : index
    %87 = vector.load %arg2[%c384, %c0_19] : memref<512x64xbf16, #tpu.memory_space<vmem>>, vector<64x64xbf16>
    %cst_20 = arith.constant dense<0.000000e+00> : vector<128x64xf32>
    %88 = tpu.matmul %86, %87, %cst_20 {dimension_numbers = #tpu.dot_dimension_numbers<[1], [0], [0], [1], [0, 0, 1, 1], [], []>} : vector<128x64xbf16>, vector<64x64xbf16>, vector<128x64xf32> -> vector<128x64xf32>
    %89 = arith.addf %80, %88 : vector<128x64xf32>
    %90 = vector.extract_strided_slice %27 {offsets = [80, 0], sizes = [32, 64], strides = [1, 1]} : vector<280x64xf32> to vector<32x64xf32>
    %91 = vector.extract_strided_slice %27 {offsets = [136, 0], sizes = [32, 64], strides = [1, 1]} : vector<280x64xf32> to vector<32x64xf32>
    %92 = vector.extract_strided_slice %27 {offsets = [192, 0], sizes = [32, 64], strides = [1, 1]} : vector<280x64xf32> to vector<32x64xf32>
    %93 = vector.extract_strided_slice %27 {offsets = [248, 0], sizes = [32, 64], strides = [1, 1]} : vector<280x64xf32> to vector<32x64xf32>
    %94 = tpu.concatenate %90, %91, %92, %93 in 0 : vector<32x64xf32>, vector<32x64xf32>, vector<32x64xf32>, vector<32x64xf32> -> vector<128x64xf32>
    %95 = arith.truncf %94 : vector<128x64xf32> to vector<128x64xbf16>
    %c448 = arith.constant 448 : index
    %c0_21 = arith.constant 0 : index
    %96 = vector.load %arg2[%c448, %c0_21] : memref<512x64xbf16, #tpu.memory_space<vmem>>, vector<64x64xbf16>
    %cst_22 = arith.constant dense<0.000000e+00> : vector<128x64xf32>
    %97 = tpu.matmul %95, %96, %cst_22 {dimension_numbers = #tpu.dot_dimension_numbers<[1], [0], [0], [1], [0, 0, 1, 1], [], []>} : vector<128x64xbf16>, vector<64x64xbf16>, vector<128x64xf32> -> vector<128x64xf32>
    %98 = arith.addf %89, %97 : vector<128x64xf32>
    %99 = vector.broadcast %2 : vector<1x64xf32> to vector<128x64xf32>
    %100 = arith.addf %98, %99 : vector<128x64xf32>
    %cst_23 = arith.constant 0.000000e+00 : f32
    %101 = vector.broadcast %cst_23 : f32 to vector<128x64xf32>
    %102 = arith.maximumf %100, %101 : vector<128x64xf32>
    %103 = vector.extract_strided_slice %102 {offsets = [0, 0], sizes = [8, 64], strides = [1, 1]} : vector<128x64xf32> to vector<8x64xf32>
    %104 = vector.extract_strided_slice %102 {offsets = [8, 0], sizes = [8, 64], strides = [1, 1]} : vector<128x64xf32> to vector<8x64xf32>
    %105 = vector.extract_strided_slice %102 {offsets = [16, 0], sizes = [8, 64], strides = [1, 1]} : vector<128x64xf32> to vector<8x64xf32>
    %106 = vector.extract_strided_slice %102 {offsets = [24, 0], sizes = [8, 64], strides = [1, 1]} : vector<128x64xf32> to vector<8x64xf32>
    %107 = vector.extract_strided_slice %102 {offsets = [32, 0], sizes = [8, 64], strides = [1, 1]} : vector<128x64xf32> to vector<8x64xf32>
    %108 = vector.extract_strided_slice %102 {offsets = [40, 0], sizes = [8, 64], strides = [1, 1]} : vector<128x64xf32> to vector<8x64xf32>
    %109 = vector.extract_strided_slice %102 {offsets = [48, 0], sizes = [8, 64], strides = [1, 1]} : vector<128x64xf32> to vector<8x64xf32>
    %110 = vector.extract_strided_slice %102 {offsets = [56, 0], sizes = [8, 64], strides = [1, 1]} : vector<128x64xf32> to vector<8x64xf32>
    %111 = vector.extract_strided_slice %102 {offsets = [64, 0], sizes = [8, 64], strides = [1, 1]} : vector<128x64xf32> to vector<8x64xf32>
    %112 = vector.extract_strided_slice %102 {offsets = [72, 0], sizes = [8, 64], strides = [1, 1]} : vector<128x64xf32> to vector<8x64xf32>
    %113 = vector.extract_strided_slice %102 {offsets = [80, 0], sizes = [8, 64], strides = [1, 1]} : vector<128x64xf32> to vector<8x64xf32>
    %114 = vector.extract_strided_slice %102 {offsets = [88, 0], sizes = [8, 64], strides = [1, 1]} : vector<128x64xf32> to vector<8x64xf32>
    %115 = vector.extract_strided_slice %102 {offsets = [96, 0], sizes = [8, 64], strides = [1, 1]} : vector<128x64xf32> to vector<8x64xf32>
    %116 = vector.extract_strided_slice %102 {offsets = [104, 0], sizes = [8, 64], strides = [1, 1]} : vector<128x64xf32> to vector<8x64xf32>
    %117 = vector.extract_strided_slice %102 {offsets = [112, 0], sizes = [8, 64], strides = [1, 1]} : vector<128x64xf32> to vector<8x64xf32>
    %118 = vector.extract_strided_slice %102 {offsets = [120, 0], sizes = [8, 64], strides = [1, 1]} : vector<128x64xf32> to vector<8x64xf32>
    %119 = tpu.concatenate %103, %104, %105, %106, %107, %108, %109, %110, %111, %112, %113, %114, %115, %116, %117, %118 in 1 : vector<8x64xf32>, vector<8x64xf32>, vector<8x64xf32>, vector<8x64xf32>, vector<8x64xf32>, vector<8x64xf32>, vector<8x64xf32>, vector<8x64xf32>, vector<8x64xf32>, vector<8x64xf32>, vector<8x64xf32>, vector<8x64xf32>, vector<8x64xf32>, vector<8x64xf32>, vector<8x64xf32>, vector<8x64xf32> -> vector<8x1024xf32>
    %120 = arith.truncf %119 : vector<8x1024xf32> to vector<8x1024xbf16>
    %c0_24 = arith.constant 0 : index
    %c0_25 = arith.constant 0 : index
    %121 = vector.load %arg3[%c0_24, %c0_25] : memref<1024x32xbf16, #tpu.memory_space<vmem>>, vector<1024x32xbf16>
    %cst_26 = arith.constant dense<0.000000e+00> : vector<8x32xf32>
    %122 = tpu.matmul %120, %121, %cst_26 {dimension_numbers = #tpu.dot_dimension_numbers<[1], [0], [0], [1], [0, 0, 1, 1], [], []>} : vector<8x1024xbf16>, vector<1024x32xbf16>, vector<8x32xf32> -> vector<8x32xf32>
    %123 = vector.broadcast %3 : vector<1x32xf32> to vector<8x32xf32>
    %124 = arith.addf %122, %123 : vector<8x32xf32>
    %125 = arith.truncf %124 : vector<8x32xf32> to vector<8x32xbf16>
    %c0_27 = arith.constant 0 : index
    %c0_28 = arith.constant 0 : index
    %126 = vector.load %arg4[%c0_27, %c0_28] : memref<32x128xbf16, #tpu.memory_space<vmem>>, vector<32x128xbf16>
    %cst_29 = arith.constant dense<0.000000e+00> : vector<8x128xf32>
    %127 = tpu.matmul %125, %126, %cst_29 {dimension_numbers = #tpu.dot_dimension_numbers<[1], [0], [0], [1], [0, 0, 1, 1], [], []>} : vector<8x32xbf16>, vector<32x128xbf16>, vector<8x128xf32> -> vector<8x128xf32>
    %128 = vector.broadcast %4 : vector<1x128xf32> to vector<8x128xf32>
    %129 = arith.addf %127, %128 : vector<8x128xf32>
    %cst_30 = arith.constant 0.000000e+00 : f32
    %130 = vector.broadcast %cst_30 : f32 to vector<8x128xf32>
    %131 = arith.maximumf %129, %130 : vector<8x128xf32>
    %132 = arith.truncf %131 : vector<8x128xf32> to vector<8x128xbf16>
    %c0_31 = arith.constant 0 : index
    %c0_32 = arith.constant 0 : index
    %133 = vector.load %arg5[%c0_31, %c0_32] : memref<128x128xbf16, #tpu.memory_space<vmem>>, vector<128x128xbf16>
    %cst_33 = arith.constant dense<0.000000e+00> : vector<8x128xf32>
    %134 = tpu.matmul %132, %133, %cst_33 {dimension_numbers = #tpu.dot_dimension_numbers<[1], [0], [0], [1], [0, 0, 1, 1], [], []>} : vector<8x128xbf16>, vector<128x128xbf16>, vector<8x128xf32> -> vector<8x128xf32>
    %135 = vector.broadcast %5 : vector<1x128xf32> to vector<8x128xf32>
    %136 = arith.addf %134, %135 : vector<8x128xf32>
    %cst_34 = arith.constant dense<0xFF800000> : vector<8xf32>
    %137 = vector.multi_reduction <maximumf>, %136, %cst_34 [1] : vector<8x128xf32> to vector<8xf32>
    %138 = vector.shape_cast %137 : vector<8xf32> to vector<8x1xf32>
    %139 = vector.broadcast %138 : vector<8x1xf32> to vector<8x128xf32>
    %140 = arith.subf %136, %139 : vector<8x128xf32>
    %141 = math.exp %140 : vector<8x128xf32>
    %cst_35 = arith.constant dense<0.000000e+00> : vector<8xf32>
    %142 = vector.multi_reduction <add>, %141, %cst_35 [1] : vector<8x128xf32> to vector<8xf32>
    %143 = vector.shape_cast %142 : vector<8xf32> to vector<8x1xf32>
    %144 = tpu.reciprocal %143 : vector<8x1xf32> -> vector<8x1xf32>
    %145 = vector.broadcast %144 : vector<8x1xf32> to vector<8x128xf32>
    %146 = arith.mulf %141, %145 : vector<8x128xf32>
    %c0_36 = arith.constant 0 : index
    %c0_37 = arith.constant 0 : index
    %147 = vector.load %arg7[%c0_36, %c0_37] : memref<8x128xf32, #tpu.memory_space<vmem>>, vector<8x128xf32>
    tpu.vector_store %arg7[%c0_36, %c0_37], %146 {strides = array<i32>} : memref<8x128xf32, #tpu.memory_space<vmem>>, vector<8x128xf32>,
    return
  }
}

</mosaic_0001>

<llo_original>
// kernel: forward.1
$region0: #{forward.1}
  #allocation0 [shape = 'u32[]', space=smem, size = 0x4, offset = 0x4, fixed_abs, tag = 'smem constant byte address 0x4 - core index']
  #allocation1 [shape = 'u32[72,128]{1,0:T(1,128)}', space=vmem, size = 0x9000, scoped, tag = 'internal scratch']
  %s0 = inlined_call_operand.vmem [shape: bf16[2240,128], index: 0, kind: input, shape index: {}]
  %s1 = inlined_call_operand.vmem [shape: bf16[128,64], index: 1, kind: input, shape index: {}]
  %s2 = inlined_call_operand.vmem [shape: bf16[512,64], index: 2, kind: input, shape index: {}]
  %s3 = inlined_call_operand.vmem [shape: bf16[1024,32], index: 3, kind: input, shape index: {}]
  %s4 = inlined_call_operand.vmem [shape: bf16[32,128], index: 4, kind: input, shape index: {}]
  %s5 = inlined_call_operand.vmem [shape: bf16[128,128], index: 5, kind: input, shape index: {}]
  %s6 = inlined_call_operand.vmem [shape: f32[8,128], index: 6, kind: input, shape index: {}]
  %s7 = inlined_call_operand.vmem [shape: f32[8,128], index: 7, kind: output, shape index: {}]
  %s8 = sld [smem:[#allocation0]]
  $region38: #{forward.1} parent=0
    _
  %s10 = ssub.s32 1, %s8
  %s11 = scalar_select 0, %s10, %s8
  // Predicated region
  $region2: #{forward.1} parent=0 // pred_check
    _
  $region3: #{forward.1} parent=0 // pred_check_branch
    %13 = sbr.rel (0) target = $region5
  $region4: #{forward.1} parent=0 // pred_region
    _
  $region5: #{forward.1} parent=0 // pred_fallthru
    _
  // Predicated region
  $region6: #{forward.1} parent=0 // pred_check
    _
  $region7: #{forward.1} parent=0 // pred_check_branch
    %15 = sbr.rel (0) target = $region9
  $region8: #{forward.1} parent=0 // pred_region
    _
  $region9: #{forward.1} parent=0 // pred_fallthru
    _
  // Predicated region
  $region10: #{forward.1} parent=0 // pred_check
    _
  $region11: #{forward.1} parent=0 // pred_check_branch
    %17 = sbr.rel (0) target = $region13
  $region12: #{forward.1} parent=0 // pred_region
    _
  $region13: #{forward.1} parent=0 // pred_fallthru
    _
  // Predicated region
  $region14: #{forward.1} parent=0 // pred_check
    _
  $region15: #{forward.1} parent=0 // pred_check_branch
    %19 = sbr.rel (0) target = $region17
  $region16: #{forward.1} parent=0 // pred_region
    _
  $region17: #{forward.1} parent=0 // pred_fallthru
    _
  // Predicated region
  $region18: #{forward.1} parent=0 // pred_check
    _
  $region19: #{forward.1} parent=0 // pred_check_branch
    %21 = sbr.rel (0) target = $region21
  $region20: #{forward.1} parent=0 // pred_region
    _
  $region21: #{forward.1} parent=0 // pred_fallthru
    _
  // Predicated region
  $region22: #{forward.1} parent=0 // pred_check
    _
  $region23: #{forward.1} parent=0 // pred_check_branch
    %23 = sbr.rel (0) target = $region25
  $region24: #{forward.1} parent=0 // pred_region
    _
  $region25: #{forward.1} parent=0 // pred_fallthru
    _
  // Predicated region
  $region26: #{forward.1} parent=0 // pred_check
    _
  $region27: #{forward.1} parent=0 // pred_check_branch
    %25 = sbr.rel (0) target = $region29
  $region28: #{forward.1} parent=0 // pred_region
    _
  $region29: #{forward.1} parent=0 // pred_fallthru
    _
  %v27 = vld [vmem:[%s6] sm:$0xff]
  %v28 = vld [vmem:[%s0] sm:$0xf]
  %v29 = vld [vmem:[%s0 + $0x4] sm:$0xf]
  %v30 = vld [vmem:[%s0 + $0x8] sm:$0xf]
  %v31 = vld [vmem:[%s0 + $0xc] sm:$0xf]
  %v32 = vld [vmem:[%s0 + $0x10] sm:$0xf]
  %v33 = vld [vmem:[%s0 + $0x14] sm:$0xf]
  %v34 = vld [vmem:[%s0 + $0x18] sm:$0xf]
  %v35 = vld [vmem:[%s0 + $0x1c] sm:$0xf]
  %v36 = vld [vmem:[%s0 + $0x20] sm:$0xf]
  %v37 = vld [vmem:[%s0 + $0x24] sm:$0xf]
  %v38 = vld [vmem:[%s0 + $0x28] sm:$0xf]
  %v39 = vld [vmem:[%s0 + $0x2c] sm:$0xf]
  %v40 = vld [vmem:[%s0 + $0x30] sm:$0xf]
  %v41 = vld [vmem:[%s0 + $0x34] sm:$0xf]
  %v42 = vld [vmem:[%s0 + $0x38] sm:$0xf]
  %v43 = vld [vmem:[%s0 + $0x3c] sm:$0xf]
  %v44 = vld [vmem:[%s0 + $0x40] sm:$0xf]
  %v45 = vld [vmem:[%s0 + $0x44] sm:$0xf]
  %v46 = vld [vmem:[%s0 + $0x48] sm:$0xf]
  %v47 = vld [vmem:[%s0 + $0x4c] sm:$0xf]
  %v48 = vld [vmem:[%s0 + $0x50] sm:$0xf]
  %v49 = vld [vmem:[%s0 + $0x54] sm:$0xf]
  %v50 = vld [vmem:[%s0 + $0x58] sm:$0xf]
  %v51 = vld [vmem:[%s0 + $0x5c] sm:$0xf]
  %v52 = vld [vmem:[%s0 + $0x60] sm:$0xf]
  %v53 = vld [vmem:[%s0 + $0x64] sm:$0xf]
  %v54 = vld [vmem:[%s0 + $0x68] sm:$0xf]
  %v55 = vld [vmem:[%s0 + $0x6c] sm:$0xf]
  %v56 = vld [vmem:[%s0 + $0x70] sm:$0xf]
  %v57 = vld [vmem:[%s0 + $0x74] sm:$0xf]
  %v58 = vld [vmem:[%s0 + $0x78] sm:$0xf]
  %v59 = vld [vmem:[%s0 + $0x7c] sm:$0xf]
  %v60 = vld [vmem:[%s0 + $0x80] sm:$0xf]
  %v61 = vld [vmem:[%s0 + $0x84] sm:$0xf]
  %v62 = vld [vmem:[%s0 + $0x88] sm:$0xf]
  %v63 = vld [vmem:[%s0 + $0x8c] sm:$0xf]
  %v64 = vld [vmem:[%s0 + $0x90] sm:$0xf]
  %v65 = vld [vmem:[%s0 + $0x94] sm:$0xf]
  %v66 = vld [vmem:[%s0 + $0x98] sm:$0xf]
  %v67 = vld [vmem:[%s0 + $0x9c] sm:$0xf]
  %v68 = vld [vmem:[%s0 + $0xa0] sm:$0xf]
  %v69 = vld [vmem:[%s0 + $0xa4] sm:$0xf]
  %v70 = vld [vmem:[%s0 + $0xa8] sm:$0xf]
  %v71 = vld [vmem:[%s0 + $0xac] sm:$0xf]
  %v72 = vld [vmem:[%s0 + $0xb0] sm:$0xf]
  %v73 = vld [vmem:[%s0 + $0xb4] sm:$0xf]
  %v74 = vld [vmem:[%s0 + $0xb8] sm:$0xf]
  %v75 = vld [vmem:[%s0 + $0xbc] sm:$0xf]
  %v76 = vld [vmem:[%s0 + $0xc0] sm:$0xf]
  %v77 = vld [vmem:[%s0 + $0xc4] sm:$0xf]
  %v78 = vld [vmem:[%s0 + $0xc8] sm:$0xf]
  %v79 = vld [vmem:[%s0 + $0xcc] sm:$0xf]
  %v80 = vld [vmem:[%s0 + $0xd0] sm:$0xf]
  %v81 = vld [vmem:[%s0 + $0xd4] sm:$0xf]
  %v82 = vld [vmem:[%s0 + $0xd8] sm:$0xf]
  %v83 = vld [vmem:[%s0 + $0xdc] sm:$0xf]
  %v84 = vld [vmem:[%s0 + $0xe0] sm:$0xf]
  %v85 = vld [vmem:[%s0 + $0xe4] sm:$0xf]
  %v86 = vld [vmem:[%s0 + $0xe8] sm:$0xf]
  %v87 = vld [vmem:[%s0 + $0xec] sm:$0xf]
  %v88 = vld [vmem:[%s0 + $0xf0] sm:$0xf]
  %v89 = vld [vmem:[%s0 + $0xf4] sm:$0xf]
  %v90 = vld [vmem:[%s0 + $0xf8] sm:$0xf]
  %v91 = vld [vmem:[%s0 + $0xfc] sm:$0xf]
  %v92 = vld [vmem:[%s0 + $0x100] sm:$0xf]
  %v93 = vld [vmem:[%s0 + $0x104] sm:$0xf]
  %v94 = vld [vmem:[%s0 + $0x108] sm:$0xf]
  %v95 = vld [vmem:[%s0 + $0x10c] sm:$0xf]
  %v96 = vld [vmem:[%s0 + $0x110] sm:$0xf]
  %v97 = vld [vmem:[%s0 + $0x114] sm:$0xf]
  %v98 = vld [vmem:[%s0 + $0x118] sm:$0xf]
  %v99 = vld [vmem:[%s0 + $0x11c] sm:$0xf]
  %v100 = vld [vmem:[%s0 + $0x120] sm:$0xf]
  %v101 = vld [vmem:[%s0 + $0x124] sm:$0xf]
  %v102 = vld [vmem:[%s0 + $0x128] sm:$0xf]
  %v103 = vld [vmem:[%s0 + $0x12c] sm:$0xf]
  %v104 = vld [vmem:[%s0 + $0x130] sm:$0xf]
  %v105 = vld [vmem:[%s0 + $0x134] sm:$0xf]
  %v106 = vld [vmem:[%s0 + $0x138] sm:$0xf]
  %v107 = vld [vmem:[%s0 + $0x13c] sm:$0xf]
  %v108 = vld [vmem:[%s0 + $0x140] sm:$0xf]
  %v109 = vld [vmem:[%s0 + $0x144] sm:$0xf]
  %v110 = vld [vmem:[%s0 + $0x148] sm:$0xf]
  %v111 = vld [vmem:[%s0 + $0x14c] sm:$0xf]
  %v112 = vld [vmem:[%s0 + $0x150] sm:$0xf]
  %v113 = vld [vmem:[%s0 + $0x154] sm:$0xf]
  %v114 = vld [vmem:[%s0 + $0x158] sm:$0xf]
  %v115 = vld [vmem:[%s0 + $0x15c] sm:$0xf]
  %v116 = vld [vmem:[%s0 + $0x160] sm:$0xf]
  %v117 = vld [vmem:[%s0 + $0x164] sm:$0xf]
  %v118 = vld [vmem:[%s0 + $0x168] sm:$0xf]
  %v119 = vld [vmem:[%s0 + $0x16c] sm:$0xf]
  %v120 = vld [vmem:[%s0 + $0x170] sm:$0xf]
  %v121 = vld [vmem:[%s0 + $0x174] sm:$0xf]
  %v122 = vld [vmem:[%s0 + $0x178] sm:$0xf]
  %v123 = vld [vmem:[%s0 + $0x17c] sm:$0xf]
  %v124 = vld [vmem:[%s0 + $0x180] sm:$0xf]
  %v125 = vld [vmem:[%s0 + $0x184] sm:$0xf]
  %v126 = vld [vmem:[%s0 + $0x188] sm:$0xf]
  %v127 = vld [vmem:[%s0 + $0x18c] sm:$0xf]
  %v128 = vld [vmem:[%s0 + $0x190] sm:$0xf]
  %v129 = vld [vmem:[%s0 + $0x194] sm:$0xf]
  %v130 = vld [vmem:[%s0 + $0x198] sm:$0xf]
  %v131 = vld [vmem:[%s0 + $0x19c] sm:$0xf]
  %v132 = vld [vmem:[%s0 + $0x1a0] sm:$0xf]
  %v133 = vld [vmem:[%s0 + $0x1a4] sm:$0xf]
  %v134 = vld [vmem:[%s0 + $0x1a8] sm:$0xf]
  %v135 = vld [vmem:[%s0 + $0x1ac] sm:$0xf]
  %v136 = vld [vmem:[%s0 + $0x1b0] sm:$0xf]
  %v137 = vld [vmem:[%s0 + $0x1b4] sm:$0xf]
  %v138 = vld [vmem:[%s0 + $0x1b8] sm:$0xf]
  %v139 = vld [vmem:[%s0 + $0x1bc] sm:$0xf]
  %v140 = vld [vmem:[%s0 + $0x1c0] sm:$0xf]
  %v141 = vld [vmem:[%s0 + $0x1c4] sm:$0xf]
  %v142 = vld [vmem:[%s0 + $0x1c8] sm:$0xf]
  %v143 = vld [vmem:[%s0 + $0x1cc] sm:$0xf]
  %v144 = vld [vmem:[%s0 + $0x1d0] sm:$0xf]
  %v145 = vld [vmem:[%s0 + $0x1d4] sm:$0xf]
  %v146 = vld [vmem:[%s0 + $0x1d8] sm:$0xf]
  %v147 = vld [vmem:[%s0 + $0x1dc] sm:$0xf]
  %v148 = vld [vmem:[%s0 + $0x1e0] sm:$0xf]
  %v149 = vld [vmem:[%s0 + $0x1e4] sm:$0xf]
  %v150 = vld [vmem:[%s0 + $0x1e8] sm:$0xf]
  %v151 = vld [vmem:[%s0 + $0x1ec] sm:$0xf]
  %v152 = vld [vmem:[%s0 + $0x1f0] sm:$0xf]
  %v153 = vld [vmem:[%s0 + $0x1f4] sm:$0xf]
  %v154 = vld [vmem:[%s0 + $0x1f8] sm:$0xf]
  %v155 = vld [vmem:[%s0 + $0x1fc] sm:$0xf]
  %v156 = vld [vmem:[%s0 + $0x200] sm:$0xf]
  %v157 = vld [vmem:[%s0 + $0x204] sm:$0xf]
  %v158 = vld [vmem:[%s0 + $0x208] sm:$0xf]
  %v159 = vld [vmem:[%s0 + $0x20c] sm:$0xf]
  %v160 = vld [vmem:[%s0 + $0x210] sm:$0xf]
  %v161 = vld [vmem:[%s0 + $0x214] sm:$0xf]
  %v162 = vld [vmem:[%s0 + $0x218] sm:$0xf]
  %v163 = vld [vmem:[%s0 + $0x21c] sm:$0xf]
  %v164 = vld [vmem:[%s0 + $0x220] sm:$0xf]
  %v165 = vld [vmem:[%s0 + $0x224] sm:$0xf]
  %v166 = vld [vmem:[%s0 + $0x228] sm:$0xf]
  %v167 = vld [vmem:[%s0 + $0x22c] sm:$0xf]
  %v168 = vld [vmem:[%s0 + $0x230] sm:$0xf]
  %v169 = vld [vmem:[%s0 + $0x234] sm:$0xf]
  %v170 = vld [vmem:[%s0 + $0x238] sm:$0xf]
  %v171 = vld [vmem:[%s0 + $0x23c] sm:$0xf]
  %v172 = vld [vmem:[%s0 + $0x240] sm:$0xf]
  %v173 = vld [vmem:[%s0 + $0x244] sm:$0xf]
  %v174 = vld [vmem:[%s0 + $0x248] sm:$0xf]
  %v175 = vld [vmem:[%s0 + $0x24c] sm:$0xf]
  %v176 = vld [vmem:[%s0 + $0x250] sm:$0xf]
  %v177 = vld [vmem:[%s0 + $0x254] sm:$0xf]
  %v178 = vld [vmem:[%s0 + $0x258] sm:$0xf]
  %v179 = vld [vmem:[%s0 + $0x25c] sm:$0xf]
  %v180 = vld [vmem:[%s0 + $0x260] sm:$0xf]
  %v181 = vld [vmem:[%s0 + $0x264] sm:$0xf]
  %v182 = vld [vmem:[%s0 + $0x268] sm:$0xf]
  %v183 = vld [vmem:[%s0 + $0x26c] sm:$0xf]
  %v184 = vld [vmem:[%s0 + $0x270] sm:$0xf]
  %v185 = vld [vmem:[%s0 + $0x274] sm:$0xf]
  %v186 = vld [vmem:[%s0 + $0x278] sm:$0xf]
  %v187 = vld [vmem:[%s0 + $0x27c] sm:$0xf]
  %v188 = vld [vmem:[%s0 + $0x280] sm:$0xf]
  %v189 = vld [vmem:[%s0 + $0x284] sm:$0xf]
  %v190 = vld [vmem:[%s0 + $0x288] sm:$0xf]
  %v191 = vld [vmem:[%s0 + $0x28c] sm:$0xf]
  %v192 = vld [vmem:[%s0 + $0x290] sm:$0xf]
  %v193 = vld [vmem:[%s0 + $0x294] sm:$0xf]
  %v194 = vld [vmem:[%s0 + $0x298] sm:$0xf]
  %v195 = vld [vmem:[%s0 + $0x29c] sm:$0xf]
  %v196 = vld [vmem:[%s0 + $0x2a0] sm:$0xf]
  %v197 = vld [vmem:[%s0 + $0x2a4] sm:$0xf]
  %v198 = vld [vmem:[%s0 + $0x2a8] sm:$0xf]
  %v199 = vld [vmem:[%s0 + $0x2ac] sm:$0xf]
  %v200 = vld [vmem:[%s0 + $0x2b0] sm:$0xf]
  %v201 = vld [vmem:[%s0 + $0x2b4] sm:$0xf]
  %v202 = vld [vmem:[%s0 + $0x2b8] sm:$0xf]
  %v203 = vld [vmem:[%s0 + $0x2bc] sm:$0xf]
  %v204 = vld [vmem:[%s0 + $0x2c0] sm:$0xf]
  %v205 = vld [vmem:[%s0 + $0x2c4] sm:$0xf]
  %v206 = vld [vmem:[%s0 + $0x2c8] sm:$0xf]
  %v207 = vld [vmem:[%s0 + $0x2cc] sm:$0xf]
  %v208 = vld [vmem:[%s0 + $0x2d0] sm:$0xf]
  %v209 = vld [vmem:[%s0 + $0x2d4] sm:$0xf]
  %v210 = vld [vmem:[%s0 + $0x2d8] sm:$0xf]
  %v211 = vld [vmem:[%s0 + $0x2dc] sm:$0xf]
  %v212 = vld [vmem:[%s0 + $0x2e0] sm:$0xf]
  %v213 = vld [vmem:[%s0 + $0x2e4] sm:$0xf]
  %v214 = vld [vmem:[%s0 + $0x2e8] sm:$0xf]
  %v215 = vld [vmem:[%s0 + $0x2ec] sm:$0xf]
  %v216 = vld [vmem:[%s0 + $0x2f0] sm:$0xf]
  %v217 = vld [vmem:[%s0 + $0x2f4] sm:$0xf]
  %v218 = vld [vmem:[%s0 + $0x2f8] sm:$0xf]
  %v219 = vld [vmem:[%s0 + $0x2fc] sm:$0xf]
  %v220 = vld [vmem:[%s0 + $0x300] sm:$0xf]
  %v221 = vld [vmem:[%s0 + $0x304] sm:$0xf]
  %v222 = vld [vmem:[%s0 + $0x308] sm:$0xf]
  %v223 = vld [vmem:[%s0 + $0x30c] sm:$0xf]
  %v224 = vld [vmem:[%s0 + $0x310] sm:$0xf]
  %v225 = vld [vmem:[%s0 + $0x314] sm:$0xf]
  %v226 = vld [vmem:[%s0 + $0x318] sm:$0xf]
  %v227 = vld [vmem:[%s0 + $0x31c] sm:$0xf]
  %v228 = vld [vmem:[%s0 + $0x320] sm:$0xf]
  %v229 = vld [vmem:[%s0 + $0x324] sm:$0xf]
  %v230 = vld [vmem:[%s0 + $0x328] sm:$0xf]
  %v231 = vld [vmem:[%s0 + $0x32c] sm:$0xf]
  %v232 = vld [vmem:[%s0 + $0x330] sm:$0xf]
  %v233 = vld [vmem:[%s0 + $0x334] sm:$0xf]
  %v234 = vld [vmem:[%s0 + $0x338] sm:$0xf]
  %v235 = vld [vmem:[%s0 + $0x33c] sm:$0xf]
  %v236 = vld [vmem:[%s0 + $0x340] sm:$0xf]
  %v237 = vld [vmem:[%s0 + $0x344] sm:$0xf]
  %v238 = vld [vmem:[%s0 + $0x348] sm:$0xf]
  %v239 = vld [vmem:[%s0 + $0x34c] sm:$0xf]
  %v240 = vld [vmem:[%s0 + $0x350] sm:$0xf]
  %v241 = vld [vmem:[%s0 + $0x354] sm:$0xf]
  %v242 = vld [vmem:[%s0 + $0x358] sm:$0xf]
  %v243 = vld [vmem:[%s0 + $0x35c] sm:$0xf]
  %v244 = vld [vmem:[%s0 + $0x360] sm:$0xf]
  %v245 = vld [vmem:[%s0 + $0x364] sm:$0xf]
  %v246 = vld [vmem:[%s0 + $0x368] sm:$0xf]
  %v247 = vld [vmem:[%s0 + $0x36c] sm:$0xf]
  %v248 = vld [vmem:[%s0 + $0x370] sm:$0xf]
  %v249 = vld [vmem:[%s0 + $0x374] sm:$0xf]
  %v250 = vld [vmem:[%s0 + $0x378] sm:$0xf]
  %v251 = vld [vmem:[%s0 + $0x37c] sm:$0xf]
  %v252 = vld [vmem:[%s0 + $0x380] sm:$0xf]
  %v253 = vld [vmem:[%s0 + $0x384] sm:$0xf]
  %v254 = vld [vmem:[%s0 + $0x388] sm:$0xf]
  %v255 = vld [vmem:[%s0 + $0x38c] sm:$0xf]
  %v256 = vld [vmem:[%s0 + $0x390] sm:$0xf]
  %v257 = vld [vmem:[%s0 + $0x394] sm:$0xf]
  %v258 = vld [vmem:[%s0 + $0x398] sm:$0xf]
  %v259 = vld [vmem:[%s0 + $0x39c] sm:$0xf]
  %v260 = vld [vmem:[%s0 + $0x3a0] sm:$0xf]
  %v261 = vld [vmem:[%s0 + $0x3a4] sm:$0xf]
  %v262 = vld [vmem:[%s0 + $0x3a8] sm:$0xf]
  %v263 = vld [vmem:[%s0 + $0x3ac] sm:$0xf]
  %v264 = vld [vmem:[%s0 + $0x3b0] sm:$0xf]
  %v265 = vld [vmem:[%s0 + $0x3b4] sm:$0xf]
  %v266 = vld [vmem:[%s0 + $0x3b8] sm:$0xf]
  %v267 = vld [vmem:[%s0 + $0x3bc] sm:$0xf]
  %v268 = vld [vmem:[%s0 + $0x3c0] sm:$0xf]
  %v269 = vld [vmem:[%s0 + $0x3c4] sm:$0xf]
  %v270 = vld [vmem:[%s0 + $0x3c8] sm:$0xf]
  %v271 = vld [vmem:[%s0 + $0x3cc] sm:$0xf]
  %v272 = vld [vmem:[%s0 + $0x3d0] sm:$0xf]
  %v273 = vld [vmem:[%s0 + $0x3d4] sm:$0xf]
  %v274 = vld [vmem:[%s0 + $0x3d8] sm:$0xf]
  %v275 = vld [vmem:[%s0 + $0x3dc] sm:$0xf]
  %v276 = vld [vmem:[%s0 + $0x3e0] sm:$0xf]
  %v277 = vld [vmem:[%s0 + $0x3e4] sm:$0xf]
  %v278 = vld [vmem:[%s0 + $0x3e8] sm:$0xf]
  %v279 = vld [vmem:[%s0 + $0x3ec] sm:$0xf]
  %v280 = vld [vmem:[%s0 + $0x3f0] sm:$0xf]
  %v281 = vld [vmem:[%s0 + $0x3f4] sm:$0xf]
  %v282 = vld [vmem:[%s0 + $0x3f8] sm:$0xf]
  %v283 = vld [vmem:[%s0 + $0x3fc] sm:$0xf]
  %v284 = vld [vmem:[%s0 + $0x400] sm:$0xf]
  %v285 = vld [vmem:[%s0 + $0x404] sm:$0xf]
  %v286 = vld [vmem:[%s0 + $0x408] sm:$0xf]
  %v287 = vld [vmem:[%s0 + $0x40c] sm:$0xf]
  %v288 = vld [vmem:[%s0 + $0x410] sm:$0xf]
  %v289 = vld [vmem:[%s0 + $0x414] sm:$0xf]
  %v290 = vld [vmem:[%s0 + $0x418] sm:$0xf]
  %v291 = vld [vmem:[%s0 + $0x41c] sm:$0xf]
  %v292 = vld [vmem:[%s0 + $0x420] sm:$0xf]
  %v293 = vld [vmem:[%s0 + $0x424] sm:$0xf]
  %v294 = vld [vmem:[%s0 + $0x428] sm:$0xf]
  %v295 = vld [vmem:[%s0 + $0x42c] sm:$0xf]
  %v296 = vld [vmem:[%s0 + $0x430] sm:$0xf]
  %v297 = vld [vmem:[%s0 + $0x434] sm:$0xf]
  %v298 = vld [vmem:[%s0 + $0x438] sm:$0xf]
  %v299 = vld [vmem:[%s0 + $0x43c] sm:$0xf]
  %v300 = vld [vmem:[%s0 + $0x440] sm:$0xf]
  %v301 = vld [vmem:[%s0 + $0x444] sm:$0xf]
  %v302 = vld [vmem:[%s0 + $0x448] sm:$0xf]
  %v303 = vld [vmem:[%s0 + $0x44c] sm:$0xf]
  %v304 = vld [vmem:[%s0 + $0x450] sm:$0xf]
  %v305 = vld [vmem:[%s0 + $0x454] sm:$0xf]
  %v306 = vld [vmem:[%s0 + $0x458] sm:$0xf]
  %v307 = vld [vmem:[%s0 + $0x45c] sm:$0xf]
  %v308 = vld [vmem:[%s1] sm:$0xf]
  %v309 = vld [vmem:[%s1 + $0x4] sm:$0xf]
  %v310 = vld [vmem:[%s1 + $0x8] sm:$0xf]
  %v311 = vld [vmem:[%s1 + $0xc] sm:$0xf]
  %v312 = vld [vmem:[%s1 + $0x10] sm:$0xf]
  %v313 = vld [vmem:[%s1 + $0x14] sm:$0xf]
  %v314 = vld [vmem:[%s1 + $0x18] sm:$0xf]
  %v315 = vld [vmem:[%s1 + $0x1c] sm:$0xf]
  %v316 = vld [vmem:[%s1 + $0x20] sm:$0xf]
  %v317 = vld [vmem:[%s1 + $0x24] sm:$0xf]
  %v318 = vld [vmem:[%s1 + $0x28] sm:$0xf]
  %v319 = vld [vmem:[%s1 + $0x2c] sm:$0xf]
  %v320 = vld [vmem:[%s1 + $0x30] sm:$0xf]
  %v321 = vld [vmem:[%s1 + $0x34] sm:$0xf]
  %v322 = vld [vmem:[%s1 + $0x38] sm:$0xf]
  %v323 = vld [vmem:[%s1 + $0x3c] sm:$0xf]
  %v604 = vunpack.c.l.b16 %v28
  %v605 = vunpack.c.l.b16 %v29
  %v606 = vunpack.c.l.b16 %v30
  %v607 = vunpack.c.l.b16 %v31
  %v608 = vunpack.c.l.b16 %v32
  %v609 = vunpack.c.l.b16 %v33
  %v610 = vunpack.c.l.b16 %v34
  %v611 = vunpack.c.l.b16 %v35
  %v612 = vunpack.c.l.b16 %v36
  %v613 = vunpack.c.l.b16 %v37
  %v614 = vunpack.c.l.b16 %v38
  %v615 = vunpack.c.l.b16 %v39
  %v616 = vunpack.c.l.b16 %v40
  %v617 = vunpack.c.l.b16 %v41
  %v618 = vunpack.c.l.b16 %v42
  %v619 = vunpack.c.l.b16 %v43
  %v620 = vunpack.c.l.b16 %v44
  %v621 = vunpack.c.l.b16 %v45
  %v622 = vunpack.c.l.b16 %v46
  %v623 = vunpack.c.l.b16 %v47
  %v624 = vunpack.c.l.b16 %v48
  %v625 = vunpack.c.l.b16 %v49
  %v626 = vunpack.c.l.b16 %v50
  %v627 = vunpack.c.l.b16 %v51
  %v628 = vunpack.c.l.b16 %v52
  %v629 = vunpack.c.l.b16 %v53
  %v630 = vunpack.c.l.b16 %v54
  %v631 = vunpack.c.l.b16 %v55
  %v632 = vunpack.c.l.b16 %v56
  %v633 = vunpack.c.l.b16 %v57
  %v634 = vunpack.c.l.b16 %v58
  %v635 = vunpack.c.l.b16 %v59
  %v636 = vunpack.c.l.b16 %v60
  %v637 = vunpack.c.l.b16 %v61
  %v638 = vunpack.c.l.b16 %v62
  %v639 = vunpack.c.l.b16 %v63
  %v640 = vunpack.c.l.b16 %v64
  %v641 = vunpack.c.l.b16 %v65
  %v642 = vunpack.c.l.b16 %v66
  %v643 = vunpack.c.l.b16 %v67
  %v644 = vunpack.c.l.b16 %v68
  %v645 = vunpack.c.l.b16 %v69
  %v646 = vunpack.c.l.b16 %v70
  %v647 = vunpack.c.l.b16 %v71
  %v648 = vunpack.c.l.b16 %v72
  %v649 = vunpack.c.l.b16 %v73
  %v650 = vunpack.c.l.b16 %v74
  %v651 = vunpack.c.l.b16 %v75
  %v652 = vunpack.c.l.b16 %v76
  %v653 = vunpack.c.l.b16 %v77
  %v654 = vunpack.c.l.b16 %v78
  %v655 = vunpack.c.l.b16 %v79
  %v656 = vunpack.c.l.b16 %v80
  %v657 = vunpack.c.l.b16 %v81
  %v658 = vunpack.c.l.b16 %v82
  %v659 = vunpack.c.l.b16 %v83
  %v660 = vunpack.c.l.b16 %v84
  %v661 = vunpack.c.l.b16 %v85
  %v662 = vunpack.c.l.b16 %v86
  %v663 = vunpack.c.l.b16 %v87
  %v664 = vunpack.c.l.b16 %v88
  %v665 = vunpack.c.l.b16 %v89
  %v666 = vunpack.c.l.b16 %v90
  %v667 = vunpack.c.l.b16 %v91
  %v668 = vunpack.c.l.b16 %v92
  %v669 = vunpack.c.l.b16 %v93
  %v670 = vunpack.c.l.b16 %v94
  %v671 = vunpack.c.l.b16 %v95
  %v672 = vunpack.c.l.b16 %v96
  %v673 = vunpack.c.l.b16 %v97
  %v674 = vunpack.c.l.b16 %v98
  %v675 = vunpack.c.l.b16 %v99
  %v676 = vunpack.c.l.b16 %v100
  %v677 = vunpack.c.l.b16 %v101
  %v678 = vunpack.c.l.b16 %v102
  %v679 = vunpack.c.l.b16 %v103
  %v680 = vunpack.c.l.b16 %v104
  %v681 = vunpack.c.l.b16 %v105
  %v682 = vunpack.c.l.b16 %v106
  %v683 = vunpack.c.l.b16 %v107
  %v684 = vunpack.c.l.b16 %v108
  %v685 = vunpack.c.l.b16 %v109
  %v686 = vunpack.c.l.b16 %v110
  %v687 = vunpack.c.l.b16 %v111
  %v688 = vunpack.c.l.b16 %v112
  %v689 = vunpack.c.l.b16 %v113
  %v690 = vunpack.c.l.b16 %v114
  %v691 = vunpack.c.l.b16 %v115
  %v692 = vunpack.c.l.b16 %v116
  %v693 = vunpack.c.l.b16 %v117
  %v694 = vunpack.c.l.b16 %v118
  %v695 = vunpack.c.l.b16 %v119
  %v696 = vunpack.c.l.b16 %v120
  %v697 = vunpack.c.l.b16 %v121
  %v698 = vunpack.c.l.b16 %v122
  %v699 = vunpack.c.l.b16 %v123
  %v700 = vunpack.c.l.b16 %v124
  %v701 = vunpack.c.l.b16 %v125
  %v702 = vunpack.c.l.b16 %v126
  %v703 = vunpack.c.l.b16 %v127
  %v704 = vunpack.c.l.b16 %v128
  %v705 = vunpack.c.l.b16 %v129
  %v706 = vunpack.c.l.b16 %v130
  %v707 = vunpack.c.l.b16 %v131
  %v708 = vunpack.c.l.b16 %v132
  %v709 = vunpack.c.l.b16 %v133
  %v710 = vunpack.c.l.b16 %v134
  %v711 = vunpack.c.l.b16 %v135
  %v712 = vunpack.c.l.b16 %v136
  %v713 = vunpack.c.l.b16 %v137
  %v714 = vunpack.c.l.b16 %v138
  %v715 = vunpack.c.l.b16 %v139
  %v716 = vunpack.c.l.b16 %v140
  %v717 = vunpack.c.l.b16 %v141
  %v718 = vunpack.c.l.b16 %v142
  %v719 = vunpack.c.l.b16 %v143
  %v720 = vunpack.c.l.b16 %v144
  %v721 = vunpack.c.l.b16 %v145
  %v722 = vunpack.c.l.b16 %v146
  %v723 = vunpack.c.l.b16 %v147
  %v724 = vunpack.c.l.b16 %v148
  %v725 = vunpack.c.l.b16 %v149
  %v726 = vunpack.c.l.b16 %v150
  %v727 = vunpack.c.l.b16 %v151
  %v728 = vunpack.c.l.b16 %v152
  %v729 = vunpack.c.l.b16 %v153
  %v730 = vunpack.c.l.b16 %v154
  %v731 = vunpack.c.l.b16 %v155
  %v732 = vunpack.c.l.b16 %v156
  %v733 = vunpack.c.l.b16 %v157
  %v734 = vunpack.c.l.b16 %v158
  %v735 = vunpack.c.l.b16 %v159
  %v736 = vunpack.c.l.b16 %v160
  %v737 = vunpack.c.l.b16 %v161
  %v738 = vunpack.c.l.b16 %v162
  %v739 = vunpack.c.l.b16 %v163
  %v740 = vunpack.c.l.b16 %v164
  %v741 = vunpack.c.l.b16 %v165
  %v742 = vunpack.c.l.b16 %v166
  %v743 = vunpack.c.l.b16 %v167
  %v744 = vunpack.c.l.b16 %v168
  %v745 = vunpack.c.l.b16 %v169
  %v746 = vunpack.c.l.b16 %v170
  %v747 = vunpack.c.l.b16 %v171
  %v748 = vunpack.c.l.b16 %v172
  %v749 = vunpack.c.l.b16 %v173
  %v750 = vunpack.c.l.b16 %v174
  %v751 = vunpack.c.l.b16 %v175
  %v752 = vunpack.c.l.b16 %v176
  %v753 = vunpack.c.l.b16 %v177
  %v754 = vunpack.c.l.b16 %v178
  %v755 = vunpack.c.l.b16 %v179
  %v756 = vunpack.c.l.b16 %v180
  %v757 = vunpack.c.l.b16 %v181
  %v758 = vunpack.c.l.b16 %v182
  %v759 = vunpack.c.l.b16 %v183
  %v760 = vunpack.c.l.b16 %v184
  %v761 = vunpack.c.l.b16 %v185
  %v762 = vunpack.c.l.b16 %v186
  %v763 = vunpack.c.l.b16 %v187
  %v764 = vunpack.c.l.b16 %v188
  %v765 = vunpack.c.l.b16 %v189
  %v766 = vunpack.c.l.b16 %v190
  %v767 = vunpack.c.l.b16 %v191
  %v768 = vunpack.c.l.b16 %v192
  %v769 = vunpack.c.l.b16 %v193
  %v770 = vunpack.c.l.b16 %v194
  %v771 = vunpack.c.l.b16 %v195
  %v772 = vunpack.c.l.b16 %v196
  %v773 = vunpack.c.l.b16 %v197
  %v774 = vunpack.c.l.b16 %v198
  %v775 = vunpack.c.l.b16 %v199
  %v776 = vunpack.c.l.b16 %v200
  %v777 = vunpack.c.l.b16 %v201
  %v778 = vunpack.c.l.b16 %v202
  %v779 = vunpack.c.l.b16 %v203
  %v780 = vunpack.c.l.b16 %v204
  %v781 = vunpack.c.l.b16 %v205
  %v782 = vunpack.c.l.b16 %v206
  %v783 = vunpack.c.l.b16 %v207
  %v784 = vunpack.c.l.b16 %v208
  %v785 = vunpack.c.l.b16 %v209
  %v786 = vunpack.c.l.b16 %v210
  %v787 = vunpack.c.l.b16 %v211
  %v788 = vunpack.c.l.b16 %v212
  %v789 = vunpack.c.l.b16 %v213
  %v790 = vunpack.c.l.b16 %v214
  %v791 = vunpack.c.l.b16 %v215
  %v792 = vunpack.c.l.b16 %v216
  %v793 = vunpack.c.l.b16 %v217
  %v794 = vunpack.c.l.b16 %v218
  %v795 = vunpack.c.l.b16 %v219
  %v796 = vunpack.c.l.b16 %v220
  %v797 = vunpack.c.l.b16 %v221
  %v798 = vunpack.c.l.b16 %v222
  %v799 = vunpack.c.l.b16 %v223
  %v800 = vunpack.c.l.b16 %v224
  %v801 = vunpack.c.l.b16 %v225
  %v802 = vunpack.c.l.b16 %v226
  %v803 = vunpack.c.l.b16 %v227
  %v804 = vunpack.c.l.b16 %v228
  %v805 = vunpack.c.l.b16 %v229
  %v806 = vunpack.c.l.b16 %v230
  %v807 = vunpack.c.l.b16 %v231
  %v808 = vunpack.c.l.b16 %v232
  %v809 = vunpack.c.l.b16 %v233
  %v810 = vunpack.c.l.b16 %v234
  %v811 = vunpack.c.l.b16 %v235
  %v812 = vunpack.c.l.b16 %v236
  %v813 = vunpack.c.l.b16 %v237
  %v814 = vunpack.c.l.b16 %v238
  %v815 = vunpack.c.l.b16 %v239
  %v816 = vunpack.c.l.b16 %v240
  %v817 = vunpack.c.l.b16 %v241
  %v818 = vunpack.c.l.b16 %v242
  %v819 = vunpack.c.l.b16 %v243
  %v820 = vunpack.c.l.b16 %v244
  %v821 = vunpack.c.l.b16 %v245
  %v822 = vunpack.c.l.b16 %v246
  %v823 = vunpack.c.l.b16 %v247
  %v824 = vunpack.c.l.b16 %v248
  %v825 = vunpack.c.l.b16 %v249
  %v826 = vunpack.c.l.b16 %v250
  %v827 = vunpack.c.l.b16 %v251
  %v828 = vunpack.c.l.b16 %v252
  %v829 = vunpack.c.l.b16 %v253
  %v830 = vunpack.c.l.b16 %v254
  %v831 = vunpack.c.l.b16 %v255
  %v832 = vunpack.c.l.b16 %v256
  %v833 = vunpack.c.l.b16 %v257
  %v834 = vunpack.c.l.b16 %v258
  %v835 = vunpack.c.l.b16 %v259
  %v836 = vunpack.c.l.b16 %v260
  %v837 = vunpack.c.l.b16 %v261
  %v838 = vunpack.c.l.b16 %v262
  %v839 = vunpack.c.l.b16 %v263
  %v840 = vunpack.c.l.b16 %v264
  %v841 = vunpack.c.l.b16 %v265
  %v842 = vunpack.c.l.b16 %v266
  %v843 = vunpack.c.l.b16 %v267
  %v844 = vunpack.c.l.b16 %v268
  %v845 = vunpack.c.l.b16 %v269
  %v846 = vunpack.c.l.b16 %v270
  %v847 = vunpack.c.l.b16 %v271
  %v848 = vunpack.c.l.b16 %v272
  %v849 = vunpack.c.l.b16 %v273
  %v850 = vunpack.c.l.b16 %v274
  %v851 = vunpack.c.l.b16 %v275
  %v852 = vunpack.c.l.b16 %v276
  %v853 = vunpack.c.l.b16 %v277
  %v854 = vunpack.c.l.b16 %v278
  %v855 = vunpack.c.l.b16 %v279
  %v856 = vunpack.c.l.b16 %v280
  %v857 = vunpack.c.l.b16 %v281
  %v858 = vunpack.c.l.b16 %v282
  %v859 = vunpack.c.l.b16 %v283
  %v860 = vunpack.c.l.b16 %v284
  %v861 = vunpack.c.l.b16 %v285
  %v862 = vunpack.c.l.b16 %v286
  %v863 = vunpack.c.l.b16 %v287
  %v864 = vunpack.c.l.b16 %v288
  %v865 = vunpack.c.l.b16 %v289
  %v866 = vunpack.c.l.b16 %v290
  %v867 = vunpack.c.l.b16 %v291
  %v868 = vunpack.c.l.b16 %v292
  %v869 = vunpack.c.l.b16 %v293
  %v870 = vunpack.c.l.b16 %v294
  %v871 = vunpack.c.l.b16 %v295
  %v872 = vunpack.c.l.b16 %v296
  %v873 = vunpack.c.l.b16 %v297
  %v874 = vunpack.c.l.b16 %v298
  %v875 = vunpack.c.l.b16 %v299
  %v876 = vunpack.c.l.b16 %v300
  %v877 = vunpack.c.l.b16 %v301
  %v878 = vunpack.c.l.b16 %v302
  %v879 = vunpack.c.l.b16 %v303
  %v880 = vunpack.c.l.b16 %v304
  %v881 = vunpack.c.l.b16 %v305
  %v882 = vunpack.c.l.b16 %v306
  %v883 = vunpack.c.l.b16 %v307
  %v884 = vpack.c.b16 %v605, %v604
  %v885 = vpack.c.b16 %v607, %v606
  %v886 = vpack.c.b16 %v609, %v608
  %v887 = vpack.c.b16 %v611, %v610
  %v888 = vpack.c.b16 %v613, %v612
  %v889 = vpack.c.b16 %v615, %v614
  %v890 = vpack.c.b16 %v617, %v616
  %v891 = vpack.c.b16 %v619, %v618
  %v892 = vpack.c.b16 %v621, %v620
  %v893 = vpack.c.b16 %v623, %v622
  %v894 = vpack.c.b16 %v625, %v624
  %v895 = vpack.c.b16 %v627, %v626
  %v896 = vpack.c.b16 %v629, %v628
  %v897 = vpack.c.b16 %v631, %v630
  %v898 = vpack.c.b16 %v633, %v632
  %v899 = vpack.c.b16 %v635, %v634
  %v900 = vpack.c.b16 %v637, %v636
  %v901 = vpack.c.b16 %v639, %v638
  %v902 = vpack.c.b16 %v641, %v640
  %v903 = vpack.c.b16 %v643, %v642
  %v904 = vpack.c.b16 %v645, %v644
  %v905 = vpack.c.b16 %v647, %v646
  %v906 = vpack.c.b16 %v649, %v648
  %v907 = vpack.c.b16 %v651, %v650
  %v908 = vpack.c.b16 %v653, %v652
  %v909 = vpack.c.b16 %v655, %v654
  %v910 = vpack.c.b16 %v657, %v656
  %v911 = vpack.c.b16 %v659, %v658
  %v912 = vpack.c.b16 %v661, %v660
  %v913 = vpack.c.b16 %v663, %v662
  %v914 = vpack.c.b16 %v665, %v664
  %v915 = vpack.c.b16 %v667, %v666
  %v916 = vpack.c.b16 %v669, %v668
  %v917 = vpack.c.b16 %v671, %v670
  %v918 = vpack.c.b16 %v673, %v672
  %v919 = vpack.c.b16 %v675, %v674
  %v920 = vpack.c.b16 %v677, %v676
  %v921 = vpack.c.b16 %v679, %v678
  %v922 = vpack.c.b16 %v681, %v680
  %v923 = vpack.c.b16 %v683, %v682
  %v924 = vpack.c.b16 %v685, %v684
  %v925 = vpack.c.b16 %v687, %v686
  %v926 = vpack.c.b16 %v689, %v688
  %v927 = vpack.c.b16 %v691, %v690
  %v928 = vpack.c.b16 %v693, %v692
  %v929 = vpack.c.b16 %v695, %v694
  %v930 = vpack.c.b16 %v697, %v696
  %v931 = vpack.c.b16 %v699, %v698
  %v932 = vpack.c.b16 %v701, %v700
  %v933 = vpack.c.b16 %v703, %v702
  %v934 = vpack.c.b16 %v705, %v704
  %v935 = vpack.c.b16 %v707, %v706
  %v936 = vpack.c.b16 %v709, %v708
  %v937 = vpack.c.b16 %v711, %v710
  %v938 = vpack.c.b16 %v713, %v712
  %v939 = vpack.c.b16 %v715, %v714
  %v940 = vpack.c.b16 %v717, %v716
  %v941 = vpack.c.b16 %v719, %v718
  %v942 = vpack.c.b16 %v721, %v720
  %v943 = vpack.c.b16 %v723, %v722
  %v944 = vpack.c.b16 %v725, %v724
  %v945 = vpack.c.b16 %v727, %v726
  %v946 = vpack.c.b16 %v729, %v728
  %v947 = vpack.c.b16 %v731, %v730
  %v948 = vpack.c.b16 %v733, %v732
  %v949 = vpack.c.b16 %v735, %v734
  %v950 = vpack.c.b16 %v737, %v736
  %v951 = vpack.c.b16 %v739, %v738
  %v952 = vpack.c.b16 %v741, %v740
  %v953 = vpack.c.b16 %v743, %v742
  %v954 = vpack.c.b16 %v745, %v744
  %v955 = vpack.c.b16 %v747, %v746
  %v956 = vpack.c.b16 %v749, %v748
  %v957 = vpack.c.b16 %v751, %v750
  %v958 = vpack.c.b16 %v753, %v752
  %v959 = vpack.c.b16 %v755, %v754
  %v960 = vpack.c.b16 %v757, %v756
  %v961 = vpack.c.b16 %v759, %v758
  %v962 = vpack.c.b16 %v761, %v760
  %v963 = vpack.c.b16 %v763, %v762
  %v964 = vpack.c.b16 %v765, %v764
  %v965 = vpack.c.b16 %v767, %v766
  %v966 = vpack.c.b16 %v769, %v768
  %v967 = vpack.c.b16 %v771, %v770
  %v968 = vpack.c.b16 %v773, %v772
  %v969 = vpack.c.b16 %v775, %v774
  %v970 = vpack.c.b16 %v777, %v776
  %v971 = vpack.c.b16 %v779, %v778
  %v972 = vpack.c.b16 %v781, %v780
  %v973 = vpack.c.b16 %v783, %v782
  %v974 = vpack.c.b16 %v785, %v784
  %v975 = vpack.c.b16 %v787, %v786
  %v976 = vpack.c.b16 %v789, %v788
  %v977 = vpack.c.b16 %v791, %v790
  %v978 = vpack.c.b16 %v793, %v792
  %v979 = vpack.c.b16 %v795, %v794
  %v980 = vpack.c.b16 %v797, %v796
  %v981 = vpack.c.b16 %v799, %v798
  %v982 = vpack.c.b16 %v801, %v800
  %v983 = vpack.c.b16 %v803, %v802
  %v984 = vpack.c.b16 %v805, %v804
  %v985 = vpack.c.b16 %v807, %v806
  %v986 = vpack.c.b16 %v809, %v808
  %v987 = vpack.c.b16 %v811, %v810
  %v988 = vpack.c.b16 %v813, %v812
  %v989 = vpack.c.b16 %v815, %v814
  %v990 = vpack.c.b16 %v817, %v816
  %v991 = vpack.c.b16 %v819, %v818
  %v992 = vpack.c.b16 %v821, %v820
  %v993 = vpack.c.b16 %v823, %v822
  %v994 = vpack.c.b16 %v825, %v824
  %v995 = vpack.c.b16 %v827, %v826
  %v996 = vpack.c.b16 %v829, %v828
  %v997 = vpack.c.b16 %v831, %v830
  %v998 = vpack.c.b16 %v833, %v832
  %v999 = vpack.c.b16 %v835, %v834
  %v1000 = vpack.c.b16 %v837, %v836
  %v1001 = vpack.c.b16 %v839, %v838
  %v1002 = vpack.c.b16 %v841, %v840
  %v1003 = vpack.c.b16 %v843, %v842
  %v1004 = vpack.c.b16 %v845, %v844
  %v1005 = vpack.c.b16 %v847, %v846
  %v1006 = vpack.c.b16 %v849, %v848
  %v1007 = vpack.c.b16 %v851, %v850
  %v1008 = vpack.c.b16 %v853, %v852
  %v1009 = vpack.c.b16 %v855, %v854
  %v1010 = vpack.c.b16 %v857, %v856
  %v1011 = vpack.c.b16 %v859, %v858
  %v1012 = vpack.c.b16 %v861, %v860
  %v1013 = vpack.c.b16 %v863, %v862
  %v1014 = vpack.c.b16 %v865, %v864
  %v1015 = vpack.c.b16 %v867, %v866
  %v1016 = vpack.c.b16 %v869, %v868
  %v1017 = vpack.c.b16 %v871, %v870
  %v1018 = vpack.c.b16 %v873, %v872
  %v1019 = vpack.c.b16 %v875, %v874
  %v1020 = vpack.c.b16 %v877, %v876
  %v1021 = vpack.c.b16 %v879, %v878
  %v1022 = vpack.c.b16 %v881, %v880
  %v1023 = vpack.c.b16 %v883, %v882
  %v1180 = vunpack.c.l.b16 %v308
  %v1181 = vunpack.c.l.b16 %v309
  %v1182 = vunpack.c.l.b16 %v310
  %v1183 = vunpack.c.l.b16 %v311
  %v1184 = vunpack.c.l.b16 %v312
  %v1185 = vunpack.c.l.b16 %v313
  %v1186 = vunpack.c.l.b16 %v314
  %v1187 = vunpack.c.l.b16 %v315
  %v1188 = vunpack.c.l.b16 %v316
  %v1189 = vunpack.c.l.b16 %v317
  %v1190 = vunpack.c.l.b16 %v318
  %v1191 = vunpack.c.l.b16 %v319
  %v1192 = vunpack.c.l.b16 %v320
  %v1193 = vunpack.c.l.b16 %v321
  %v1194 = vunpack.c.l.b16 %v322
  %v1195 = vunpack.c.l.b16 %v323
  %v1196 = vpack.c.b16 %v1181, %v1180
  %v1197 = vpack.c.b16 %v1183, %v1182
  %v1198 = vpack.c.b16 %v1185, %v1184
  %v1199 = vpack.c.b16 %v1187, %v1186
  %v1200 = vpack.c.b16 %v1189, %v1188
  %v1201 = vpack.c.b16 %v1191, %v1190
  %v1202 = vpack.c.b16 %v1193, %v1192
  %v1203 = vpack.c.b16 %v1195, %v1194
  %1212 = vmatpush.bf16.msra.mxu0 %v1203
  %1213 = vmatpush.bf16.msra.mxu0 %v1202
  %1214 = vmatpush.bf16.msra.mxu0 %v1201
  %1215 = vmatpush.bf16.msra.mxu0 %v1200
  %1216 = vmatpush.bf16.msra.mxu0 %v1199
  %1217 = vmatpush.bf16.msra.mxu0 %v1198
  %1218 = vmatpush.bf16.msra.mxu0 %v1197
  %1219 = vmatpush.bf16.msra.mxu0 %v1196
  %1220 = vmatmul.bf16.gmra.mxu0 %v884
  %v1221 = vpop.f32.mrf.mxu0
  %v1222 = vadd.f32 0.0, %v1221
  %v1223 = vpop.f32.mrf.mxu0
  %v1224 = vadd.f32 0.0, %v1223
  %1225 = vmatmul.bf16.gmra.mxu0 %v885
  %v1226 = vpop.f32.mrf.mxu0
  %v1227 = vadd.f32 0.0, %v1226
  %v1228 = vpop.f32.mrf.mxu0
  %v1229 = vadd.f32 0.0, %v1228
  %1230 = vmatmul.bf16.gmra.mxu0 %v886
  %v1231 = vpop.f32.mrf.mxu0
  %v1232 = vadd.f32 0.0, %v1231
  %v1233 = vpop.f32.mrf.mxu0
  %v1234 = vadd.f32 0.0, %v1233
  %1235 = vmatmul.bf16.gmra.mxu0 %v887
  %v1236 = vpop.f32.mrf.mxu0
  %v1237 = vadd.f32 0.0, %v1236
  %v1238 = vpop.f32.mrf.mxu0
  %v1239 = vadd.f32 0.0, %v1238
  %1240 = vmatmul.bf16.gmra.mxu0 %v888
  %v1241 = vpop.f32.mrf.mxu0
  %v1242 = vadd.f32 0.0, %v1241
  %v1243 = vpop.f32.mrf.mxu0
  %v1244 = vadd.f32 0.0, %v1243
  %1245 = vmatmul.bf16.gmra.mxu0 %v889
  %v1246 = vpop.f32.mrf.mxu0
  %v1247 = vadd.f32 0.0, %v1246
  %v1248 = vpop.f32.mrf.mxu0
  %v1249 = vadd.f32 0.0, %v1248
  %1250 = vmatmul.bf16.gmra.mxu0 %v890
  %v1251 = vpop.f32.mrf.mxu0
  %v1252 = vadd.f32 0.0, %v1251
  %v1253 = vpop.f32.mrf.mxu0
  %v1254 = vadd.f32 0.0, %v1253
  %1255 = vmatmul.bf16.gmra.mxu0 %v891
  %v1256 = vpop.f32.mrf.mxu0
  %v1257 = vadd.f32 0.0, %v1256
  %v1258 = vpop.f32.mrf.mxu0
  %v1259 = vadd.f32 0.0, %v1258
  %1260 = vmatmul.bf16.gmra.mxu0 %v892
  %v1261 = vpop.f32.mrf.mxu0
  %v1262 = vadd.f32 0.0, %v1261
  %v1263 = vpop.f32.mrf.mxu0
  %v1264 = vadd.f32 0.0, %v1263
  %1265 = vmatmul.bf16.gmra.mxu0 %v893
  %v1266 = vpop.f32.mrf.mxu0
  %v1267 = vadd.f32 0.0, %v1266
  %v1268 = vpop.f32.mrf.mxu0
  %v1269 = vadd.f32 0.0, %v1268
  %1270 = vmatmul.bf16.gmra.mxu0 %v894
  %v1271 = vpop.f32.mrf.mxu0
  %v1272 = vadd.f32 0.0, %v1271
  %v1273 = vpop.f32.mrf.mxu0
  %v1274 = vadd.f32 0.0, %v1273
  %1275 = vmatmul.bf16.gmra.mxu0 %v895
  %v1276 = vpop.f32.mrf.mxu0
  %v1277 = vadd.f32 0.0, %v1276
  %v1278 = vpop.f32.mrf.mxu0
  %v1279 = vadd.f32 0.0, %v1278
  %1280 = vmatmul.bf16.gmra.mxu0 %v896
  %v1281 = vpop.f32.mrf.mxu0
  %v1282 = vadd.f32 0.0, %v1281
  %v1283 = vpop.f32.mrf.mxu0
  %v1284 = vadd.f32 0.0, %v1283
  %1285 = vmatmul.bf16.gmra.mxu0 %v897
  %v1286 = vpop.f32.mrf.mxu0
  %v1287 = vadd.f32 0.0, %v1286
  %v1288 = vpop.f32.mrf.mxu0
  %v1289 = vadd.f32 0.0, %v1288
  %1290 = vmatmul.bf16.gmra.mxu0 %v898
  %v1291 = vpop.f32.mrf.mxu0
  %v1292 = vadd.f32 0.0, %v1291
  %v1293 = vpop.f32.mrf.mxu0
  %v1294 = vadd.f32 0.0, %v1293
  %1295 = vmatmul.bf16.gmra.mxu0 %v899
  %v1296 = vpop.f32.mrf.mxu0
  %v1297 = vadd.f32 0.0, %v1296
  %v1298 = vpop.f32.mrf.mxu0
  %v1299 = vadd.f32 0.0, %v1298
  %1300 = vmatmul.bf16.gmra.mxu0 %v900
  %v1301 = vpop.f32.mrf.mxu0
  %v1302 = vadd.f32 0.0, %v1301
  %v1303 = vpop.f32.mrf.mxu0
  %v1304 = vadd.f32 0.0, %v1303
  %1305 = vmatmul.bf16.gmra.mxu0 %v901
  %v1306 = vpop.f32.mrf.mxu0
  %v1307 = vadd.f32 0.0, %v1306
  %v1308 = vpop.f32.mrf.mxu0
  %v1309 = vadd.f32 0.0, %v1308
  %1310 = vmatmul.bf16.gmra.mxu0 %v902
  %v1311 = vpop.f32.mrf.mxu0
  %v1312 = vadd.f32 0.0, %v1311
  %v1313 = vpop.f32.mrf.mxu0
  %v1314 = vadd.f32 0.0, %v1313
  %1315 = vmatmul.bf16.gmra.mxu0 %v903
  %v1316 = vpop.f32.mrf.mxu0
  %v1317 = vadd.f32 0.0, %v1316
  %v1318 = vpop.f32.mrf.mxu0
  %v1319 = vadd.f32 0.0, %v1318
  %1320 = vmatmul.bf16.gmra.mxu0 %v904
  %v1321 = vpop.f32.mrf.mxu0
  %v1322 = vadd.f32 0.0, %v1321
  %v1323 = vpop.f32.mrf.mxu0
  %v1324 = vadd.f32 0.0, %v1323
  %1325 = vmatmul.bf16.gmra.mxu0 %v905
  %v1326 = vpop.f32.mrf.mxu0
  %v1327 = vadd.f32 0.0, %v1326
  %v1328 = vpop.f32.mrf.mxu0
  %v1329 = vadd.f32 0.0, %v1328
  %1330 = vmatmul.bf16.gmra.mxu0 %v906
  %v1331 = vpop.f32.mrf.mxu0
  %v1332 = vadd.f32 0.0, %v1331
  %v1333 = vpop.f32.mrf.mxu0
  %v1334 = vadd.f32 0.0, %v1333
  %1335 = vmatmul.bf16.gmra.mxu0 %v907
  %v1336 = vpop.f32.mrf.mxu0
  %v1337 = vadd.f32 0.0, %v1336
  %v1338 = vpop.f32.mrf.mxu0
  %v1339 = vadd.f32 0.0, %v1338
  %1340 = vmatmul.bf16.gmra.mxu0 %v908
  %v1341 = vpop.f32.mrf.mxu0
  %v1342 = vadd.f32 0.0, %v1341
  %v1343 = vpop.f32.mrf.mxu0
  %v1344 = vadd.f32 0.0, %v1343
  %1345 = vmatmul.bf16.gmra.mxu0 %v909
  %v1346 = vpop.f32.mrf.mxu0
  %v1347 = vadd.f32 0.0, %v1346
  %v1348 = vpop.f32.mrf.mxu0
  %v1349 = vadd.f32 0.0, %v1348
  %1350 = vmatmul.bf16.gmra.mxu0 %v910
  %v1351 = vpop.f32.mrf.mxu0
  %v1352 = vadd.f32 0.0, %v1351
  %v1353 = vpop.f32.mrf.mxu0
  %v1354 = vadd.f32 0.0, %v1353
  %1355 = vmatmul.bf16.gmra.mxu0 %v911
  %v1356 = vpop.f32.mrf.mxu0
  %v1357 = vadd.f32 0.0, %v1356
  %v1358 = vpop.f32.mrf.mxu0
  %v1359 = vadd.f32 0.0, %v1358
  %1360 = vmatmul.bf16.gmra.mxu0 %v912
  %v1361 = vpop.f32.mrf.mxu0
  %v1362 = vadd.f32 0.0, %v1361
  %v1363 = vpop.f32.mrf.mxu0
  %v1364 = vadd.f32 0.0, %v1363
  %1365 = vmatmul.bf16.gmra.mxu0 %v913
  %v1366 = vpop.f32.mrf.mxu0
  %v1367 = vadd.f32 0.0, %v1366
  %v1368 = vpop.f32.mrf.mxu0
  %v1369 = vadd.f32 0.0, %v1368
  %1370 = vmatmul.bf16.gmra.mxu0 %v914
  %v1371 = vpop.f32.mrf.mxu0
  %v1372 = vadd.f32 0.0, %v1371
  %v1373 = vpop.f32.mrf.mxu0
  %v1374 = vadd.f32 0.0, %v1373
  %1375 = vmatmul.bf16.gmra.mxu0 %v915
  %v1376 = vpop.f32.mrf.mxu0
  %v1377 = vadd.f32 0.0, %v1376
  %v1378 = vpop.f32.mrf.mxu0
  %v1379 = vadd.f32 0.0, %v1378
  %1380 = vmatmul.bf16.gmra.mxu0 %v916
  %v1381 = vpop.f32.mrf.mxu0
  %v1382 = vadd.f32 0.0, %v1381
  %v1383 = vpop.f32.mrf.mxu0
  %v1384 = vadd.f32 0.0, %v1383
  %1385 = vmatmul.bf16.gmra.mxu0 %v917
  %v1386 = vpop.f32.mrf.mxu0
  %v1387 = vadd.f32 0.0, %v1386
  %v1388 = vpop.f32.mrf.mxu0
  %v1389 = vadd.f32 0.0, %v1388
  %1390 = vmatmul.bf16.gmra.mxu0 %v918
  %v1391 = vpop.f32.mrf.mxu0
  %v1392 = vadd.f32 0.0, %v1391
  %v1393 = vpop.f32.mrf.mxu0
  %v1394 = vadd.f32 0.0, %v1393
  %1395 = vmatmul.bf16.gmra.mxu0 %v919
  %v1396 = vpop.f32.mrf.mxu0
  %v1397 = vadd.f32 0.0, %v1396
  %v1398 = vpop.f32.mrf.mxu0
  %v1399 = vadd.f32 0.0, %v1398
  %1400 = vmatmul.bf16.gmra.mxu0 %v920
  %v1401 = vpop.f32.mrf.mxu0
  %v1402 = vadd.f32 0.0, %v1401
  %v1403 = vpop.f32.mrf.mxu0
  %v1404 = vadd.f32 0.0, %v1403
  %1405 = vmatmul.bf16.gmra.mxu0 %v921
  %v1406 = vpop.f32.mrf.mxu0
  %v1407 = vadd.f32 0.0, %v1406
  %v1408 = vpop.f32.mrf.mxu0
  %v1409 = vadd.f32 0.0, %v1408
  %1410 = vmatmul.bf16.gmra.mxu0 %v922
  %v1411 = vpop.f32.mrf.mxu0
  %v1412 = vadd.f32 0.0, %v1411
  %v1413 = vpop.f32.mrf.mxu0
  %v1414 = vadd.f32 0.0, %v1413
  %1415 = vmatmul.bf16.gmra.mxu0 %v923
  %v1416 = vpop.f32.mrf.mxu0
  %v1417 = vadd.f32 0.0, %v1416
  %v1418 = vpop.f32.mrf.mxu0
  %v1419 = vadd.f32 0.0, %v1418
  %1420 = vmatmul.bf16.gmra.mxu0 %v924
  %v1421 = vpop.f32.mrf.mxu0
  %v1422 = vadd.f32 0.0, %v1421
  %v1423 = vpop.f32.mrf.mxu0
  %v1424 = vadd.f32 0.0, %v1423
  %1425 = vmatmul.bf16.gmra.mxu0 %v925
  %v1426 = vpop.f32.mrf.mxu0
  %v1427 = vadd.f32 0.0, %v1426
  %v1428 = vpop.f32.mrf.mxu0
  %v1429 = vadd.f32 0.0, %v1428
  %1430 = vmatmul.bf16.gmra.mxu0 %v926
  %v1431 = vpop.f32.mrf.mxu0
  %v1432 = vadd.f32 0.0, %v1431
  %v1433 = vpop.f32.mrf.mxu0
  %v1434 = vadd.f32 0.0, %v1433
  %1435 = vmatmul.bf16.gmra.mxu0 %v927
  %v1436 = vpop.f32.mrf.mxu0
  %v1437 = vadd.f32 0.0, %v1436
  %v1438 = vpop.f32.mrf.mxu0
  %v1439 = vadd.f32 0.0, %v1438
  %1440 = vmatmul.bf16.gmra.mxu0 %v928
  %v1441 = vpop.f32.mrf.mxu0
  %v1442 = vadd.f32 0.0, %v1441
  %v1443 = vpop.f32.mrf.mxu0
  %v1444 = vadd.f32 0.0, %v1443
  %1445 = vmatmul.bf16.gmra.mxu0 %v929
  %v1446 = vpop.f32.mrf.mxu0
  %v1447 = vadd.f32 0.0, %v1446
  %v1448 = vpop.f32.mrf.mxu0
  %v1449 = vadd.f32 0.0, %v1448
  %1450 = vmatmul.bf16.gmra.mxu0 %v930
  %v1451 = vpop.f32.mrf.mxu0
  %v1452 = vadd.f32 0.0, %v1451
  %v1453 = vpop.f32.mrf.mxu0
  %v1454 = vadd.f32 0.0, %v1453
  %1455 = vmatmul.bf16.gmra.mxu0 %v931
  %v1456 = vpop.f32.mrf.mxu0
  %v1457 = vadd.f32 0.0, %v1456
  %v1458 = vpop.f32.mrf.mxu0
  %v1459 = vadd.f32 0.0, %v1458
  %1460 = vmatmul.bf16.gmra.mxu0 %v932
  %v1461 = vpop.f32.mrf.mxu0
  %v1462 = vadd.f32 0.0, %v1461
  %v1463 = vpop.f32.mrf.mxu0
  %v1464 = vadd.f32 0.0, %v1463
  %1465 = vmatmul.bf16.gmra.mxu0 %v933
  %v1466 = vpop.f32.mrf.mxu0
  %v1467 = vadd.f32 0.0, %v1466
  %v1468 = vpop.f32.mrf.mxu0
  %v1469 = vadd.f32 0.0, %v1468
  %1470 = vmatmul.bf16.gmra.mxu0 %v934
  %v1471 = vpop.f32.mrf.mxu0
  %v1472 = vadd.f32 0.0, %v1471
  %v1473 = vpop.f32.mrf.mxu0
  %v1474 = vadd.f32 0.0, %v1473
  %1475 = vmatmul.bf16.gmra.mxu0 %v935
  %v1476 = vpop.f32.mrf.mxu0
  %v1477 = vadd.f32 0.0, %v1476
  %v1478 = vpop.f32.mrf.mxu0
  %v1479 = vadd.f32 0.0, %v1478
  %1480 = vmatmul.bf16.gmra.mxu0 %v936
  %v1481 = vpop.f32.mrf.mxu0
  %v1482 = vadd.f32 0.0, %v1481
  %v1483 = vpop.f32.mrf.mxu0
  %v1484 = vadd.f32 0.0, %v1483
  %1485 = vmatmul.bf16.gmra.mxu0 %v937
  %v1486 = vpop.f32.mrf.mxu0
  %v1487 = vadd.f32 0.0, %v1486
  %v1488 = vpop.f32.mrf.mxu0
  %v1489 = vadd.f32 0.0, %v1488
  %1490 = vmatmul.bf16.gmra.mxu0 %v938
  %v1491 = vpop.f32.mrf.mxu0
  %v1492 = vadd.f32 0.0, %v1491
  %v1493 = vpop.f32.mrf.mxu0
  %v1494 = vadd.f32 0.0, %v1493
  %1495 = vmatmul.bf16.gmra.mxu0 %v939
  %v1496 = vpop.f32.mrf.mxu0
  %v1497 = vadd.f32 0.0, %v1496
  %v1498 = vpop.f32.mrf.mxu0
  %v1499 = vadd.f32 0.0, %v1498
  %1500 = vmatmul.bf16.gmra.mxu0 %v940
  %v1501 = vpop.f32.mrf.mxu0
  %v1502 = vadd.f32 0.0, %v1501
  %v1503 = vpop.f32.mrf.mxu0
  %v1504 = vadd.f32 0.0, %v1503
  %1505 = vmatmul.bf16.gmra.mxu0 %v941
  %v1506 = vpop.f32.mrf.mxu0
  %v1507 = vadd.f32 0.0, %v1506
  %v1508 = vpop.f32.mrf.mxu0
  %v1509 = vadd.f32 0.0, %v1508
  %1510 = vmatmul.bf16.gmra.mxu0 %v942
  %v1511 = vpop.f32.mrf.mxu0
  %v1512 = vadd.f32 0.0, %v1511
  %v1513 = vpop.f32.mrf.mxu0
  %v1514 = vadd.f32 0.0, %v1513
  %1515 = vmatmul.bf16.gmra.mxu0 %v943
  %v1516 = vpop.f32.mrf.mxu0
  %v1517 = vadd.f32 0.0, %v1516
  %v1518 = vpop.f32.mrf.mxu0
  %v1519 = vadd.f32 0.0, %v1518
  %1520 = vmatmul.bf16.gmra.mxu0 %v944
  %v1521 = vpop.f32.mrf.mxu0
  %v1522 = vadd.f32 0.0, %v1521
  %v1523 = vpop.f32.mrf.mxu0
  %v1524 = vadd.f32 0.0, %v1523
  %1525 = vmatmul.bf16.gmra.mxu0 %v945
  %v1526 = vpop.f32.mrf.mxu0
  %v1527 = vadd.f32 0.0, %v1526
  %v1528 = vpop.f32.mrf.mxu0
  %v1529 = vadd.f32 0.0, %v1528
  %1530 = vmatmul.bf16.gmra.mxu0 %v946
  %v1531 = vpop.f32.mrf.mxu0
  %v1532 = vadd.f32 0.0, %v1531
  %v1533 = vpop.f32.mrf.mxu0
  %v1534 = vadd.f32 0.0, %v1533
  %1535 = vmatmul.bf16.gmra.mxu0 %v947
  %v1536 = vpop.f32.mrf.mxu0
  %v1537 = vadd.f32 0.0, %v1536
  %v1538 = vpop.f32.mrf.mxu0
  %v1539 = vadd.f32 0.0, %v1538
  %1540 = vmatmul.bf16.gmra.mxu0 %v948
  %v1541 = vpop.f32.mrf.mxu0
  %v1542 = vadd.f32 0.0, %v1541
  %v1543 = vpop.f32.mrf.mxu0
  %v1544 = vadd.f32 0.0, %v1543
  %1545 = vmatmul.bf16.gmra.mxu0 %v949
  %v1546 = vpop.f32.mrf.mxu0
  %v1547 = vadd.f32 0.0, %v1546
  %v1548 = vpop.f32.mrf.mxu0
  %v1549 = vadd.f32 0.0, %v1548
  %1550 = vmatmul.bf16.gmra.mxu0 %v950
  %v1551 = vpop.f32.mrf.mxu0
  %v1552 = vadd.f32 0.0, %v1551
  %v1553 = vpop.f32.mrf.mxu0
  %v1554 = vadd.f32 0.0, %v1553
  %1555 = vmatmul.bf16.gmra.mxu0 %v951
  %v1556 = vpop.f32.mrf.mxu0
  %v1557 = vadd.f32 0.0, %v1556
  %v1558 = vpop.f32.mrf.mxu0
  %v1559 = vadd.f32 0.0, %v1558
  %1560 = vmatmul.bf16.gmra.mxu0 %v952
  %v1561 = vpop.f32.mrf.mxu0
  %v1562 = vadd.f32 0.0, %v1561
  %v1563 = vpop.f32.mrf.mxu0
  %v1564 = vadd.f32 0.0, %v1563
  %1565 = vmatmul.bf16.gmra.mxu0 %v953
  %v1566 = vpop.f32.mrf.mxu0
  %v1567 = vadd.f32 0.0, %v1566
  %v1568 = vpop.f32.mrf.mxu0
  %v1569 = vadd.f32 0.0, %v1568
  %1570 = vmatmul.bf16.gmra.mxu0 %v954
  %v1571 = vpop.f32.mrf.mxu0
  %v1572 = vadd.f32 0.0, %v1571
  %v1573 = vpop.f32.mrf.mxu0
  %v1574 = vadd.f32 0.0, %v1573
  %1575 = vmatmul.bf16.gmra.mxu0 %v955
  %v1576 = vpop.f32.mrf.mxu0
  %v1577 = vadd.f32 0.0, %v1576
  %v1578 = vpop.f32.mrf.mxu0
  %v1579 = vadd.f32 0.0, %v1578
  %1580 = vmatmul.bf16.gmra.mxu0 %v956
  %v1581 = vpop.f32.mrf.mxu0
  %v1582 = vadd.f32 0.0, %v1581
  %v1583 = vpop.f32.mrf.mxu0
  %v1584 = vadd.f32 0.0, %v1583
  %1585 = vmatmul.bf16.gmra.mxu0 %v957
  %v1586 = vpop.f32.mrf.mxu0
  %v1587 = vadd.f32 0.0, %v1586
  %v1588 = vpop.f32.mrf.mxu0
  %v1589 = vadd.f32 0.0, %v1588
  %1590 = vmatmul.bf16.gmra.mxu0 %v958
  %v1591 = vpop.f32.mrf.mxu0
  %v1592 = vadd.f32 0.0, %v1591
  %v1593 = vpop.f32.mrf.mxu0
  %v1594 = vadd.f32 0.0, %v1593
  %1595 = vmatmul.bf16.gmra.mxu0 %v959
  %v1596 = vpop.f32.mrf.mxu0
  %v1597 = vadd.f32 0.0, %v1596
  %v1598 = vpop.f32.mrf.mxu0
  %v1599 = vadd.f32 0.0, %v1598
  %1600 = vmatmul.bf16.gmra.mxu0 %v960
  %v1601 = vpop.f32.mrf.mxu0
  %v1602 = vadd.f32 0.0, %v1601
  %v1603 = vpop.f32.mrf.mxu0
  %v1604 = vadd.f32 0.0, %v1603
  %1605 = vmatmul.bf16.gmra.mxu0 %v961
  %v1606 = vpop.f32.mrf.mxu0
  %v1607 = vadd.f32 0.0, %v1606
  %v1608 = vpop.f32.mrf.mxu0
  %v1609 = vadd.f32 0.0, %v1608
  %1610 = vmatmul.bf16.gmra.mxu0 %v962
  %v1611 = vpop.f32.mrf.mxu0
  %v1612 = vadd.f32 0.0, %v1611
  %v1613 = vpop.f32.mrf.mxu0
  %v1614 = vadd.f32 0.0, %v1613
  %1615 = vmatmul.bf16.gmra.mxu0 %v963
  %v1616 = vpop.f32.mrf.mxu0
  %v1617 = vadd.f32 0.0, %v1616
  %v1618 = vpop.f32.mrf.mxu0
  %v1619 = vadd.f32 0.0, %v1618
  %1620 = vmatmul.bf16.gmra.mxu0 %v964
  %v1621 = vpop.f32.mrf.mxu0
  %v1622 = vadd.f32 0.0, %v1621
  %v1623 = vpop.f32.mrf.mxu0
  %v1624 = vadd.f32 0.0, %v1623
  %1625 = vmatmul.bf16.gmra.mxu0 %v965
  %v1626 = vpop.f32.mrf.mxu0
  %v1627 = vadd.f32 0.0, %v1626
  %v1628 = vpop.f32.mrf.mxu0
  %v1629 = vadd.f32 0.0, %v1628
  %1630 = vmatmul.bf16.gmra.mxu0 %v966
  %v1631 = vpop.f32.mrf.mxu0
  %v1632 = vadd.f32 0.0, %v1631
  %v1633 = vpop.f32.mrf.mxu0
  %v1634 = vadd.f32 0.0, %v1633
  %1635 = vmatmul.bf16.gmra.mxu0 %v967
  %v1636 = vpop.f32.mrf.mxu0
  %v1637 = vadd.f32 0.0, %v1636
  %v1638 = vpop.f32.mrf.mxu0
  %v1639 = vadd.f32 0.0, %v1638
  %1640 = vmatmul.bf16.gmra.mxu0 %v968
  %v1641 = vpop.f32.mrf.mxu0
  %v1642 = vadd.f32 0.0, %v1641
  %v1643 = vpop.f32.mrf.mxu0
  %v1644 = vadd.f32 0.0, %v1643
  %1645 = vmatmul.bf16.gmra.mxu0 %v969
  %v1646 = vpop.f32.mrf.mxu0
  %v1647 = vadd.f32 0.0, %v1646
  %v1648 = vpop.f32.mrf.mxu0
  %v1649 = vadd.f32 0.0, %v1648
  %1650 = vmatmul.bf16.gmra.mxu0 %v970
  %v1651 = vpop.f32.mrf.mxu0
  %v1652 = vadd.f32 0.0, %v1651
  %v1653 = vpop.f32.mrf.mxu0
  %v1654 = vadd.f32 0.0, %v1653
  %1655 = vmatmul.bf16.gmra.mxu0 %v971
  %v1656 = vpop.f32.mrf.mxu0
  %v1657 = vadd.f32 0.0, %v1656
  %v1658 = vpop.f32.mrf.mxu0
  %v1659 = vadd.f32 0.0, %v1658
  %1660 = vmatmul.bf16.gmra.mxu0 %v972
  %v1661 = vpop.f32.mrf.mxu0
  %v1662 = vadd.f32 0.0, %v1661
  %v1663 = vpop.f32.mrf.mxu0
  %v1664 = vadd.f32 0.0, %v1663
  %1665 = vmatmul.bf16.gmra.mxu0 %v973
  %v1666 = vpop.f32.mrf.mxu0
  %v1667 = vadd.f32 0.0, %v1666
  %v1668 = vpop.f32.mrf.mxu0
  %v1669 = vadd.f32 0.0, %v1668
  %1670 = vmatmul.bf16.gmra.mxu0 %v974
  %v1671 = vpop.f32.mrf.mxu0
  %v1672 = vadd.f32 0.0, %v1671
  %v1673 = vpop.f32.mrf.mxu0
  %v1674 = vadd.f32 0.0, %v1673
  %1675 = vmatmul.bf16.gmra.mxu0 %v975
  %v1676 = vpop.f32.mrf.mxu0
  %v1677 = vadd.f32 0.0, %v1676
  %v1678 = vpop.f32.mrf.mxu0
  %v1679 = vadd.f32 0.0, %v1678
  %1680 = vmatmul.bf16.gmra.mxu0 %v976
  %v1681 = vpop.f32.mrf.mxu0
  %v1682 = vadd.f32 0.0, %v1681
  %v1683 = vpop.f32.mrf.mxu0
  %v1684 = vadd.f32 0.0, %v1683
  %1685 = vmatmul.bf16.gmra.mxu0 %v977
  %v1686 = vpop.f32.mrf.mxu0
  %v1687 = vadd.f32 0.0, %v1686
  %v1688 = vpop.f32.mrf.mxu0
  %v1689 = vadd.f32 0.0, %v1688
  %1690 = vmatmul.bf16.gmra.mxu0 %v978
  %v1691 = vpop.f32.mrf.mxu0
  %v1692 = vadd.f32 0.0, %v1691
  %v1693 = vpop.f32.mrf.mxu0
  %v1694 = vadd.f32 0.0, %v1693
  %1695 = vmatmul.bf16.gmra.mxu0 %v979
  %v1696 = vpop.f32.mrf.mxu0
  %v1697 = vadd.f32 0.0, %v1696
  %v1698 = vpop.f32.mrf.mxu0
  %v1699 = vadd.f32 0.0, %v1698
  %1700 = vmatmul.bf16.gmra.mxu0 %v980
  %v1701 = vpop.f32.mrf.mxu0
  %v1702 = vadd.f32 0.0, %v1701
  %v1703 = vpop.f32.mrf.mxu0
  %v1704 = vadd.f32 0.0, %v1703
  %1705 = vmatmul.bf16.gmra.mxu0 %v981
  %v1706 = vpop.f32.mrf.mxu0
  %v1707 = vadd.f32 0.0, %v1706
  %v1708 = vpop.f32.mrf.mxu0
  %v1709 = vadd.f32 0.0, %v1708
  %1710 = vmatmul.bf16.gmra.mxu0 %v982
  %v1711 = vpop.f32.mrf.mxu0
  %v1712 = vadd.f32 0.0, %v1711
  %v1713 = vpop.f32.mrf.mxu0
  %v1714 = vadd.f32 0.0, %v1713
  %1715 = vmatmul.bf16.gmra.mxu0 %v983
  %v1716 = vpop.f32.mrf.mxu0
  %v1717 = vadd.f32 0.0, %v1716
  %v1718 = vpop.f32.mrf.mxu0
  %v1719 = vadd.f32 0.0, %v1718
  %1720 = vmatmul.bf16.gmra.mxu0 %v984
  %v1721 = vpop.f32.mrf.mxu0
  %v1722 = vadd.f32 0.0, %v1721
  %v1723 = vpop.f32.mrf.mxu0
  %v1724 = vadd.f32 0.0, %v1723
  %1725 = vmatmul.bf16.gmra.mxu0 %v985
  %v1726 = vpop.f32.mrf.mxu0
  %v1727 = vadd.f32 0.0, %v1726
  %v1728 = vpop.f32.mrf.mxu0
  %v1729 = vadd.f32 0.0, %v1728
  %1730 = vmatmul.bf16.gmra.mxu0 %v986
  %v1731 = vpop.f32.mrf.mxu0
  %v1732 = vadd.f32 0.0, %v1731
  %v1733 = vpop.f32.mrf.mxu0
  %v1734 = vadd.f32 0.0, %v1733
  %1735 = vmatmul.bf16.gmra.mxu0 %v987
  %v1736 = vpop.f32.mrf.mxu0
  %v1737 = vadd.f32 0.0, %v1736
  %v1738 = vpop.f32.mrf.mxu0
  %v1739 = vadd.f32 0.0, %v1738
  %1740 = vmatmul.bf16.gmra.mxu0 %v988
  %v1741 = vpop.f32.mrf.mxu0
  %v1742 = vadd.f32 0.0, %v1741
  %v1743 = vpop.f32.mrf.mxu0
  %v1744 = vadd.f32 0.0, %v1743
  %1745 = vmatmul.bf16.gmra.mxu0 %v989
  %v1746 = vpop.f32.mrf.mxu0
  %v1747 = vadd.f32 0.0, %v1746
  %v1748 = vpop.f32.mrf.mxu0
  %v1749 = vadd.f32 0.0, %v1748
  %1750 = vmatmul.bf16.gmra.mxu0 %v990
  %v1751 = vpop.f32.mrf.mxu0
  %v1752 = vadd.f32 0.0, %v1751
  %v1753 = vpop.f32.mrf.mxu0
  %v1754 = vadd.f32 0.0, %v1753
  %1755 = vmatmul.bf16.gmra.mxu0 %v991
  %v1756 = vpop.f32.mrf.mxu0
  %v1757 = vadd.f32 0.0, %v1756
  %v1758 = vpop.f32.mrf.mxu0
  %v1759 = vadd.f32 0.0, %v1758
  %1760 = vmatmul.bf16.gmra.mxu0 %v992
  %v1761 = vpop.f32.mrf.mxu0
  %v1762 = vadd.f32 0.0, %v1761
  %v1763 = vpop.f32.mrf.mxu0
  %v1764 = vadd.f32 0.0, %v1763
  %1765 = vmatmul.bf16.gmra.mxu0 %v993
  %v1766 = vpop.f32.mrf.mxu0
  %v1767 = vadd.f32 0.0, %v1766
  %v1768 = vpop.f32.mrf.mxu0
  %v1769 = vadd.f32 0.0, %v1768
  %1770 = vmatmul.bf16.gmra.mxu0 %v994
  %v1771 = vpop.f32.mrf.mxu0
  %v1772 = vadd.f32 0.0, %v1771
  %v1773 = vpop.f32.mrf.mxu0
  %v1774 = vadd.f32 0.0, %v1773
  %1775 = vmatmul.bf16.gmra.mxu0 %v995
  %v1776 = vpop.f32.mrf.mxu0
  %v1777 = vadd.f32 0.0, %v1776
  %v1778 = vpop.f32.mrf.mxu0
  %v1779 = vadd.f32 0.0, %v1778
  %1780 = vmatmul.bf16.gmra.mxu0 %v996
  %v1781 = vpop.f32.mrf.mxu0
  %v1782 = vadd.f32 0.0, %v1781
  %v1783 = vpop.f32.mrf.mxu0
  %v1784 = vadd.f32 0.0, %v1783
  %1785 = vmatmul.bf16.gmra.mxu0 %v997
  %v1786 = vpop.f32.mrf.mxu0
  %v1787 = vadd.f32 0.0, %v1786
  %v1788 = vpop.f32.mrf.mxu0
  %v1789 = vadd.f32 0.0, %v1788
  %1790 = vmatmul.bf16.gmra.mxu0 %v998
  %v1791 = vpop.f32.mrf.mxu0
  %v1792 = vadd.f32 0.0, %v1791
  %v1793 = vpop.f32.mrf.mxu0
  %v1794 = vadd.f32 0.0, %v1793
  %1795 = vmatmul.bf16.gmra.mxu0 %v999
  %v1796 = vpop.f32.mrf.mxu0
  %v1797 = vadd.f32 0.0, %v1796
  %v1798 = vpop.f32.mrf.mxu0
  %v1799 = vadd.f32 0.0, %v1798
  %1800 = vmatmul.bf16.gmra.mxu0 %v1000
  %v1801 = vpop.f32.mrf.mxu0
  %v1802 = vadd.f32 0.0, %v1801
  %v1803 = vpop.f32.mrf.mxu0
  %v1804 = vadd.f32 0.0, %v1803
  %1805 = vmatmul.bf16.gmra.mxu0 %v1001
  %v1806 = vpop.f32.mrf.mxu0
  %v1807 = vadd.f32 0.0, %v1806
  %v1808 = vpop.f32.mrf.mxu0
  %v1809 = vadd.f32 0.0, %v1808
  %1810 = vmatmul.bf16.gmra.mxu0 %v1002
  %v1811 = vpop.f32.mrf.mxu0
  %v1812 = vadd.f32 0.0, %v1811
  %v1813 = vpop.f32.mrf.mxu0
  %v1814 = vadd.f32 0.0, %v1813
  %1815 = vmatmul.bf16.gmra.mxu0 %v1003
  %v1816 = vpop.f32.mrf.mxu0
  %v1817 = vadd.f32 0.0, %v1816
  %v1818 = vpop.f32.mrf.mxu0
  %v1819 = vadd.f32 0.0, %v1818
  %1820 = vmatmul.bf16.gmra.mxu0 %v1004
  %v1821 = vpop.f32.mrf.mxu0
  %v1822 = vadd.f32 0.0, %v1821
  %v1823 = vpop.f32.mrf.mxu0
  %v1824 = vadd.f32 0.0, %v1823
  %1825 = vmatmul.bf16.gmra.mxu0 %v1005
  %v1826 = vpop.f32.mrf.mxu0
  %v1827 = vadd.f32 0.0, %v1826
  %v1828 = vpop.f32.mrf.mxu0
  %v1829 = vadd.f32 0.0, %v1828
  %1830 = vmatmul.bf16.gmra.mxu0 %v1006
  %v1831 = vpop.f32.mrf.mxu0
  %v1832 = vadd.f32 0.0, %v1831
  %v1833 = vpop.f32.mrf.mxu0
  %v1834 = vadd.f32 0.0, %v1833
  %1835 = vmatmul.bf16.gmra.mxu0 %v1007
  %v1836 = vpop.f32.mrf.mxu0
  %v1837 = vadd.f32 0.0, %v1836
  %v1838 = vpop.f32.mrf.mxu0
  %v1839 = vadd.f32 0.0, %v1838
  %1840 = vmatmul.bf16.gmra.mxu0 %v1008
  %v1841 = vpop.f32.mrf.mxu0
  %v1842 = vadd.f32 0.0, %v1841
  %v1843 = vpop.f32.mrf.mxu0
  %v1844 = vadd.f32 0.0, %v1843
  %1845 = vmatmul.bf16.gmra.mxu0 %v1009
  %v1846 = vpop.f32.mrf.mxu0
  %v1847 = vadd.f32 0.0, %v1846
  %v1848 = vpop.f32.mrf.mxu0
  %v1849 = vadd.f32 0.0, %v1848
  %1850 = vmatmul.bf16.gmra.mxu0 %v1010
  %v1851 = vpop.f32.mrf.mxu0
  %v1852 = vadd.f32 0.0, %v1851
  %v1853 = vpop.f32.mrf.mxu0
  %v1854 = vadd.f32 0.0, %v1853
  %1855 = vmatmul.bf16.gmra.mxu0 %v1011
  %v1856 = vpop.f32.mrf.mxu0
  %v1857 = vadd.f32 0.0, %v1856
  %v1858 = vpop.f32.mrf.mxu0
  %v1859 = vadd.f32 0.0, %v1858
  %1860 = vmatmul.bf16.gmra.mxu0 %v1012
  %v1861 = vpop.f32.mrf.mxu0
  %v1862 = vadd.f32 0.0, %v1861
  %v1863 = vpop.f32.mrf.mxu0
  %v1864 = vadd.f32 0.0, %v1863
  %1865 = vmatmul.bf16.gmra.mxu0 %v1013
  %v1866 = vpop.f32.mrf.mxu0
  %v1867 = vadd.f32 0.0, %v1866
  %v1868 = vpop.f32.mrf.mxu0
  %v1869 = vadd.f32 0.0, %v1868
  %1870 = vmatmul.bf16.gmra.mxu0 %v1014
  %v1871 = vpop.f32.mrf.mxu0
  %v1872 = vadd.f32 0.0, %v1871
  %v1873 = vpop.f32.mrf.mxu0
  %v1874 = vadd.f32 0.0, %v1873
  %1875 = vmatmul.bf16.gmra.mxu0 %v1015
  %v1876 = vpop.f32.mrf.mxu0
  %v1877 = vadd.f32 0.0, %v1876
  %v1878 = vpop.f32.mrf.mxu0
  %v1879 = vadd.f32 0.0, %v1878
  %1880 = vmatmul.bf16.gmra.mxu0 %v1016
  %v1881 = vpop.f32.mrf.mxu0
  %v1882 = vadd.f32 0.0, %v1881
  %v1883 = vpop.f32.mrf.mxu0
  %v1884 = vadd.f32 0.0, %v1883
  %1885 = vmatmul.bf16.gmra.mxu0 %v1017
  %v1886 = vpop.f32.mrf.mxu0
  %v1887 = vadd.f32 0.0, %v1886
  %v1888 = vpop.f32.mrf.mxu0
  %v1889 = vadd.f32 0.0, %v1888
  %1890 = vmatmul.bf16.gmra.mxu0 %v1018
  %v1891 = vpop.f32.mrf.mxu0
  %v1892 = vadd.f32 0.0, %v1891
  %v1893 = vpop.f32.mrf.mxu0
  %v1894 = vadd.f32 0.0, %v1893
  %1895 = vmatmul.bf16.gmra.mxu0 %v1019
  %v1896 = vpop.f32.mrf.mxu0
  %v1897 = vadd.f32 0.0, %v1896
  %v1898 = vpop.f32.mrf.mxu0
  %v1899 = vadd.f32 0.0, %v1898
  %1900 = vmatmul.bf16.gmra.mxu0 %v1020
  %v1901 = vpop.f32.mrf.mxu0
  %v1902 = vadd.f32 0.0, %v1901
  %v1903 = vpop.f32.mrf.mxu0
  %v1904 = vadd.f32 0.0, %v1903
  %1905 = vmatmul.bf16.gmra.mxu0 %v1021
  %v1906 = vpop.f32.mrf.mxu0
  %v1907 = vadd.f32 0.0, %v1906
  %v1908 = vpop.f32.mrf.mxu0
  %v1909 = vadd.f32 0.0, %v1908
  %1910 = vmatmul.bf16.gmra.mxu0 %v1022
  %v1911 = vpop.f32.mrf.mxu0
  %v1912 = vadd.f32 0.0, %v1911
  %v1913 = vpop.f32.mrf.mxu0
  %v1914 = vadd.f32 0.0, %v1913
  %1915 = vmatmul.bf16.gmra.mxu0 %v1023
  %v1916 = vpop.f32.mrf.mxu0
  %v1917 = vadd.f32 0.0, %v1916
  %v1918 = vpop.f32.mrf.mxu0
  %v1919 = vadd.f32 0.0, %v1918
  %1920 = vdwg.mxu0
  %v1921 = vmax.f32 %v1222, %v1309
  %v1922 = vmax.f32 %v1224, %v1312
  %v1923 = vmax.f32 %v1227, %v1314
  %v1924 = vmax.f32 %v1229, %v1317
  %v1925 = vmax.f32 %v1232, %v1319
  %v1926 = vmax.f32 %v1234, %v1322
  %v1927 = vmax.f32 %v1237, %v1324
  %v1928 = vmax.f32 %v1239, %v1327
  %v1929 = vmax.f32 %v1242, %v1329
  %v1930 = vmax.f32 %v1244, %v1332
  %v1931 = vmax.f32 %v1247, %v1334
  %v1932 = vmax.f32 %v1249, %v1337
  %v1933 = vmax.f32 %v1252, %v1339
  %v1934 = vmax.f32 %v1254, %v1342
  %v1935 = vmax.f32 %v1257, %v1344
  %v1936 = vmax.f32 %v1259, %v1347
  %v1937 = vmax.f32 %v1262, %v1349
  %v1938 = vmax.f32 %v1264, %v1352
  %v1939 = vmax.f32 %v1267, %v1354
  %v1940 = vmax.f32 %v1269, %v1357
  %v1941 = vmax.f32 %v1272, %v1359
  %v1942 = vmax.f32 %v1274, %v1362
  %v1943 = vmax.f32 %v1277, %v1364
  %v1944 = vmax.f32 %v1279, %v1367
  %v1945 = vmax.f32 %v1282, %v1369
  %v1946 = vmax.f32 %v1284, %v1372
  %v1947 = vmax.f32 %v1287, %v1374
  %v1948 = vmax.f32 %v1289, %v1377
  %v1949 = vmax.f32 %v1292, %v1379
  %v1950 = vmax.f32 %v1294, %v1382
  %v1951 = vmax.f32 %v1297, %v1384
  %v1952 = vmax.f32 %v1299, %v1387
  %v1953 = vmax.f32 %v1302, %v1389
  %v1954 = vmax.f32 %v1304, %v1392
  %v1955 = vmax.f32 %v1307, %v1394
  %v1956 = vmax.f32 %v1921, %v1397
  %v1957 = vmax.f32 %v1922, %v1399
  %v1958 = vmax.f32 %v1923, %v1402
  %v1959 = vmax.f32 %v1924, %v1404
  %v1960 = vmax.f32 %v1925, %v1407
  %v1961 = vmax.f32 %v1926, %v1409
  %v1962 = vmax.f32 %v1927, %v1412
  %v1963 = vmax.f32 %v1928, %v1414
  %v1964 = vmax.f32 %v1929, %v1417
  %v1965 = vmax.f32 %v1930, %v1419
  %v1966 = vmax.f32 %v1931, %v1422
  %v1967 = vmax.f32 %v1932, %v1424
  %v1968 = vmax.f32 %v1933, %v1427
  %v1969 = vmax.f32 %v1934, %v1429
  %v1970 = vmax.f32 %v1935, %v1432
  %v1971 = vmax.f32 %v1936, %v1434
  %v1972 = vmax.f32 %v1937, %v1437
  %v1973 = vmax.f32 %v1938, %v1439
  %v1974 = vmax.f32 %v1939, %v1442
  %v1975 = vmax.f32 %v1940, %v1444
  %v1976 = vmax.f32 %v1941, %v1447
  %v1977 = vmax.f32 %v1942, %v1449
  %v1978 = vmax.f32 %v1943, %v1452
  %v1979 = vmax.f32 %v1944, %v1454
  %v1980 = vmax.f32 %v1945, %v1457
  %v1981 = vmax.f32 %v1946, %v1459
  %v1982 = vmax.f32 %v1947, %v1462
  %v1983 = vmax.f32 %v1948, %v1464
  %v1984 = vmax.f32 %v1949, %v1467
  %v1985 = vmax.f32 %v1950, %v1469
  %v1986 = vmax.f32 %v1951, %v1472
  %v1987 = vmax.f32 %v1952, %v1474
  %v1988 = vmax.f32 %v1953, %v1477
  %v1989 = vmax.f32 %v1954, %v1479
  %v1990 = vmax.f32 %v1955, %v1482
  %v1991 = vmax.f32 %v1956, %v1484
  %v1992 = vmax.f32 %v1957, %v1487
  %v1993 = vmax.f32 %v1958, %v1489
  %v1994 = vmax.f32 %v1959, %v1492
  %v1995 = vmax.f32 %v1960, %v1494
  %v1996 = vmax.f32 %v1961, %v1497
  %v1997 = vmax.f32 %v1962, %v1499
  %v1998 = vmax.f32 %v1963, %v1502
  %v1999 = vmax.f32 %v1964, %v1504
  %v2000 = vmax.f32 %v1965, %v1507
  %v2001 = vmax.f32 %v1966, %v1509
  %v2002 = vmax.f32 %v1967, %v1512
  %v2003 = vmax.f32 %v1968, %v1514
  %v2004 = vmax.f32 %v1969, %v1517
  %v2005 = vmax.f32 %v1970, %v1519
  %v2006 = vmax.f32 %v1971, %v1522
  %v2007 = vmax.f32 %v1972, %v1524
  %v2008 = vmax.f32 %v1973, %v1527
  %v2009 = vmax.f32 %v1974, %v1529
  %v2010 = vmax.f32 %v1975, %v1532
  %v2011 = vmax.f32 %v1976, %v1534
  %v2012 = vmax.f32 %v1977, %v1537
  %v2013 = vmax.f32 %v1978, %v1539
  %v2014 = vmax.f32 %v1979, %v1542
  %v2015 = vmax.f32 %v1980, %v1544
  %v2016 = vmax.f32 %v1981, %v1547
  %v2017 = vmax.f32 %v1982, %v1549
  %v2018 = vmax.f32 %v1983, %v1552
  %v2019 = vmax.f32 %v1984, %v1554
  %v2020 = vmax.f32 %v1985, %v1557
  %v2021 = vmax.f32 %v1986, %v1559
  %v2022 = vmax.f32 %v1987, %v1562
  %v2023 = vmax.f32 %v1988, %v1564
  %v2024 = vmax.f32 %v1989, %v1567
  %v2025 = vmax.f32 %v1990, %v1569
  %v2026 = vmax.f32 %v1991, %v1572
  %v2027 = vmax.f32 %v1992, %v1574
  %v2028 = vmax.f32 %v1993, %v1577
  %v2029 = vmax.f32 %v1994, %v1579
  %v2030 = vmax.f32 %v1995, %v1582
  %v2031 = vmax.f32 %v1996, %v1584
  %v2032 = vmax.f32 %v1997, %v1587
  %v2033 = vmax.f32 %v1998, %v1589
  %v2034 = vmax.f32 %v1999, %v1592
  %v2035 = vmax.f32 %v2000, %v1594
  %v2036 = vmax.f32 %v2001, %v1597
  %v2037 = vmax.f32 %v2002, %v1599
  %v2038 = vmax.f32 %v2003, %v1602
  %v2039 = vmax.f32 %v2004, %v1604
  %v2040 = vmax.f32 %v2005, %v1607
  %v2041 = vmax.f32 %v2006, %v1609
  %v2042 = vmax.f32 %v2007, %v1612
  %v2043 = vmax.f32 %v2008, %v1614
  %v2044 = vmax.f32 %v2009, %v1617
  %v2045 = vmax.f32 %v2010, %v1619
  %v2046 = vmax.f32 %v2011, %v1622
  %v2047 = vmax.f32 %v2012, %v1624
  %v2048 = vmax.f32 %v2013, %v1627
  %v2049 = vmax.f32 %v2014, %v1629
  %v2050 = vmax.f32 %v2015, %v1632
  %v2051 = vmax.f32 %v2016, %v1634
  %v2052 = vmax.f32 %v2017, %v1637
  %v2053 = vmax.f32 %v2018, %v1639
  %v2054 = vmax.f32 %v2019, %v1642
  %v2055 = vmax.f32 %v2020, %v1644
  %v2056 = vmax.f32 %v2021, %v1647
  %v2057 = vmax.f32 %v2022, %v1649
  %v2058 = vmax.f32 %v2023, %v1652
  %v2059 = vmax.f32 %v2024, %v1654
  %v2060 = vmax.f32 %v2025, %v1657
  %v2061 = vmax.f32 %v2026, %v1659
  %v2062 = vmax.f32 %v2027, %v1662
  %v2063 = vmax.f32 %v2028, %v1664
  %v2064 = vmax.f32 %v2029, %v1667
  %v2065 = vmax.f32 %v2030, %v1669
  %v2066 = vmax.f32 %v2031, %v1672
  %v2067 = vmax.f32 %v2032, %v1674
  %v2068 = vmax.f32 %v2033, %v1677
  %v2069 = vmax.f32 %v2034, %v1679
  %v2070 = vmax.f32 %v2035, %v1682
  %v2071 = vmax.f32 %v2036, %v1684
  %v2072 = vmax.f32 %v2037, %v1687
  %v2073 = vmax.f32 %v2038, %v1689
  %v2074 = vmax.f32 %v2039, %v1692
  %v2075 = vmax.f32 %v2040, %v1694
  %v2076 = vmax.f32 %v2041, %v1697
  %v2077 = vmax.f32 %v2042, %v1699
  %v2078 = vmax.f32 %v2043, %v1702
  %v2079 = vmax.f32 %v2044, %v1704
  %v2080 = vmax.f32 %v2045, %v1707
  %v2081 = vmax.f32 %v2046, %v1709
  %v2082 = vmax.f32 %v2047, %v1712
  %v2083 = vmax.f32 %v2048, %v1714
  %v2084 = vmax.f32 %v2049, %v1717
  %v2085 = vmax.f32 %v2050, %v1719
  %v2086 = vmax.f32 %v2051, %v1722
  %v2087 = vmax.f32 %v2052, %v1724
  %v2088 = vmax.f32 %v2053, %v1727
  %v2089 = vmax.f32 %v2054, %v1729
  %v2090 = vmax.f32 %v2055, %v1732
  %v2091 = vmax.f32 %v2056, %v1734
  %v2092 = vmax.f32 %v2057, %v1737
  %v2093 = vmax.f32 %v2058, %v1739
  %v2094 = vmax.f32 %v2059, %v1742
  %v2095 = vmax.f32 %v2060, %v1744
  %v2096 = vmax.f32 %v2061, %v1747
  %v2097 = vmax.f32 %v2062, %v1749
  %v2098 = vmax.f32 %v2063, %v1752
  %v2099 = vmax.f32 %v2064, %v1754
  %v2100 = vmax.f32 %v2065, %v1757
  %v2101 = vmax.f32 %v2066, %v1759
  %v2102 = vmax.f32 %v2067, %v1762
  %v2103 = vmax.f32 %v2068, %v1764
  %v2104 = vmax.f32 %v2069, %v1767
  %v2105 = vmax.f32 %v2070, %v1769
  %v2106 = vmax.f32 %v2071, %v1772
  %v2107 = vmax.f32 %v2072, %v1774
  %v2108 = vmax.f32 %v2073, %v1777
  %v2109 = vmax.f32 %v2074, %v1779
  %v2110 = vmax.f32 %v2075, %v1782
  %v2111 = vmax.f32 %v2076, %v1784
  %v2112 = vmax.f32 %v2077, %v1787
  %v2113 = vmax.f32 %v2078, %v1789
  %v2114 = vmax.f32 %v2079, %v1792
  %v2115 = vmax.f32 %v2080, %v1794
  %v2116 = vmax.f32 %v2081, %v1797
  %v2117 = vmax.f32 %v2082, %v1799
  %v2118 = vmax.f32 %v2083, %v1802
  %v2119 = vmax.f32 %v2084, %v1804
  %v2120 = vmax.f32 %v2085, %v1807
  %v2121 = vmax.f32 %v2086, %v1809
  %v2122 = vmax.f32 %v2087, %v1812
  %v2123 = vmax.f32 %v2088, %v1814
  %v2124 = vmax.f32 %v2089, %v1817
  %v2125 = vmax.f32 %v2090, %v1819
  %v2126 = vmax.f32 %v2091, %v1822
  %v2127 = vmax.f32 %v2092, %v1824
  %v2128 = vmax.f32 %v2093, %v1827
  %v2129 = vmax.f32 %v2094, %v1829
  %v2130 = vmax.f32 %v2095, %v1832
  %v2131 = vmax.f32 %v2096, %v1834
  %v2132 = vmax.f32 %v2097, %v1837
  %v2133 = vmax.f32 %v2098, %v1839
  %v2134 = vmax.f32 %v2099, %v1842
  %v2135 = vmax.f32 %v2100, %v1844
  %v2136 = vmax.f32 %v2101, %v1847
  %v2137 = vmax.f32 %v2102, %v1849
  %v2138 = vmax.f32 %v2103, %v1852
  %v2139 = vmax.f32 %v2104, %v1854
  %v2140 = vmax.f32 %v2105, %v1857
  %v2141 = vmax.f32 %v2106, %v1859
  %v2142 = vmax.f32 %v2107, %v1862
  %v2143 = vmax.f32 %v2108, %v1864
  %v2144 = vmax.f32 %v2109, %v1867
  %v2145 = vmax.f32 %v2110, %v1869
  %v2146 = vmax.f32 %v2111, %v1872
  %v2147 = vmax.f32 %v2112, %v1874
  %v2148 = vmax.f32 %v2113, %v1877
  %v2149 = vmax.f32 %v2114, %v1879
  %v2150 = vmax.f32 %v2115, %v1882
  %v2151 = vmax.f32 %v2116, %v1884
  %v2152 = vmax.f32 %v2117, %v1887
  %v2153 = vmax.f32 %v2118, %v1889
  %v2154 = vmax.f32 %v2119, %v1892
  %v2155 = vmax.f32 %v2120, %v1894
  %v2156 = vmax.f32 %v2121, %v1897
  %v2157 = vmax.f32 %v2122, %v1899
  %v2158 = vmax.f32 %v2123, %v1902
  %v2159 = vmax.f32 %v2124, %v1904
  %v2160 = vmax.f32 %v2125, %v1907
  %v2161 = vmax.f32 %v2126, %v1909
  %v2162 = vmax.f32 %v2127, %v1912
  %v2163 = vmax.f32 %v2128, %v1914
  %v2164 = vmax.f32 %v2129, %v1917
  %v2165 = vmax.f32 %v2130, %v1919
  %v2166 = vperm.slane %v27, 0
  %v2167 = vadd.f32 %v2131, %v2166
  %v2168 = vadd.f32 %v2132, %v2166
  %v2169 = vadd.f32 %v2133, %v2166
  %v2170 = vadd.f32 %v2134, %v2166
  %v2171 = vadd.f32 %v2135, %v2166
  %v2172 = vadd.f32 %v2136, %v2166
  %v2173 = vadd.f32 %v2137, %v2166
  %v2174 = vadd.f32 %v2138, %v2166
  %v2175 = vadd.f32 %v2139, %v2166
  %v2176 = vadd.f32 %v2140, %v2166
  %v2177 = vadd.f32 %v2141, %v2166
  %v2178 = vadd.f32 %v2142, %v2166
  %v2179 = vadd.f32 %v2143, %v2166
  %v2180 = vadd.f32 %v2144, %v2166
  %v2181 = vadd.f32 %v2145, %v2166
  %v2182 = vadd.f32 %v2146, %v2166
  %v2183 = vadd.f32 %v2147, %v2166
  %v2184 = vadd.f32 %v2148, %v2166
  %v2185 = vadd.f32 %v2149, %v2166
  %v2186 = vadd.f32 %v2150, %v2166
  %v2187 = vadd.f32 %v2151, %v2166
  %v2188 = vadd.f32 %v2152, %v2166
  %v2189 = vadd.f32 %v2153, %v2166
  %v2190 = vadd.f32 %v2154, %v2166
  %v2191 = vadd.f32 %v2155, %v2166
  %v2192 = vadd.f32 %v2156, %v2166
  %v2193 = vadd.f32 %v2157, %v2166
  %v2194 = vadd.f32 %v2158, %v2166
  %v2195 = vadd.f32 %v2159, %v2166
  %v2196 = vadd.f32 %v2160, %v2166
  %v2197 = vadd.f32 %v2161, %v2166
  %v2198 = vadd.f32 %v2162, %v2166
  %v2199 = vadd.f32 %v2163, %v2166
  %v2200 = vadd.f32 %v2164, %v2166
  %v2201 = vadd.f32 %v2165, %v2166
  %v2202 = vmax.f32 %v2167, 0.0
  %v2203 = vmax.f32 %v2168, 0.0
  %v2204 = vmax.f32 %v2169, 0.0
  %v2205 = vmax.f32 %v2170, 0.0
  %v2206 = vmax.f32 %v2171, 0.0
  %v2207 = vmax.f32 %v2172, 0.0
  %v2208 = vmax.f32 %v2173, 0.0
  %v2209 = vmax.f32 %v2174, 0.0
  %v2210 = vmax.f32 %v2175, 0.0
  %v2211 = vmax.f32 %v2176, 0.0
  %v2212 = vmax.f32 %v2177, 0.0
  %v2213 = vmax.f32 %v2178, 0.0
  %v2214 = vmax.f32 %v2179, 0.0
  %v2215 = vmax.f32 %v2180, 0.0
  %v2216 = vmax.f32 %v2181, 0.0
  %v2217 = vmax.f32 %v2182, 0.0
  %v2218 = vmax.f32 %v2183, 0.0
  %v2219 = vmax.f32 %v2184, 0.0
  %v2220 = vmax.f32 %v2185, 0.0
  %v2221 = vmax.f32 %v2186, 0.0
  %v2222 = vmax.f32 %v2187, 0.0
  %v2223 = vmax.f32 %v2188, 0.0
  %v2224 = vmax.f32 %v2189, 0.0
  %v2225 = vmax.f32 %v2190, 0.0
  %v2226 = vmax.f32 %v2191, 0.0
  %v2227 = vmax.f32 %v2192, 0.0
  %v2228 = vmax.f32 %v2193, 0.0
  %v2229 = vmax.f32 %v2194, 0.0
  %v2230 = vmax.f32 %v2195, 0.0
  %v2231 = vmax.f32 %v2196, 0.0
  %v2232 = vmax.f32 %v2197, 0.0
  %v2233 = vmax.f32 %v2198, 0.0
  %v2234 = vmax.f32 %v2199, 0.0
  %v2235 = vmax.f32 %v2200, 0.0
  %v2236 = vmax.f32 %v2201, 0.0
  %v2237 = vpack.c.bf16 %v2203, %v2202
  %v2238 = vpack.c.bf16 %v2205, %v2204
  %v2239 = vpack.c.bf16 %v2210, %v2209
  %v2240 = vpack.c.bf16 %v2212, %v2211
  %v2241 = vpack.c.bf16 %v2217, %v2216
  %v2242 = vpack.c.bf16 %v2219, %v2218
  %v2243 = vpack.c.bf16 %v2224, %v2223
  %v2244 = vpack.c.bf16 %v2226, %v2225
  %v2245 = vld [vmem:[%s2] sm:$0xf]
  %v2246 = vld [vmem:[%s2 + $0x4] sm:$0xf]
  %v2247 = vld [vmem:[%s2 + $0x8] sm:$0xf]
  %v2248 = vld [vmem:[%s2 + $0xc] sm:$0xf]
  %v2249 = vld [vmem:[%s2 + $0x10] sm:$0xf]
  %v2250 = vld [vmem:[%s2 + $0x14] sm:$0xf]
  %v2251 = vld [vmem:[%s2 + $0x18] sm:$0xf]
  %v2252 = vld [vmem:[%s2 + $0x1c] sm:$0xf]
  %v2253 = vpack.c.bf16 %v2204, %v2203
  %v2254 = vpack.c.bf16 %v2206, %v2205
  %v2255 = vpack.c.bf16 %v2211, %v2210
  %v2256 = vpack.c.bf16 %v2213, %v2212
  %v2257 = vpack.c.bf16 %v2218, %v2217
  %v2258 = vpack.c.bf16 %v2220, %v2219
  %v2259 = vpack.c.bf16 %v2225, %v2224
  %v2260 = vpack.c.bf16 %v2227, %v2226
  %v2261 = vld [vmem:[%s2 + $0x20] sm:$0xf]
  %v2262 = vld [vmem:[%s2 + $0x24] sm:$0xf]
  %v2263 = vld [vmem:[%s2 + $0x28] sm:$0xf]
  %v2264 = vld [vmem:[%s2 + $0x2c] sm:$0xf]
  %v2265 = vld [vmem:[%s2 + $0x30] sm:$0xf]
  %v2266 = vld [vmem:[%s2 + $0x34] sm:$0xf]
  %v2267 = vld [vmem:[%s2 + $0x38] sm:$0xf]
  %v2268 = vld [vmem:[%s2 + $0x3c] sm:$0xf]
  %v2277 = vunpack.c.l.b16 %v2261
  %v2278 = vunpack.c.l.b16 %v2262
  %v2279 = vunpack.c.l.b16 %v2263
  %v2280 = vunpack.c.l.b16 %v2264
  %v2281 = vunpack.c.l.b16 %v2265
  %v2282 = vunpack.c.l.b16 %v2266
  %v2283 = vunpack.c.l.b16 %v2267
  %v2284 = vunpack.c.l.b16 %v2268
  %v2285 = vpack.c.b16 %v2278, %v2277
  %v2286 = vpack.c.b16 %v2280, %v2279
  %v2287 = vpack.c.b16 %v2282, %v2281
  %v2288 = vpack.c.b16 %v2284, %v2283
  %vm2293 = vcmask 523264
  %v2295 = vsel %vm2293, %v2253, 0
  %v2298 = vsel %vm2293, %v2254, 0
  %v2301 = vsel %vm2293, %v2255, 0
  %v2304 = vsel %vm2293, %v2256, 0
  %v2307 = vsel %vm2293, %v2257, 0
  %v2310 = vsel %vm2293, %v2258, 0
  %v2313 = vsel %vm2293, %v2259, 0
  %v2316 = vsel %vm2293, %v2260, 0
  %2318 = vmatpush.bf16.msra.mxu0 0
  %2319 = vmatpush.bf16.msra.mxu0 0
  %2320 = vmatpush.bf16.msra.mxu0 0
  %2321 = vmatpush.bf16.msra.mxu0 0
  %2322 = vmatpush.bf16.msra.mxu0 %v2288
  %2323 = vmatpush.bf16.msra.mxu0 %v2287
  %2324 = vmatpush.bf16.msra.mxu0 %v2286
  %2325 = vmatpush.bf16.msra.mxu0 %v2285
  %2326 = vmatmul.bf16.gmra.mxu0 %v2295
  %v2327 = vpop.f32.mrf.mxu0
  %v2328 = vadd.f32 0.0, %v2327
  %v2329 = vpop.f32.mrf.mxu0
  %v2330 = vadd.f32 0.0, %v2329
  %2331 = vmatmul.bf16.gmra.mxu0 %v2298
  %v2332 = vpop.f32.mrf.mxu0
  %v2333 = vadd.f32 0.0, %v2332
  %v2334 = vpop.f32.mrf.mxu0
  %v2335 = vadd.f32 0.0, %v2334
  %2336 = vmatmul.bf16.gmra.mxu0 %v2301
  %v2337 = vpop.f32.mrf.mxu0
  %v2338 = vadd.f32 0.0, %v2337
  %v2339 = vpop.f32.mrf.mxu0
  %v2340 = vadd.f32 0.0, %v2339
  %2341 = vmatmul.bf16.gmra.mxu0 %v2304
  %v2342 = vpop.f32.mrf.mxu0
  %v2343 = vadd.f32 0.0, %v2342
  %v2344 = vpop.f32.mrf.mxu0
  %v2345 = vadd.f32 0.0, %v2344
  %2346 = vmatmul.bf16.gmra.mxu0 %v2307
  %v2347 = vpop.f32.mrf.mxu0
  %v2348 = vadd.f32 0.0, %v2347
  %v2349 = vpop.f32.mrf.mxu0
  %v2350 = vadd.f32 0.0, %v2349
  %2351 = vmatmul.bf16.gmra.mxu0 %v2310
  %v2352 = vpop.f32.mrf.mxu0
  %v2353 = vadd.f32 0.0, %v2352
  %v2354 = vpop.f32.mrf.mxu0
  %v2355 = vadd.f32 0.0, %v2354
  %2356 = vmatmul.bf16.gmra.mxu0 %v2313
  %v2357 = vpop.f32.mrf.mxu0
  %v2358 = vadd.f32 0.0, %v2357
  %v2359 = vpop.f32.mrf.mxu0
  %v2360 = vadd.f32 0.0, %v2359
  %2361 = vmatmul.bf16.gmra.mxu0 %v2316
  %v2362 = vpop.f32.mrf.mxu0
  %v2363 = vadd.f32 0.0, %v2362
  %v2364 = vpop.f32.mrf.mxu0
  %v2365 = vadd.f32 0.0, %v2364
  %2366 = vdwg.mxu0
  %v2375 = vunpack.c.l.b16 %v2245
  %v2376 = vunpack.c.l.b16 %v2246
  %v2377 = vunpack.c.l.b16 %v2247
  %v2378 = vunpack.c.l.b16 %v2248
  %v2379 = vunpack.c.l.b16 %v2249
  %v2380 = vunpack.c.l.b16 %v2250
  %v2381 = vunpack.c.l.b16 %v2251
  %v2382 = vunpack.c.l.b16 %v2252
  %v2383 = vpack.c.b16 %v2376, %v2375
  %v2384 = vpack.c.b16 %v2378, %v2377
  %v2385 = vpack.c.b16 %v2380, %v2379
  %v2386 = vpack.c.b16 %v2382, %v2381
  %v2392 = vsel %vm2293, %v2237, 0
  %v2395 = vsel %vm2293, %v2238, 0
  %v2398 = vsel %vm2293, %v2239, 0
  %v2401 = vsel %vm2293, %v2240, 0
  %v2404 = vsel %vm2293, %v2241, 0
  %v2407 = vsel %vm2293, %v2242, 0
  %v2410 = vsel %vm2293, %v2243, 0
  %v2413 = vsel %vm2293, %v2244, 0
  %2415 = vmatpush.bf16.msra.mxu0 0
  %2416 = vmatpush.bf16.msra.mxu0 0
  %2417 = vmatpush.bf16.msra.mxu0 0
  %2418 = vmatpush.bf16.msra.mxu0 0
  %2419 = vmatpush.bf16.msra.mxu0 %v2386
  %2420 = vmatpush.bf16.msra.mxu0 %v2385
  %2421 = vmatpush.bf16.msra.mxu0 %v2384
  %2422 = vmatpush.bf16.msra.mxu0 %v2383
  %2423 = vmatmul.bf16.gmra.mxu0 %v2392
  %v2424 = vpop.f32.mrf.mxu0
  %v2425 = vadd.f32 %v2328, %v2424
  %v2426 = vpop.f32.mrf.mxu0
  %v2427 = vadd.f32 %v2330, %v2426
  %2428 = vmatmul.bf16.gmra.mxu0 %v2395
  %v2429 = vpop.f32.mrf.mxu0
  %v2430 = vadd.f32 %v2333, %v2429
  %v2431 = vpop.f32.mrf.mxu0
  %v2432 = vadd.f32 %v2335, %v2431
  %2433 = vmatmul.bf16.gmra.mxu0 %v2398
  %v2434 = vpop.f32.mrf.mxu0
  %v2435 = vadd.f32 %v2338, %v2434
  %v2436 = vpop.f32.mrf.mxu0
  %v2437 = vadd.f32 %v2340, %v2436
  %2438 = vmatmul.bf16.gmra.mxu0 %v2401
  %v2439 = vpop.f32.mrf.mxu0
  %v2440 = vadd.f32 %v2343, %v2439
  %v2441 = vpop.f32.mrf.mxu0
  %v2442 = vadd.f32 %v2345, %v2441
  %2443 = vmatmul.bf16.gmra.mxu0 %v2404
  %v2444 = vpop.f32.mrf.mxu0
  %v2445 = vadd.f32 %v2348, %v2444
  %v2446 = vpop.f32.mrf.mxu0
  %v2447 = vadd.f32 %v2350, %v2446
  %2448 = vmatmul.bf16.gmra.mxu0 %v2407
  %v2449 = vpop.f32.mrf.mxu0
  %v2450 = vadd.f32 %v2353, %v2449
  %v2451 = vpop.f32.mrf.mxu0
  %v2452 = vadd.f32 %v2355, %v2451
  %2453 = vmatmul.bf16.gmra.mxu0 %v2410
  %v2454 = vpop.f32.mrf.mxu0
  %v2455 = vadd.f32 %v2358, %v2454
  %v2456 = vpop.f32.mrf.mxu0
  %v2457 = vadd.f32 %v2360, %v2456
  %2458 = vmatmul.bf16.gmra.mxu0 %v2413
  %v2459 = vpop.f32.mrf.mxu0
  %v2460 = vadd.f32 %v2363, %v2459
  %v2461 = vpop.f32.mrf.mxu0
  %v2462 = vadd.f32 %v2365, %v2461
  %2463 = vdwg.mxu0
  %v2464 = vpack.c.bf16 %v2207, %v2206
  %v2465 = vpack.c.bf16 %v2214, %v2213
  %v2466 = vpack.c.bf16 %v2221, %v2220
  %v2467 = vpack.c.bf16 %v2228, %v2227
  %v2468 = vld [vmem:[%s2 + $0x40] sm:$0xf]
  %v2469 = vld [vmem:[%s2 + $0x44] sm:$0xf]
  %v2470 = vld [vmem:[%s2 + $0x48] sm:$0xf]
  %v2471 = vld [vmem:[%s2 + $0x4c] sm:$0xf]
  %v2472 = vld [vmem:[%s2 + $0x50] sm:$0xf]
  %v2473 = vld [vmem:[%s2 + $0x54] sm:$0xf]
  %v2474 = vld [vmem:[%s2 + $0x58] sm:$0xf]
  %v2475 = vld [vmem:[%s2 + $0x5c] sm:$0xf]
  %v2484 = vunpack.c.l.b16 %v2468
  %v2485 = vunpack.c.l.b16 %v2469
  %v2486 = vunpack.c.l.b16 %v2470
  %v2487 = vunpack.c.l.b16 %v2471
  %v2488 = vunpack.c.l.b16 %v2472
  %v2489 = vunpack.c.l.b16 %v2473
  %v2490 = vunpack.c.l.b16 %v2474
  %v2491 = vunpack.c.l.b16 %v2475
  %v2492 = vpack.c.b16 %v2485, %v2484
  %v2493 = vpack.c.b16 %v2487, %v2486
  %v2494 = vpack.c.b16 %v2489, %v2488
  %v2495 = vpack.c.b16 %v2491, %v2490
  %v2501 = vsel %vm2293, %v2464, 0
  %v2504 = vsel %vm2293, %v2465, 0
  %v2507 = vsel %vm2293, %v2466, 0
  %v2510 = vsel %vm2293, %v2467, 0
  %2512 = vmatpush.bf16.msra.mxu0 0
  %2513 = vmatpush.bf16.msra.mxu0 0
  %2514 = vmatpush.bf16.msra.mxu0 0
  %2515 = vmatpush.bf16.msra.mxu0 0
  %2516 = vmatpush.bf16.msra.mxu0 %v2495
  %2517 = vmatpush.bf16.msra.mxu0 %v2494
  %2518 = vmatpush.bf16.msra.mxu0 %v2493
  %2519 = vmatpush.bf16.msra.mxu0 %v2492
  %2520 = vmatmul.bf16.gmra.mxu0 %v2395
  %v2521 = vpop.f32.mrf.mxu0
  %v2522 = vadd.f32 0.0, %v2521
  %v2523 = vpop.f32.mrf.mxu0
  %v2524 = vadd.f32 0.0, %v2523
  %2525 = vmatmul.bf16.gmra.mxu0 %v2501
  %v2526 = vpop.f32.mrf.mxu0
  %v2527 = vadd.f32 0.0, %v2526
  %v2528 = vpop.f32.mrf.mxu0
  %v2529 = vadd.f32 0.0, %v2528
  %2530 = vmatmul.bf16.gmra.mxu0 %v2401
  %v2531 = vpop.f32.mrf.mxu0
  %v2532 = vadd.f32 0.0, %v2531
  %v2533 = vpop.f32.mrf.mxu0
  %v2534 = vadd.f32 0.0, %v2533
  %2535 = vmatmul.bf16.gmra.mxu0 %v2504
  %v2536 = vpop.f32.mrf.mxu0
  %v2537 = vadd.f32 0.0, %v2536
  %v2538 = vpop.f32.mrf.mxu0
  %v2539 = vadd.f32 0.0, %v2538
  %2540 = vmatmul.bf16.gmra.mxu0 %v2407
  %v2541 = vpop.f32.mrf.mxu0
  %v2542 = vadd.f32 0.0, %v2541
  %v2543 = vpop.f32.mrf.mxu0
  %v2544 = vadd.f32 0.0, %v2543
  %2545 = vmatmul.bf16.gmra.mxu0 %v2507
  %v2546 = vpop.f32.mrf.mxu0
  %v2547 = vadd.f32 0.0, %v2546
  %v2548 = vpop.f32.mrf.mxu0
  %v2549 = vadd.f32 0.0, %v2548
  %2550 = vmatmul.bf16.gmra.mxu0 %v2413
  %v2551 = vpop.f32.mrf.mxu0
  %v2552 = vadd.f32 0.0, %v2551
  %v2553 = vpop.f32.mrf.mxu0
  %v2554 = vadd.f32 0.0, %v2553
  %2555 = vmatmul.bf16.gmra.mxu0 %v2510
  %v2556 = vpop.f32.mrf.mxu0
  %v2557 = vadd.f32 0.0, %v2556
  %v2558 = vpop.f32.mrf.mxu0
  %v2559 = vadd.f32 0.0, %v2558
  %2560 = vdwg.mxu0
  %v2561 = vadd.f32 %v2425, %v2522
  %v2562 = vadd.f32 %v2427, %v2524
  %v2563 = vadd.f32 %v2430, %v2527
  %v2564 = vadd.f32 %v2432, %v2529
  %v2565 = vadd.f32 %v2435, %v2532
  %v2566 = vadd.f32 %v2437, %v2534
  %v2567 = vadd.f32 %v2440, %v2537
  %v2568 = vadd.f32 %v2442, %v2539
  %v2569 = vadd.f32 %v2445, %v2542
  %v2570 = vadd.f32 %v2447, %v2544
  %v2571 = vadd.f32 %v2450, %v2547
  %v2572 = vadd.f32 %v2452, %v2549
  %v2573 = vadd.f32 %v2455, %v2552
  %v2574 = vadd.f32 %v2457, %v2554
  %v2575 = vadd.f32 %v2460, %v2557
  %v2576 = vadd.f32 %v2462, %v2559
  %v2577 = vpack.c.bf16 %v2208, %v2207
  %v2578 = vpack.c.bf16 %v2215, %v2214
  %v2579 = vpack.c.bf16 %v2222, %v2221
  %v2580 = vpack.c.bf16 %v2229, %v2228
  %v2581 = vld [vmem:[%s2 + $0x60] sm:$0xf]
  %v2582 = vld [vmem:[%s2 + $0x64] sm:$0xf]
  %v2583 = vld [vmem:[%s2 + $0x68] sm:$0xf]
  %v2584 = vld [vmem:[%s2 + $0x6c] sm:$0xf]
  %v2585 = vld [vmem:[%s2 + $0x70] sm:$0xf]
  %v2586 = vld [vmem:[%s2 + $0x74] sm:$0xf]
  %v2587 = vld [vmem:[%s2 + $0x78] sm:$0xf]
  %v2588 = vld [vmem:[%s2 + $0x7c] sm:$0xf]
  %v2597 = vunpack.c.l.b16 %v2581
  %v2598 = vunpack.c.l.b16 %v2582
  %v2599 = vunpack.c.l.b16 %v2583
  %v2600 = vunpack.c.l.b16 %v2584
  %v2601 = vunpack.c.l.b16 %v2585
  %v2602 = vunpack.c.l.b16 %v2586
  %v2603 = vunpack.c.l.b16 %v2587
  %v2604 = vunpack.c.l.b16 %v2588
  %v2605 = vpack.c.b16 %v2598, %v2597
  %v2606 = vpack.c.b16 %v2600, %v2599
  %v2607 = vpack.c.b16 %v2602, %v2601
  %v2608 = vpack.c.b16 %v2604, %v2603
  %v2614 = vsel %vm2293, %v2577, 0
  %v2617 = vsel %vm2293, %v2578, 0
  %v2620 = vsel %vm2293, %v2579, 0
  %v2623 = vsel %vm2293, %v2580, 0
  %2625 = vmatpush.bf16.msra.mxu0 0
  %2626 = vmatpush.bf16.msra.mxu0 0
  %2627 = vmatpush.bf16.msra.mxu0 0
  %2628 = vmatpush.bf16.msra.mxu0 0
  %2629 = vmatpush.bf16.msra.mxu0 %v2608
  %2630 = vmatpush.bf16.msra.mxu0 %v2607
  %2631 = vmatpush.bf16.msra.mxu0 %v2606
  %2632 = vmatpush.bf16.msra.mxu0 %v2605
  %2633 = vmatmul.bf16.gmra.mxu0 %v2298
  %v2634 = vpop.f32.mrf.mxu0
  %v2635 = vadd.f32 0.0, %v2634
  %v2636 = vpop.f32.mrf.mxu0
  %v2637 = vadd.f32 0.0, %v2636
  %2638 = vmatmul.bf16.gmra.mxu0 %v2614
  %v2639 = vpop.f32.mrf.mxu0
  %v2640 = vadd.f32 0.0, %v2639
  %v2641 = vpop.f32.mrf.mxu0
  %v2642 = vadd.f32 0.0, %v2641
  %2643 = vmatmul.bf16.gmra.mxu0 %v2304
  %v2644 = vpop.f32.mrf.mxu0
  %v2645 = vadd.f32 0.0, %v2644
  %v2646 = vpop.f32.mrf.mxu0
  %v2647 = vadd.f32 0.0, %v2646
  %2648 = vmatmul.bf16.gmra.mxu0 %v2617
  %v2649 = vpop.f32.mrf.mxu0
  %v2650 = vadd.f32 0.0, %v2649
  %v2651 = vpop.f32.mrf.mxu0
  %v2652 = vadd.f32 0.0, %v2651
  %2653 = vmatmul.bf16.gmra.mxu0 %v2310
  %v2654 = vpop.f32.mrf.mxu0
  %v2655 = vadd.f32 0.0, %v2654
  %v2656 = vpop.f32.mrf.mxu0
  %v2657 = vadd.f32 0.0, %v2656
  %2658 = vmatmul.bf16.gmra.mxu0 %v2620
  %v2659 = vpop.f32.mrf.mxu0
  %v2660 = vadd.f32 0.0, %v2659
  %v2661 = vpop.f32.mrf.mxu0
  %v2662 = vadd.f32 0.0, %v2661
  %2663 = vmatmul.bf16.gmra.mxu0 %v2316
  %v2664 = vpop.f32.mrf.mxu0
  %v2665 = vadd.f32 0.0, %v2664
  %v2666 = vpop.f32.mrf.mxu0
  %v2667 = vadd.f32 0.0, %v2666
  %2668 = vmatmul.bf16.gmra.mxu0 %v2623
  %v2669 = vpop.f32.mrf.mxu0
  %v2670 = vadd.f32 0.0, %v2669
  %v2671 = vpop.f32.mrf.mxu0
  %v2672 = vadd.f32 0.0, %v2671
  %2673 = vdwg.mxu0
  %v2674 = vadd.f32 %v2561, %v2635
  %v2675 = vadd.f32 %v2562, %v2637
  %v2676 = vadd.f32 %v2563, %v2640
  %v2677 = vadd.f32 %v2564, %v2642
  %v2678 = vadd.f32 %v2565, %v2645
  %v2679 = vadd.f32 %v2566, %v2647
  %v2680 = vadd.f32 %v2567, %v2650
  %v2681 = vadd.f32 %v2568, %v2652
  %v2682 = vadd.f32 %v2569, %v2655
  %v2683 = vadd.f32 %v2570, %v2657
  %v2684 = vadd.f32 %v2571, %v2660
  %v2685 = vadd.f32 %v2572, %v2662
  %v2686 = vadd.f32 %v2573, %v2665
  %v2687 = vadd.f32 %v2574, %v2667
  %v2688 = vadd.f32 %v2575, %v2670
  %v2689 = vadd.f32 %v2576, %v2672
  %v2690 = vpack.c.bf16 %v2231, %v2230
  %v2691 = vpack.c.bf16 %v2233, %v2232
  %v2692 = vld [vmem:[%s2 + $0x80] sm:$0xf]
  %v2693 = vld [vmem:[%s2 + $0x84] sm:$0xf]
  %v2694 = vld [vmem:[%s2 + $0x88] sm:$0xf]
  %v2695 = vld [vmem:[%s2 + $0x8c] sm:$0xf]
  %v2696 = vld [vmem:[%s2 + $0x90] sm:$0xf]
  %v2697 = vld [vmem:[%s2 + $0x94] sm:$0xf]
  %v2698 = vld [vmem:[%s2 + $0x98] sm:$0xf]
  %v2699 = vld [vmem:[%s2 + $0x9c] sm:$0xf]
  %v2708 = vunpack.c.l.b16 %v2692
  %v2709 = vunpack.c.l.b16 %v2693
  %v2710 = vunpack.c.l.b16 %v2694
  %v2711 = vunpack.c.l.b16 %v2695
  %v2712 = vunpack.c.l.b16 %v2696
  %v2713 = vunpack.c.l.b16 %v2697
  %v2714 = vunpack.c.l.b16 %v2698
  %v2715 = vunpack.c.l.b16 %v2699
  %v2716 = vpack.c.b16 %v2709, %v2708
  %v2717 = vpack.c.b16 %v2711, %v2710
  %v2718 = vpack.c.b16 %v2713, %v2712
  %v2719 = vpack.c.b16 %v2715, %v2714
  %v2725 = vsel %vm2293, %v2690, 0
  %v2728 = vsel %vm2293, %v2691, 0
  %2730 = vmatpush.bf16.msra.mxu0 0
  %2731 = vmatpush.bf16.msra.mxu0 0
  %2732 = vmatpush.bf16.msra.mxu0 0
  %2733 = vmatpush.bf16.msra.mxu0 0
  %2734 = vmatpush.bf16.msra.mxu0 %v2719
  %2735 = vmatpush.bf16.msra.mxu0 %v2718
  %2736 = vmatpush.bf16.msra.mxu0 %v2717
  %2737 = vmatpush.bf16.msra.mxu0 %v2716
  %2738 = vmatmul.bf16.gmra.mxu0 %v2398
  %v2739 = vpop.f32.mrf.mxu0
  %v2740 = vadd.f32 0.0, %v2739
  %v2741 = vpop.f32.mrf.mxu0
  %v2742 = vadd.f32 0.0, %v2741
  %2743 = vmatmul.bf16.gmra.mxu0 %v2401
  %v2744 = vpop.f32.mrf.mxu0
  %v2745 = vadd.f32 0.0, %v2744
  %v2746 = vpop.f32.mrf.mxu0
  %v2747 = vadd.f32 0.0, %v2746
  %2748 = vmatmul.bf16.gmra.mxu0 %v2404
  %v2749 = vpop.f32.mrf.mxu0
  %v2750 = vadd.f32 0.0, %v2749
  %v2751 = vpop.f32.mrf.mxu0
  %v2752 = vadd.f32 0.0, %v2751
  %2753 = vmatmul.bf16.gmra.mxu0 %v2407
  %v2754 = vpop.f32.mrf.mxu0
  %v2755 = vadd.f32 0.0, %v2754
  %v2756 = vpop.f32.mrf.mxu0
  %v2757 = vadd.f32 0.0, %v2756
  %2758 = vmatmul.bf16.gmra.mxu0 %v2410
  %v2759 = vpop.f32.mrf.mxu0
  %v2760 = vadd.f32 0.0, %v2759
  %v2761 = vpop.f32.mrf.mxu0
  %v2762 = vadd.f32 0.0, %v2761
  %2763 = vmatmul.bf16.gmra.mxu0 %v2413
  %v2764 = vpop.f32.mrf.mxu0
  %v2765 = vadd.f32 0.0, %v2764
  %v2766 = vpop.f32.mrf.mxu0
  %v2767 = vadd.f32 0.0, %v2766
  %2768 = vmatmul.bf16.gmra.mxu0 %v2725
  %v2769 = vpop.f32.mrf.mxu0
  %v2770 = vadd.f32 0.0, %v2769
  %v2771 = vpop.f32.mrf.mxu0
  %v2772 = vadd.f32 0.0, %v2771
  %2773 = vmatmul.bf16.gmra.mxu0 %v2728
  %v2774 = vpop.f32.mrf.mxu0
  %v2775 = vadd.f32 0.0, %v2774
  %v2776 = vpop.f32.mrf.mxu0
  %v2777 = vadd.f32 0.0, %v2776
  %2778 = vdwg.mxu0
  %v2779 = vadd.f32 %v2674, %v2740
  %v2780 = vadd.f32 %v2675, %v2742
  %v2781 = vadd.f32 %v2676, %v2745
  %v2782 = vadd.f32 %v2677, %v2747
  %v2783 = vadd.f32 %v2678, %v2750
  %v2784 = vadd.f32 %v2679, %v2752
  %v2785 = vadd.f32 %v2680, %v2755
  %v2786 = vadd.f32 %v2681, %v2757
  %v2787 = vadd.f32 %v2682, %v2760
  %v2788 = vadd.f32 %v2683, %v2762
  %v2789 = vadd.f32 %v2684, %v2765
  %v2790 = vadd.f32 %v2685, %v2767
  %v2791 = vadd.f32 %v2686, %v2770
  %v2792 = vadd.f32 %v2687, %v2772
  %v2793 = vadd.f32 %v2688, %v2775
  %v2794 = vadd.f32 %v2689, %v2777
  %v2795 = vpack.c.bf16 %v2232, %v2231
  %v2796 = vpack.c.bf16 %v2234, %v2233
  %v2797 = vld [vmem:[%s2 + $0xa0] sm:$0xf]
  %v2798 = vld [vmem:[%s2 + $0xa4] sm:$0xf]
  %v2799 = vld [vmem:[%s2 + $0xa8] sm:$0xf]
  %v2800 = vld [vmem:[%s2 + $0xac] sm:$0xf]
  %v2801 = vld [vmem:[%s2 + $0xb0] sm:$0xf]
  %v2802 = vld [vmem:[%s2 + $0xb4] sm:$0xf]
  %v2803 = vld [vmem:[%s2 + $0xb8] sm:$0xf]
  %v2804 = vld [vmem:[%s2 + $0xbc] sm:$0xf]
  %v2813 = vunpack.c.l.b16 %v2797
  %v2814 = vunpack.c.l.b16 %v2798
  %v2815 = vunpack.c.l.b16 %v2799
  %v2816 = vunpack.c.l.b16 %v2800
  %v2817 = vunpack.c.l.b16 %v2801
  %v2818 = vunpack.c.l.b16 %v2802
  %v2819 = vunpack.c.l.b16 %v2803
  %v2820 = vunpack.c.l.b16 %v2804
  %v2821 = vpack.c.b16 %v2814, %v2813
  %v2822 = vpack.c.b16 %v2816, %v2815
  %v2823 = vpack.c.b16 %v2818, %v2817
  %v2824 = vpack.c.b16 %v2820, %v2819
  %v2830 = vsel %vm2293, %v2795, 0
  %v2833 = vsel %vm2293, %v2796, 0
  %2835 = vmatpush.bf16.msra.mxu0 0
  %2836 = vmatpush.bf16.msra.mxu0 0
  %2837 = vmatpush.bf16.msra.mxu0 0
  %2838 = vmatpush.bf16.msra.mxu0 0
  %2839 = vmatpush.bf16.msra.mxu0 %v2824
  %2840 = vmatpush.bf16.msra.mxu0 %v2823
  %2841 = vmatpush.bf16.msra.mxu0 %v2822
  %2842 = vmatpush.bf16.msra.mxu0 %v2821
  %2843 = vmatmul.bf16.gmra.mxu0 %v2301
  %v2844 = vpop.f32.mrf.mxu0
  %v2845 = vadd.f32 0.0, %v2844
  %v2846 = vpop.f32.mrf.mxu0
  %v2847 = vadd.f32 0.0, %v2846
  %2848 = vmatmul.bf16.gmra.mxu0 %v2304
  %v2849 = vpop.f32.mrf.mxu0
  %v2850 = vadd.f32 0.0, %v2849
  %v2851 = vpop.f32.mrf.mxu0
  %v2852 = vadd.f32 0.0, %v2851
  %2853 = vmatmul.bf16.gmra.mxu0 %v2307
  %v2854 = vpop.f32.mrf.mxu0
  %v2855 = vadd.f32 0.0, %v2854
  %v2856 = vpop.f32.mrf.mxu0
  %v2857 = vadd.f32 0.0, %v2856
  %2858 = vmatmul.bf16.gmra.mxu0 %v2310
  %v2859 = vpop.f32.mrf.mxu0
  %v2860 = vadd.f32 0.0, %v2859
  %v2861 = vpop.f32.mrf.mxu0
  %v2862 = vadd.f32 0.0, %v2861
  %2863 = vmatmul.bf16.gmra.mxu0 %v2313
  %v2864 = vpop.f32.mrf.mxu0
  %v2865 = vadd.f32 0.0, %v2864
  %v2866 = vpop.f32.mrf.mxu0
  %v2867 = vadd.f32 0.0, %v2866
  %2868 = vmatmul.bf16.gmra.mxu0 %v2316
  %v2869 = vpop.f32.mrf.mxu0
  %v2870 = vadd.f32 0.0, %v2869
  %v2871 = vpop.f32.mrf.mxu0
  %v2872 = vadd.f32 0.0, %v2871
  %2873 = vmatmul.bf16.gmra.mxu0 %v2830
  %v2874 = vpop.f32.mrf.mxu0
  %v2875 = vadd.f32 0.0, %v2874
  %v2876 = vpop.f32.mrf.mxu0
  %v2877 = vadd.f32 0.0, %v2876
  %2878 = vmatmul.bf16.gmra.mxu0 %v2833
  %v2879 = vpop.f32.mrf.mxu0
  %v2880 = vadd.f32 0.0, %v2879
  %v2881 = vpop.f32.mrf.mxu0
  %v2882 = vadd.f32 0.0, %v2881
  %2883 = vdwg.mxu0
  %v2884 = vadd.f32 %v2779, %v2845
  %v2885 = vadd.f32 %v2780, %v2847
  %v2886 = vadd.f32 %v2781, %v2850
  %v2887 = vadd.f32 %v2782, %v2852
  %v2888 = vadd.f32 %v2783, %v2855
  %v2889 = vadd.f32 %v2784, %v2857
  %v2890 = vadd.f32 %v2785, %v2860
  %v2891 = vadd.f32 %v2786, %v2862
  %v2892 = vadd.f32 %v2787, %v2865
  %v2893 = vadd.f32 %v2788, %v2867
  %v2894 = vadd.f32 %v2789, %v2870
  %v2895 = vadd.f32 %v2790, %v2872
  %v2896 = vadd.f32 %v2791, %v2875
  %v2897 = vadd.f32 %v2792, %v2877
  %v2898 = vadd.f32 %v2793, %v2880
  %v2899 = vadd.f32 %v2794, %v2882
  %v2900 = vpack.c.bf16 %v2235, %v2234
  %v2901 = vld [vmem:[%s2 + $0xc0] sm:$0xf]
  %v2902 = vld [vmem:[%s2 + $0xc4] sm:$0xf]
  %v2903 = vld [vmem:[%s2 + $0xc8] sm:$0xf]
  %v2904 = vld [vmem:[%s2 + $0xcc] sm:$0xf]
  %v2905 = vld [vmem:[%s2 + $0xd0] sm:$0xf]
  %v2906 = vld [vmem:[%s2 + $0xd4] sm:$0xf]
  %v2907 = vld [vmem:[%s2 + $0xd8] sm:$0xf]
  %v2908 = vld [vmem:[%s2 + $0xdc] sm:$0xf]
  %v2917 = vunpack.c.l.b16 %v2901
  %v2918 = vunpack.c.l.b16 %v2902
  %v2919 = vunpack.c.l.b16 %v2903
  %v2920 = vunpack.c.l.b16 %v2904
  %v2921 = vunpack.c.l.b16 %v2905
  %v2922 = vunpack.c.l.b16 %v2906
  %v2923 = vunpack.c.l.b16 %v2907
  %v2924 = vunpack.c.l.b16 %v2908
  %v2925 = vpack.c.b16 %v2918, %v2917
  %v2926 = vpack.c.b16 %v2920, %v2919
  %v2927 = vpack.c.b16 %v2922, %v2921
  %v2928 = vpack.c.b16 %v2924, %v2923
  %v2934 = vsel %vm2293, %v2900, 0
  %2936 = vmatpush.bf16.msra.mxu0 0
  %2937 = vmatpush.bf16.msra.mxu0 0
  %2938 = vmatpush.bf16.msra.mxu0 0
  %2939 = vmatpush.bf16.msra.mxu0 0
  %2940 = vmatpush.bf16.msra.mxu0 %v2928
  %2941 = vmatpush.bf16.msra.mxu0 %v2927
  %2942 = vmatpush.bf16.msra.mxu0 %v2926
  %2943 = vmatpush.bf16.msra.mxu0 %v2925
  %2944 = vmatmul.bf16.gmra.mxu0 %v2401
  %v2945 = vpop.f32.mrf.mxu0
  %v2946 = vadd.f32 0.0, %v2945
  %v2947 = vpop.f32.mrf.mxu0
  %v2948 = vadd.f32 0.0, %v2947
  %2949 = vmatmul.bf16.gmra.mxu0 %v2504
  %v2950 = vpop.f32.mrf.mxu0
  %v2951 = vadd.f32 0.0, %v2950
  %v2952 = vpop.f32.mrf.mxu0
  %v2953 = vadd.f32 0.0, %v2952
  %2954 = vmatmul.bf16.gmra.mxu0 %v2407
  %v2955 = vpop.f32.mrf.mxu0
  %v2956 = vadd.f32 0.0, %v2955
  %v2957 = vpop.f32.mrf.mxu0
  %v2958 = vadd.f32 0.0, %v2957
  %2959 = vmatmul.bf16.gmra.mxu0 %v2507
  %v2960 = vpop.f32.mrf.mxu0
  %v2961 = vadd.f32 0.0, %v2960
  %v2962 = vpop.f32.mrf.mxu0
  %v2963 = vadd.f32 0.0, %v2962
  %2964 = vmatmul.bf16.gmra.mxu0 %v2413
  %v2965 = vpop.f32.mrf.mxu0
  %v2966 = vadd.f32 0.0, %v2965
  %v2967 = vpop.f32.mrf.mxu0
  %v2968 = vadd.f32 0.0, %v2967
  %2969 = vmatmul.bf16.gmra.mxu0 %v2510
  %v2970 = vpop.f32.mrf.mxu0
  %v2971 = vadd.f32 0.0, %v2970
  %v2972 = vpop.f32.mrf.mxu0
  %v2973 = vadd.f32 0.0, %v2972
  %2974 = vmatmul.bf16.gmra.mxu0 %v2728
  %v2975 = vpop.f32.mrf.mxu0
  %v2976 = vadd.f32 0.0, %v2975
  %v2977 = vpop.f32.mrf.mxu0
  %v2978 = vadd.f32 0.0, %v2977
  %2979 = vmatmul.bf16.gmra.mxu0 %v2934
  %v2980 = vpop.f32.mrf.mxu0
  %v2981 = vadd.f32 0.0, %v2980
  %v2982 = vpop.f32.mrf.mxu0
  %v2983 = vadd.f32 0.0, %v2982
  %2984 = vdwg.mxu0
  %v2985 = vadd.f32 %v2884, %v2946
  %v2986 = vadd.f32 %v2885, %v2948
  %v2987 = vadd.f32 %v2886, %v2951
  %v2988 = vadd.f32 %v2887, %v2953
  %v2989 = vadd.f32 %v2888, %v2956
  %v2990 = vadd.f32 %v2889, %v2958
  %v2991 = vadd.f32 %v2890, %v2961
  %v2992 = vadd.f32 %v2891, %v2963
  %v2993 = vadd.f32 %v2892, %v2966
  %v2994 = vadd.f32 %v2893, %v2968
  %v2995 = vadd.f32 %v2894, %v2971
  %v2996 = vadd.f32 %v2895, %v2973
  %v2997 = vadd.f32 %v2896, %v2976
  %v2998 = vadd.f32 %v2897, %v2978
  %v2999 = vadd.f32 %v2898, %v2981
  %v3000 = vadd.f32 %v2899, %v2983
  %v3001 = vpack.c.bf16 %v2236, %v2235
  %v3002 = vld [vmem:[%s2 + $0xe0] sm:$0xf]
  %v3003 = vld [vmem:[%s2 + $0xe4] sm:$0xf]
  %v3004 = vld [vmem:[%s2 + $0xe8] sm:$0xf]
  %v3005 = vld [vmem:[%s2 + $0xec] sm:$0xf]
  %v3006 = vld [vmem:[%s2 + $0xf0] sm:$0xf]
  %v3007 = vld [vmem:[%s2 + $0xf4] sm:$0xf]
  %v3008 = vld [vmem:[%s2 + $0xf8] sm:$0xf]
  %v3009 = vld [vmem:[%s2 + $0xfc] sm:$0xf]
  %v3018 = vunpack.c.l.b16 %v3002
  %v3019 = vunpack.c.l.b16 %v3003
  %v3020 = vunpack.c.l.b16 %v3004
  %v3021 = vunpack.c.l.b16 %v3005
  %v3022 = vunpack.c.l.b16 %v3006
  %v3023 = vunpack.c.l.b16 %v3007
  %v3024 = vunpack.c.l.b16 %v3008
  %v3025 = vunpack.c.l.b16 %v3009
  %v3026 = vpack.c.b16 %v3019, %v3018
  %v3027 = vpack.c.b16 %v3021, %v3020
  %v3028 = vpack.c.b16 %v3023, %v3022
  %v3029 = vpack.c.b16 %v3025, %v3024
  %v3035 = vsel %vm2293, %v3001, 0
  %3037 = vmatpush.bf16.msra.mxu0 0
  %3038 = vmatpush.bf16.msra.mxu0 0
  %3039 = vmatpush.bf16.msra.mxu0 0
  %3040 = vmatpush.bf16.msra.mxu0 0
  %3041 = vmatpush.bf16.msra.mxu0 %v3029
  %3042 = vmatpush.bf16.msra.mxu0 %v3028
  %3043 = vmatpush.bf16.msra.mxu0 %v3027
  %3044 = vmatpush.bf16.msra.mxu0 %v3026
  %3045 = vmatmul.bf16.gmra.mxu0 %v2304
  %v3046 = vpop.f32.mrf.mxu0
  %v3047 = vadd.f32 0.0, %v3046
  %v3048 = vpop.f32.mrf.mxu0
  %v3049 = vadd.f32 0.0, %v3048
  %3050 = vmatmul.bf16.gmra.mxu0 %v2617
  %v3051 = vpop.f32.mrf.mxu0
  %v3052 = vadd.f32 0.0, %v3051
  %v3053 = vpop.f32.mrf.mxu0
  %v3054 = vadd.f32 0.0, %v3053
  %3055 = vmatmul.bf16.gmra.mxu0 %v2310
  %v3056 = vpop.f32.mrf.mxu0
  %v3057 = vadd.f32 0.0, %v3056
  %v3058 = vpop.f32.mrf.mxu0
  %v3059 = vadd.f32 0.0, %v3058
  %3060 = vmatmul.bf16.gmra.mxu0 %v2620
  %v3061 = vpop.f32.mrf.mxu0
  %v3062 = vadd.f32 0.0, %v3061
  %v3063 = vpop.f32.mrf.mxu0
  %v3064 = vadd.f32 0.0, %v3063
  %3065 = vmatmul.bf16.gmra.mxu0 %v2316
  %v3066 = vpop.f32.mrf.mxu0
  %v3067 = vadd.f32 0.0, %v3066
  %v3068 = vpop.f32.mrf.mxu0
  %v3069 = vadd.f32 0.0, %v3068
  %3070 = vmatmul.bf16.gmra.mxu0 %v2623
  %v3071 = vpop.f32.mrf.mxu0
  %v3072 = vadd.f32 0.0, %v3071
  %v3073 = vpop.f32.mrf.mxu0
  %v3074 = vadd.f32 0.0, %v3073
  %3075 = vmatmul.bf16.gmra.mxu0 %v2833
  %v3076 = vpop.f32.mrf.mxu0
  %v3077 = vadd.f32 0.0, %v3076
  %v3078 = vpop.f32.mrf.mxu0
  %v3079 = vadd.f32 0.0, %v3078
  %3080 = vmatmul.bf16.gmra.mxu0 %v3035
  %v3081 = vpop.f32.mrf.mxu0
  %v3082 = vadd.f32 0.0, %v3081
  %v3083 = vpop.f32.mrf.mxu0
  %v3084 = vadd.f32 0.0, %v3083
  %3085 = vdwg.mxu0
  %v3086 = vadd.f32 %v2985, %v3047
  %v3087 = vadd.f32 %v2986, %v3049
  %v3088 = vadd.f32 %v2987, %v3052
  %v3089 = vadd.f32 %v2988, %v3054
  %v3090 = vadd.f32 %v2989, %v3057
  %v3091 = vadd.f32 %v2990, %v3059
  %v3092 = vadd.f32 %v2991, %v3062
  %v3093 = vadd.f32 %v2992, %v3064
  %v3094 = vadd.f32 %v2993, %v3067
  %v3095 = vadd.f32 %v2994, %v3069
  %v3096 = vadd.f32 %v2995, %v3072
  %v3097 = vadd.f32 %v2996, %v3074
  %v3098 = vadd.f32 %v2997, %v3077
  %v3099 = vadd.f32 %v2998, %v3079
  %v3100 = vadd.f32 %v2999, %v3082
  %v3101 = vadd.f32 %v3000, %v3084
  %v3102 = vperm.slane %v27, 1
  %v3103 = vadd.f32 %v3086, %v3102
  %v3104 = vadd.f32 %v3087, %v3102
  %v3105 = vadd.f32 %v3088, %v3102
  %v3106 = vadd.f32 %v3089, %v3102
  %v3107 = vadd.f32 %v3090, %v3102
  %v3108 = vadd.f32 %v3091, %v3102
  %v3109 = vadd.f32 %v3092, %v3102
  %v3110 = vadd.f32 %v3093, %v3102
  %v3111 = vadd.f32 %v3094, %v3102
  %v3112 = vadd.f32 %v3095, %v3102
  %v3113 = vadd.f32 %v3096, %v3102
  %v3114 = vadd.f32 %v3097, %v3102
  %v3115 = vadd.f32 %v3098, %v3102
  %v3116 = vadd.f32 %v3099, %v3102
  %v3117 = vadd.f32 %v3100, %v3102
  %v3118 = vadd.f32 %v3101, %v3102
  %v3119 = vmax.f32 %v3103, 0.0
  %v3120 = vmax.f32 %v3104, 0.0
  %v3121 = vmax.f32 %v3105, 0.0
  %v3122 = vmax.f32 %v3106, 0.0
  %v3123 = vmax.f32 %v3107, 0.0
  %v3124 = vmax.f32 %v3108, 0.0
  %v3125 = vmax.f32 %v3109, 0.0
  %v3126 = vmax.f32 %v3110, 0.0
  %v3127 = vmax.f32 %v3111, 0.0
  %v3128 = vmax.f32 %v3112, 0.0
  %v3129 = vmax.f32 %v3113, 0.0
  %v3130 = vmax.f32 %v3114, 0.0
  %v3131 = vmax.f32 %v3115, 0.0
  %v3132 = vmax.f32 %v3116, 0.0
  %v3133 = vmax.f32 %v3117, 0.0
  %v3134 = vmax.f32 %v3118, 0.0
  %3136 = vrot.lane.b32.xlu0 %v3120, 64
  %v3137 = vpop.permute.xlu0 %3136
  %3140 = vrot.lane.b32.xlu0 %v3122, 64
  %v3141 = vpop.permute.xlu0 %3140
  %3144 = vrot.lane.b32.xlu0 %v3124, 64
  %v3145 = vpop.permute.xlu0 %3144
  %3148 = vrot.lane.b32.xlu0 %v3126, 64
  %v3149 = vpop.permute.xlu0 %3148
  %3152 = vrot.lane.b32.xlu0 %v3128, 64
  %v3153 = vpop.permute.xlu0 %3152
  %3156 = vrot.lane.b32.xlu0 %v3130, 64
  %v3157 = vpop.permute.xlu0 %3156
  %3160 = vrot.lane.b32.xlu0 %v3132, 64
  %v3161 = vpop.permute.xlu0 %3160
  %3164 = vrot.lane.b32.xlu0 %v3134, 64
  %v3165 = vpop.permute.xlu0 %3164
  %v3167 = vsel %vm2293, %v3119, %v3137
  %v3168 = vsel %vm2293, %v3121, %v3141
  %v3169 = vsel %vm2293, %v3123, %v3145
  %v3170 = vsel %vm2293, %v3125, %v3149
  %v3171 = vsel %vm2293, %v3127, %v3153
  %v3172 = vsel %vm2293, %v3129, %v3157
  %v3173 = vsel %vm2293, %v3131, %v3161
  %v3174 = vsel %vm2293, %v3133, %v3165
  %v3175 = vpack.c.bf16 %v3167, %v3167
  %v3176 = vpack.c.bf16 %v3168, %v3168
  %v3177 = vpack.c.bf16 %v3169, %v3169
  %v3178 = vpack.c.bf16 %v3170, %v3170
  %v3179 = vpack.c.bf16 %v3171, %v3171
  %v3180 = vpack.c.bf16 %v3172, %v3172
  %v3181 = vpack.c.bf16 %v3173, %v3173
  %v3182 = vpack.c.bf16 %v3174, %v3174
  %v3183 = vld [vmem:[%s3] sm:$0xf]
  %v3184 = vld [vmem:[%s3 + $0x4] sm:$0xf]
  %v3185 = vld [vmem:[%s3 + $0x8] sm:$0xf]
  %v3186 = vld [vmem:[%s3 + $0xc] sm:$0xf]
  %v3187 = vld [vmem:[%s3 + $0x10] sm:$0xf]
  %v3188 = vld [vmem:[%s3 + $0x14] sm:$0xf]
  %v3189 = vld [vmem:[%s3 + $0x18] sm:$0xf]
  %v3190 = vld [vmem:[%s3 + $0x1c] sm:$0xf]
  %v3191 = vld [vmem:[%s3 + $0x20] sm:$0xf]
  %v3192 = vld [vmem:[%s3 + $0x24] sm:$0xf]
  %v3193 = vld [vmem:[%s3 + $0x28] sm:$0xf]
  %v3194 = vld [vmem:[%s3 + $0x2c] sm:$0xf]
  %v3195 = vld [vmem:[%s3 + $0x30] sm:$0xf]
  %v3196 = vld [vmem:[%s3 + $0x34] sm:$0xf]
  %v3197 = vld [vmem:[%s3 + $0x38] sm:$0xf]
  %v3198 = vld [vmem:[%s3 + $0x3c] sm:$0xf]
  %v3199 = vld [vmem:[%s3 + $0x40] sm:$0xf]
  %v3200 = vld [vmem:[%s3 + $0x44] sm:$0xf]
  %v3201 = vld [vmem:[%s3 + $0x48] sm:$0xf]
  %v3202 = vld [vmem:[%s3 + $0x4c] sm:$0xf]
  %v3203 = vld [vmem:[%s3 + $0x50] sm:$0xf]
  %v3204 = vld [vmem:[%s3 + $0x54] sm:$0xf]
  %v3205 = vld [vmem:[%s3 + $0x58] sm:$0xf]
  %v3206 = vld [vmem:[%s3 + $0x5c] sm:$0xf]
  %v3207 = vld [vmem:[%s3 + $0x60] sm:$0xf]
  %v3208 = vld [vmem:[%s3 + $0x64] sm:$0xf]
  %v3209 = vld [vmem:[%s3 + $0x68] sm:$0xf]
  %v3210 = vld [vmem:[%s3 + $0x6c] sm:$0xf]
  %v3211 = vld [vmem:[%s3 + $0x70] sm:$0xf]
  %v3212 = vld [vmem:[%s3 + $0x74] sm:$0xf]
  %v3213 = vld [vmem:[%s3 + $0x78] sm:$0xf]
  %v3214 = vld [vmem:[%s3 + $0x7c] sm:$0xf]
  %v3215 = vld [vmem:[%s3 + $0x80] sm:$0xf]
  %v3216 = vld [vmem:[%s3 + $0x84] sm:$0xf]
  %v3217 = vld [vmem:[%s3 + $0x88] sm:$0xf]
  %v3218 = vld [vmem:[%s3 + $0x8c] sm:$0xf]
  %v3219 = vld [vmem:[%s3 + $0x90] sm:$0xf]
  %v3220 = vld [vmem:[%s3 + $0x94] sm:$0xf]
  %v3221 = vld [vmem:[%s3 + $0x98] sm:$0xf]
  %v3222 = vld [vmem:[%s3 + $0x9c] sm:$0xf]
  %v3223 = vld [vmem:[%s3 + $0xa0] sm:$0xf]
  %v3224 = vld [vmem:[%s3 + $0xa4] sm:$0xf]
  %v3225 = vld [vmem:[%s3 + $0xa8] sm:$0xf]
  %v3226 = vld [vmem:[%s3 + $0xac] sm:$0xf]
  %v3227 = vld [vmem:[%s3 + $0xb0] sm:$0xf]
  %v3228 = vld [vmem:[%s3 + $0xb4] sm:$0xf]
  %v3229 = vld [vmem:[%s3 + $0xb8] sm:$0xf]
  %v3230 = vld [vmem:[%s3 + $0xbc] sm:$0xf]
  %v3231 = vld [vmem:[%s3 + $0xc0] sm:$0xf]
  %v3232 = vld [vmem:[%s3 + $0xc4] sm:$0xf]
  %v3233 = vld [vmem:[%s3 + $0xc8] sm:$0xf]
  %v3234 = vld [vmem:[%s3 + $0xcc] sm:$0xf]
  %v3235 = vld [vmem:[%s3 + $0xd0] sm:$0xf]
  %v3236 = vld [vmem:[%s3 + $0xd4] sm:$0xf]
  %v3237 = vld [vmem:[%s3 + $0xd8] sm:$0xf]
  %v3238 = vld [vmem:[%s3 + $0xdc] sm:$0xf]
  %v3239 = vld [vmem:[%s3 + $0xe0] sm:$0xf]
  %v3240 = vld [vmem:[%s3 + $0xe4] sm:$0xf]
  %v3241 = vld [vmem:[%s3 + $0xe8] sm:$0xf]
  %v3242 = vld [vmem:[%s3 + $0xec] sm:$0xf]
  %v3243 = vld [vmem:[%s3 + $0xf0] sm:$0xf]
  %v3244 = vld [vmem:[%s3 + $0xf4] sm:$0xf]
  %v3245 = vld [vmem:[%s3 + $0xf8] sm:$0xf]
  %v3246 = vld [vmem:[%s3 + $0xfc] sm:$0xf]
  %v3247 = vld [vmem:[%s3 + $0x100] sm:$0xf]
  %v3248 = vld [vmem:[%s3 + $0x104] sm:$0xf]
  %v3249 = vld [vmem:[%s3 + $0x108] sm:$0xf]
  %v3250 = vld [vmem:[%s3 + $0x10c] sm:$0xf]
  %v3251 = vld [vmem:[%s3 + $0x110] sm:$0xf]
  %v3252 = vld [vmem:[%s3 + $0x114] sm:$0xf]
  %v3253 = vld [vmem:[%s3 + $0x118] sm:$0xf]
  %v3254 = vld [vmem:[%s3 + $0x11c] sm:$0xf]
  %v3255 = vld [vmem:[%s3 + $0x120] sm:$0xf]
  %v3256 = vld [vmem:[%s3 + $0x124] sm:$0xf]
  %v3257 = vld [vmem:[%s3 + $0x128] sm:$0xf]
  %v3258 = vld [vmem:[%s3 + $0x12c] sm:$0xf]
  %v3259 = vld [vmem:[%s3 + $0x130] sm:$0xf]
  %v3260 = vld [vmem:[%s3 + $0x134] sm:$0xf]
  %v3261 = vld [vmem:[%s3 + $0x138] sm:$0xf]
  %v3262 = vld [vmem:[%s3 + $0x13c] sm:$0xf]
  %v3263 = vld [vmem:[%s3 + $0x140] sm:$0xf]
  %v3264 = vld [vmem:[%s3 + $0x144] sm:$0xf]
  %v3265 = vld [vmem:[%s3 + $0x148] sm:$0xf]
  %v3266 = vld [vmem:[%s3 + $0x14c] sm:$0xf]
  %v3267 = vld [vmem:[%s3 + $0x150] sm:$0xf]
  %v3268 = vld [vmem:[%s3 + $0x154] sm:$0xf]
  %v3269 = vld [vmem:[%s3 + $0x158] sm:$0xf]
  %v3270 = vld [vmem:[%s3 + $0x15c] sm:$0xf]
  %v3271 = vld [vmem:[%s3 + $0x160] sm:$0xf]
  %v3272 = vld [vmem:[%s3 + $0x164] sm:$0xf]
  %v3273 = vld [vmem:[%s3 + $0x168] sm:$0xf]
  %v3274 = vld [vmem:[%s3 + $0x16c] sm:$0xf]
  %v3275 = vld [vmem:[%s3 + $0x170] sm:$0xf]
  %v3276 = vld [vmem:[%s3 + $0x174] sm:$0xf]
  %v3277 = vld [vmem:[%s3 + $0x178] sm:$0xf]
  %v3278 = vld [vmem:[%s3 + $0x17c] sm:$0xf]
  %v3279 = vld [vmem:[%s3 + $0x180] sm:$0xf]
  %v3280 = vld [vmem:[%s3 + $0x184] sm:$0xf]
  %v3281 = vld [vmem:[%s3 + $0x188] sm:$0xf]
  %v3282 = vld [vmem:[%s3 + $0x18c] sm:$0xf]
  %v3283 = vld [vmem:[%s3 + $0x190] sm:$0xf]
  %v3284 = vld [vmem:[%s3 + $0x194] sm:$0xf]
  %v3285 = vld [vmem:[%s3 + $0x198] sm:$0xf]
  %v3286 = vld [vmem:[%s3 + $0x19c] sm:$0xf]
  %v3287 = vld [vmem:[%s3 + $0x1a0] sm:$0xf]
  %v3288 = vld [vmem:[%s3 + $0x1a4] sm:$0xf]
  %v3289 = vld [vmem:[%s3 + $0x1a8] sm:$0xf]
  %v3290 = vld [vmem:[%s3 + $0x1ac] sm:$0xf]
  %v3291 = vld [vmem:[%s3 + $0x1b0] sm:$0xf]
  %v3292 = vld [vmem:[%s3 + $0x1b4] sm:$0xf]
  %v3293 = vld [vmem:[%s3 + $0x1b8] sm:$0xf]
  %v3294 = vld [vmem:[%s3 + $0x1bc] sm:$0xf]
  %v3295 = vld [vmem:[%s3 + $0x1c0] sm:$0xf]
  %v3296 = vld [vmem:[%s3 + $0x1c4] sm:$0xf]
  %v3297 = vld [vmem:[%s3 + $0x1c8] sm:$0xf]
  %v3298 = vld [vmem:[%s3 + $0x1cc] sm:$0xf]
  %v3299 = vld [vmem:[%s3 + $0x1d0] sm:$0xf]
  %v3300 = vld [vmem:[%s3 + $0x1d4] sm:$0xf]
  %v3301 = vld [vmem:[%s3 + $0x1d8] sm:$0xf]
  %v3302 = vld [vmem:[%s3 + $0x1dc] sm:$0xf]
  %v3303 = vld [vmem:[%s3 + $0x1e0] sm:$0xf]
  %v3304 = vld [vmem:[%s3 + $0x1e4] sm:$0xf]
  %v3305 = vld [vmem:[%s3 + $0x1e8] sm:$0xf]
  %v3306 = vld [vmem:[%s3 + $0x1ec] sm:$0xf]
  %v3307 = vld [vmem:[%s3 + $0x1f0] sm:$0xf]
  %v3308 = vld [vmem:[%s3 + $0x1f4] sm:$0xf]
  %v3309 = vld [vmem:[%s3 + $0x1f8] sm:$0xf]
  %v3310 = vld [vmem:[%s3 + $0x1fc] sm:$0xf]
  %v3311 = vperm.slane %v27, 2
  %v3440 = vunpack.c.l.b16 %v3183
  %v3441 = vunpack.c.l.b16 %v3184
  %v3442 = vunpack.c.l.b16 %v3185
  %v3443 = vunpack.c.l.b16 %v3186
  %v3444 = vunpack.c.l.b16 %v3187
  %v3445 = vunpack.c.l.b16 %v3188
  %v3446 = vunpack.c.l.b16 %v3189
  %v3447 = vunpack.c.l.b16 %v3190
  %v3448 = vunpack.c.l.b16 %v3191
  %v3449 = vunpack.c.l.b16 %v3192
  %v3450 = vunpack.c.l.b16 %v3193
  %v3451 = vunpack.c.l.b16 %v3194
  %v3452 = vunpack.c.l.b16 %v3195
  %v3453 = vunpack.c.l.b16 %v3196
  %v3454 = vunpack.c.l.b16 %v3197
  %v3455 = vunpack.c.l.b16 %v3198
  %v3456 = vunpack.c.l.b16 %v3199
  %v3457 = vunpack.c.l.b16 %v3200
  %v3458 = vunpack.c.l.b16 %v3201
  %v3459 = vunpack.c.l.b16 %v3202
  %v3460 = vunpack.c.l.b16 %v3203
  %v3461 = vunpack.c.l.b16 %v3204
  %v3462 = vunpack.c.l.b16 %v3205
  %v3463 = vunpack.c.l.b16 %v3206
  %v3464 = vunpack.c.l.b16 %v3207
  %v3465 = vunpack.c.l.b16 %v3208
  %v3466 = vunpack.c.l.b16 %v3209
  %v3467 = vunpack.c.l.b16 %v3210
  %v3468 = vunpack.c.l.b16 %v3211
  %v3469 = vunpack.c.l.b16 %v3212
  %v3470 = vunpack.c.l.b16 %v3213
  %v3471 = vunpack.c.l.b16 %v3214
  %v3472 = vunpack.c.l.b16 %v3215
  %v3473 = vunpack.c.l.b16 %v3216
  %v3474 = vunpack.c.l.b16 %v3217
  %v3475 = vunpack.c.l.b16 %v3218
  %v3476 = vunpack.c.l.b16 %v3219
  %v3477 = vunpack.c.l.b16 %v3220
  %v3478 = vunpack.c.l.b16 %v3221
  %v3479 = vunpack.c.l.b16 %v3222
  %v3480 = vunpack.c.l.b16 %v3223
  %v3481 = vunpack.c.l.b16 %v3224
  %v3482 = vunpack.c.l.b16 %v3225
  %v3483 = vunpack.c.l.b16 %v3226
  %v3484 = vunpack.c.l.b16 %v3227
  %v3485 = vunpack.c.l.b16 %v3228
  %v3486 = vunpack.c.l.b16 %v3229
  %v3487 = vunpack.c.l.b16 %v3230
  %v3488 = vunpack.c.l.b16 %v3231
  %v3489 = vunpack.c.l.b16 %v3232
  %v3490 = vunpack.c.l.b16 %v3233
  %v3491 = vunpack.c.l.b16 %v3234
  %v3492 = vunpack.c.l.b16 %v3235
  %v3493 = vunpack.c.l.b16 %v3236
  %v3494 = vunpack.c.l.b16 %v3237
  %v3495 = vunpack.c.l.b16 %v3238
  %v3496 = vunpack.c.l.b16 %v3239
  %v3497 = vunpack.c.l.b16 %v3240
  %v3498 = vunpack.c.l.b16 %v3241
  %v3499 = vunpack.c.l.b16 %v3242
  %v3500 = vunpack.c.l.b16 %v3243
  %v3501 = vunpack.c.l.b16 %v3244
  %v3502 = vunpack.c.l.b16 %v3245
  %v3503 = vunpack.c.l.b16 %v3246
  %v3504 = vunpack.c.l.b16 %v3247
  %v3505 = vunpack.c.l.b16 %v3248
  %v3506 = vunpack.c.l.b16 %v3249
  %v3507 = vunpack.c.l.b16 %v3250
  %v3508 = vunpack.c.l.b16 %v3251
  %v3509 = vunpack.c.l.b16 %v3252
  %v3510 = vunpack.c.l.b16 %v3253
  %v3511 = vunpack.c.l.b16 %v3254
  %v3512 = vunpack.c.l.b16 %v3255
  %v3513 = vunpack.c.l.b16 %v3256
  %v3514 = vunpack.c.l.b16 %v3257
  %v3515 = vunpack.c.l.b16 %v3258
  %v3516 = vunpack.c.l.b16 %v3259
  %v3517 = vunpack.c.l.b16 %v3260
  %v3518 = vunpack.c.l.b16 %v3261
  %v3519 = vunpack.c.l.b16 %v3262
  %v3520 = vunpack.c.l.b16 %v3263
  %v3521 = vunpack.c.l.b16 %v3264
  %v3522 = vunpack.c.l.b16 %v3265
  %v3523 = vunpack.c.l.b16 %v3266
  %v3524 = vunpack.c.l.b16 %v3267
  %v3525 = vunpack.c.l.b16 %v3268
  %v3526 = vunpack.c.l.b16 %v3269
  %v3527 = vunpack.c.l.b16 %v3270
  %v3528 = vunpack.c.l.b16 %v3271
  %v3529 = vunpack.c.l.b16 %v3272
  %v3530 = vunpack.c.l.b16 %v3273
  %v3531 = vunpack.c.l.b16 %v3274
  %v3532 = vunpack.c.l.b16 %v3275
  %v3533 = vunpack.c.l.b16 %v3276
  %v3534 = vunpack.c.l.b16 %v3277
  %v3535 = vunpack.c.l.b16 %v3278
  %v3536 = vunpack.c.l.b16 %v3279
  %v3537 = vunpack.c.l.b16 %v3280
  %v3538 = vunpack.c.l.b16 %v3281
  %v3539 = vunpack.c.l.b16 %v3282
  %v3540 = vunpack.c.l.b16 %v3283
  %v3541 = vunpack.c.l.b16 %v3284
  %v3542 = vunpack.c.l.b16 %v3285
  %v3543 = vunpack.c.l.b16 %v3286
  %v3544 = vunpack.c.l.b16 %v3287
  %v3545 = vunpack.c.l.b16 %v3288
  %v3546 = vunpack.c.l.b16 %v3289
  %v3547 = vunpack.c.l.b16 %v3290
  %v3548 = vunpack.c.l.b16 %v3291
  %v3549 = vunpack.c.l.b16 %v3292
  %v3550 = vunpack.c.l.b16 %v3293
  %v3551 = vunpack.c.l.b16 %v3294
  %v3552 = vunpack.c.l.b16 %v3295
  %v3553 = vunpack.c.l.b16 %v3296
  %v3554 = vunpack.c.l.b16 %v3297
  %v3555 = vunpack.c.l.b16 %v3298
  %v3556 = vunpack.c.l.b16 %v3299
  %v3557 = vunpack.c.l.b16 %v3300
  %v3558 = vunpack.c.l.b16 %v3301
  %v3559 = vunpack.c.l.b16 %v3302
  %v3560 = vunpack.c.l.b16 %v3303
  %v3561 = vunpack.c.l.b16 %v3304
  %v3562 = vunpack.c.l.b16 %v3305
  %v3563 = vunpack.c.l.b16 %v3306
  %v3564 = vunpack.c.l.b16 %v3307
  %v3565 = vunpack.c.l.b16 %v3308
  %v3566 = vunpack.c.l.b16 %v3309
  %v3567 = vunpack.c.l.b16 %v3310
  %v3568 = vpack.c.b16 %v3441, %v3440
  %v3569 = vpack.c.b16 %v3443, %v3442
  %v3570 = vpack.c.b16 %v3445, %v3444
  %v3571 = vpack.c.b16 %v3447, %v3446
  %v3572 = vpack.c.b16 %v3449, %v3448
  %v3573 = vpack.c.b16 %v3451, %v3450
  %v3574 = vpack.c.b16 %v3453, %v3452
  %v3575 = vpack.c.b16 %v3455, %v3454
  %v3576 = vpack.c.b16 %v3457, %v3456
  %v3577 = vpack.c.b16 %v3459, %v3458
  %v3578 = vpack.c.b16 %v3461, %v3460
  %v3579 = vpack.c.b16 %v3463, %v3462
  %v3580 = vpack.c.b16 %v3465, %v3464
  %v3581 = vpack.c.b16 %v3467, %v3466
  %v3582 = vpack.c.b16 %v3469, %v3468
  %v3583 = vpack.c.b16 %v3471, %v3470
  %v3584 = vpack.c.b16 %v3473, %v3472
  %v3585 = vpack.c.b16 %v3475, %v3474
  %v3586 = vpack.c.b16 %v3477, %v3476
  %v3587 = vpack.c.b16 %v3479, %v3478
  %v3588 = vpack.c.b16 %v3481, %v3480
  %v3589 = vpack.c.b16 %v3483, %v3482
  %v3590 = vpack.c.b16 %v3485, %v3484
  %v3591 = vpack.c.b16 %v3487, %v3486
  %v3592 = vpack.c.b16 %v3489, %v3488
  %v3593 = vpack.c.b16 %v3491, %v3490
  %v3594 = vpack.c.b16 %v3493, %v3492
  %v3595 = vpack.c.b16 %v3495, %v3494
  %v3596 = vpack.c.b16 %v3497, %v3496
  %v3597 = vpack.c.b16 %v3499, %v3498
  %v3598 = vpack.c.b16 %v3501, %v3500
  %v3599 = vpack.c.b16 %v3503, %v3502
  %v3600 = vpack.c.b16 %v3505, %v3504
  %v3601 = vpack.c.b16 %v3507, %v3506
  %v3602 = vpack.c.b16 %v3509, %v3508
  %v3603 = vpack.c.b16 %v3511, %v3510
  %v3604 = vpack.c.b16 %v3513, %v3512
  %v3605 = vpack.c.b16 %v3515, %v3514
  %v3606 = vpack.c.b16 %v3517, %v3516
  %v3607 = vpack.c.b16 %v3519, %v3518
  %v3608 = vpack.c.b16 %v3521, %v3520
  %v3609 = vpack.c.b16 %v3523, %v3522
  %v3610 = vpack.c.b16 %v3525, %v3524
  %v3611 = vpack.c.b16 %v3527, %v3526
  %v3612 = vpack.c.b16 %v3529, %v3528
  %v3613 = vpack.c.b16 %v3531, %v3530
  %v3614 = vpack.c.b16 %v3533, %v3532
  %v3615 = vpack.c.b16 %v3535, %v3534
  %v3616 = vpack.c.b16 %v3537, %v3536
  %v3617 = vpack.c.b16 %v3539, %v3538
  %v3618 = vpack.c.b16 %v3541, %v3540
  %v3619 = vpack.c.b16 %v3543, %v3542
  %v3620 = vpack.c.b16 %v3545, %v3544
  %v3621 = vpack.c.b16 %v3547, %v3546
  %v3622 = vpack.c.b16 %v3549, %v3548
  %v3623 = vpack.c.b16 %v3551, %v3550
  %v3624 = vpack.c.b16 %v3553, %v3552
  %v3625 = vpack.c.b16 %v3555, %v3554
  %v3626 = vpack.c.b16 %v3557, %v3556
  %v3627 = vpack.c.b16 %v3559, %v3558
  %v3628 = vpack.c.b16 %v3561, %v3560
  %v3629 = vpack.c.b16 %v3563, %v3562
  %v3630 = vpack.c.b16 %v3565, %v3564
  %v3631 = vpack.c.b16 %v3567, %v3566
  %3696 = vmatpush.bf16.msra.mxu0 %v3575
  %3697 = vmatpush.bf16.msra.mxu0 %v3574
  %3698 = vmatpush.bf16.msra.mxu0 %v3573
  %3699 = vmatpush.bf16.msra.mxu0 %v3572
  %3700 = vmatpush.bf16.msra.mxu0 %v3571
  %3701 = vmatpush.bf16.msra.mxu0 %v3570
  %3702 = vmatpush.bf16.msra.mxu0 %v3569
  %3703 = vmatpush.bf16.msra.mxu0 %v3568
  %3704 = vmatmul.bf16.gmra.mxu0 %v3175
  %v3705 = vpop.f32.mrf.mxu0
  %v3706 = vadd.f32 %v3311, %v3705
  %v3707 = vpop.f32.mrf.mxu0
  %3708 = vdwg.mxu0
  %3709 = vmatpush.bf16.msra.mxu0 %v3583
  %3710 = vmatpush.bf16.msra.mxu0 %v3582
  %3711 = vmatpush.bf16.msra.mxu0 %v3581
  %3712 = vmatpush.bf16.msra.mxu0 %v3580
  %3713 = vmatpush.bf16.msra.mxu0 %v3579
  %3714 = vmatpush.bf16.msra.mxu0 %v3578
  %3715 = vmatpush.bf16.msra.mxu0 %v3577
  %3716 = vmatpush.bf16.msra.mxu0 %v3576
  %3717 = vmatmul.bf16.gmra.mxu0 %v3176
  %v3718 = vpop.f32.mrf.mxu0
  %v3719 = vadd.f32 %v3706, %v3718
  %v3720 = vpop.f32.mrf.mxu0
  %3721 = vdwg.mxu0
  %3722 = vmatpush.bf16.msra.mxu0 %v3591
  %3723 = vmatpush.bf16.msra.mxu0 %v3590
  %3724 = vmatpush.bf16.msra.mxu0 %v3589
  %3725 = vmatpush.bf16.msra.mxu0 %v3588
  %3726 = vmatpush.bf16.msra.mxu0 %v3587
  %3727 = vmatpush.bf16.msra.mxu0 %v3586
  %3728 = vmatpush.bf16.msra.mxu0 %v3585
  %3729 = vmatpush.bf16.msra.mxu0 %v3584
  %3730 = vmatmul.bf16.gmra.mxu0 %v3177
  %v3731 = vpop.f32.mrf.mxu0
  %v3732 = vadd.f32 %v3719, %v3731
  %v3733 = vpop.f32.mrf.mxu0
  %3734 = vdwg.mxu0
  %3735 = vmatpush.bf16.msra.mxu0 %v3599
  %3736 = vmatpush.bf16.msra.mxu0 %v3598
  %3737 = vmatpush.bf16.msra.mxu0 %v3597
  %3738 = vmatpush.bf16.msra.mxu0 %v3596
  %3739 = vmatpush.bf16.msra.mxu0 %v3595
  %3740 = vmatpush.bf16.msra.mxu0 %v3594
  %3741 = vmatpush.bf16.msra.mxu0 %v3593
  %3742 = vmatpush.bf16.msra.mxu0 %v3592
  %3743 = vmatmul.bf16.gmra.mxu0 %v3178
  %v3744 = vpop.f32.mrf.mxu0
  %v3745 = vadd.f32 %v3732, %v3744
  %v3746 = vpop.f32.mrf.mxu0
  %3747 = vdwg.mxu0
  %3748 = vmatpush.bf16.msra.mxu0 %v3607
  %3749 = vmatpush.bf16.msra.mxu0 %v3606
  %3750 = vmatpush.bf16.msra.mxu0 %v3605
  %3751 = vmatpush.bf16.msra.mxu0 %v3604
  %3752 = vmatpush.bf16.msra.mxu0 %v3603
  %3753 = vmatpush.bf16.msra.mxu0 %v3602
  %3754 = vmatpush.bf16.msra.mxu0 %v3601
  %3755 = vmatpush.bf16.msra.mxu0 %v3600
  %3756 = vmatmul.bf16.gmra.mxu0 %v3179
  %v3757 = vpop.f32.mrf.mxu0
  %v3758 = vadd.f32 %v3745, %v3757
  %v3759 = vpop.f32.mrf.mxu0
  %3760 = vdwg.mxu0
  %3761 = vmatpush.bf16.msra.mxu0 %v3615
  %3762 = vmatpush.bf16.msra.mxu0 %v3614
  %3763 = vmatpush.bf16.msra.mxu0 %v3613
  %3764 = vmatpush.bf16.msra.mxu0 %v3612
  %3765 = vmatpush.bf16.msra.mxu0 %v3611
  %3766 = vmatpush.bf16.msra.mxu0 %v3610
  %3767 = vmatpush.bf16.msra.mxu0 %v3609
  %3768 = vmatpush.bf16.msra.mxu0 %v3608
  %3769 = vmatmul.bf16.gmra.mxu0 %v3180
  %v3770 = vpop.f32.mrf.mxu0
  %v3771 = vadd.f32 %v3758, %v3770
  %v3772 = vpop.f32.mrf.mxu0
  %3773 = vdwg.mxu0
  %3774 = vmatpush.bf16.msra.mxu0 %v3623
  %3775 = vmatpush.bf16.msra.mxu0 %v3622
  %3776 = vmatpush.bf16.msra.mxu0 %v3621
  %3777 = vmatpush.bf16.msra.mxu0 %v3620
  %3778 = vmatpush.bf16.msra.mxu0 %v3619
  %3779 = vmatpush.bf16.msra.mxu0 %v3618
  %3780 = vmatpush.bf16.msra.mxu0 %v3617
  %3781 = vmatpush.bf16.msra.mxu0 %v3616
  %3782 = vmatmul.bf16.gmra.mxu0 %v3181
  %v3783 = vpop.f32.mrf.mxu0
  %v3784 = vadd.f32 %v3771, %v3783
  %v3785 = vpop.f32.mrf.mxu0
  %3786 = vdwg.mxu0
  %3787 = vmatpush.bf16.msra.mxu0 %v3631
  %3788 = vmatpush.bf16.msra.mxu0 %v3630
  %3789 = vmatpush.bf16.msra.mxu0 %v3629
  %3790 = vmatpush.bf16.msra.mxu0 %v3628
  %3791 = vmatpush.bf16.msra.mxu0 %v3627
  %3792 = vmatpush.bf16.msra.mxu0 %v3626
  %3793 = vmatpush.bf16.msra.mxu0 %v3625
  %3794 = vmatpush.bf16.msra.mxu0 %v3624
  %3795 = vmatmul.bf16.gmra.mxu0 %v3182
  %v3796 = vpop.f32.mrf.mxu0
  %v3797 = vadd.f32 %v3784, %v3796
  %v3798 = vpop.f32.mrf.mxu0
  %3799 = vdwg.mxu0
  %v3800 = vpack.c.bf16 %v3797, %v3797
  %v3801 = vld [vmem:[%s4] sm:$0xf]
  %v3802 = vld [vmem:[%s4 + $0x4] sm:$0xf]
  %v3803 = vld [vmem:[%s4 + $0x8] sm:$0xf]
  %v3804 = vld [vmem:[%s4 + $0xc] sm:$0xf]
  %v3805 = vperm.slane %v27, 3
  %v3810 = vunpack.c.l.b16 %v3801
  %v3811 = vunpack.c.l.b16 %v3802
  %v3812 = vunpack.c.l.b16 %v3803
  %v3813 = vunpack.c.l.b16 %v3804
  %v3814 = vpack.c.b16 %v3811, %v3810
  %v3815 = vpack.c.b16 %v3813, %v3812
  %vm3818 = vcmask 261120
  %v3820 = vsel %vm3818, %v3800, 0
  %3822 = vmatpush.bf16.msra.mxu0 0
  %3823 = vmatpush.bf16.msra.mxu0 0
  %3824 = vmatpush.bf16.msra.mxu0 0
  %3825 = vmatpush.bf16.msra.mxu0 0
  %3826 = vmatpush.bf16.msra.mxu0 0
  %3827 = vmatpush.bf16.msra.mxu0 0
  %3828 = vmatpush.bf16.msra.mxu0 %v3815
  %3829 = vmatpush.bf16.msra.mxu0 %v3814
  %3830 = vmatmul.bf16.gmra.mxu0 %v3820
  %v3831 = vpop.f32.mrf.mxu0
  %v3832 = vadd.f32 %v3805, %v3831
  %v3833 = vpop.f32.mrf.mxu0
  %3834 = vdwg.mxu0
  %v3835 = vmax.f32 %v3832, 0.0
  %v3836 = vpack.c.bf16 %v3835, %v3835
  %v3837 = vld [vmem:[%s5] sm:$0xf]
  %v3838 = vld [vmem:[%s5 + $0x4] sm:$0xf]
  %v3839 = vld [vmem:[%s5 + $0x8] sm:$0xf]
  %v3840 = vld [vmem:[%s5 + $0xc] sm:$0xf]
  %v3841 = vld [vmem:[%s5 + $0x10] sm:$0xf]
  %v3842 = vld [vmem:[%s5 + $0x14] sm:$0xf]
  %v3843 = vld [vmem:[%s5 + $0x18] sm:$0xf]
  %v3844 = vld [vmem:[%s5 + $0x1c] sm:$0xf]
  %v3845 = vld [vmem:[%s5 + $0x20] sm:$0xf]
  %v3846 = vld [vmem:[%s5 + $0x24] sm:$0xf]
  %v3847 = vld [vmem:[%s5 + $0x28] sm:$0xf]
  %v3848 = vld [vmem:[%s5 + $0x2c] sm:$0xf]
  %v3849 = vld [vmem:[%s5 + $0x30] sm:$0xf]
  %v3850 = vld [vmem:[%s5 + $0x34] sm:$0xf]
  %v3851 = vld [vmem:[%s5 + $0x38] sm:$0xf]
  %v3852 = vld [vmem:[%s5 + $0x3c] sm:$0xf]
  %v3853 = vperm.slane %v27, 4
  %v3870 = vunpack.c.l.b16 %v3837
  %v3871 = vunpack.c.l.b16 %v3838
  %v3872 = vunpack.c.l.b16 %v3839
  %v3873 = vunpack.c.l.b16 %v3840
  %v3874 = vunpack.c.l.b16 %v3841
  %v3875 = vunpack.c.l.b16 %v3842
  %v3876 = vunpack.c.l.b16 %v3843
  %v3877 = vunpack.c.l.b16 %v3844
  %v3878 = vunpack.c.l.b16 %v3845
  %v3879 = vunpack.c.l.b16 %v3846
  %v3880 = vunpack.c.l.b16 %v3847
  %v3881 = vunpack.c.l.b16 %v3848
  %v3882 = vunpack.c.l.b16 %v3849
  %v3883 = vunpack.c.l.b16 %v3850
  %v3884 = vunpack.c.l.b16 %v3851
  %v3885 = vunpack.c.l.b16 %v3852
  %v3886 = vpack.c.b16 %v3871, %v3870
  %v3887 = vpack.c.b16 %v3873, %v3872
  %v3888 = vpack.c.b16 %v3875, %v3874
  %v3889 = vpack.c.b16 %v3877, %v3876
  %v3890 = vpack.c.b16 %v3879, %v3878
  %v3891 = vpack.c.b16 %v3881, %v3880
  %v3892 = vpack.c.b16 %v3883, %v3882
  %v3893 = vpack.c.b16 %v3885, %v3884
  %3902 = vmatpush.bf16.msra.mxu0 %v3893
  %3903 = vmatpush.bf16.msra.mxu0 %v3892
  %3904 = vmatpush.bf16.msra.mxu0 %v3891
  %3905 = vmatpush.bf16.msra.mxu0 %v3890
  %3906 = vmatpush.bf16.msra.mxu0 %v3889
  %3907 = vmatpush.bf16.msra.mxu0 %v3888
  %3908 = vmatpush.bf16.msra.mxu0 %v3887
  %3909 = vmatpush.bf16.msra.mxu0 %v3886
  %3910 = vmatmul.bf16.gmra.mxu0 %v3836
  %v3911 = vpop.f32.mrf.mxu0
  %v3912 = vadd.f32 %v3853, %v3911
  %v3913 = vpop.f32.mrf.mxu0
  %3914 = vdwg.mxu0
  %3915 = vmax.xlane.f32.xlu0 %v3912
  %v3916 = vpop.xlane.xlu0 %3915
  %v3917 = vsub.f32 %v3912, %v3916
  %v3918 = vmul.f32 %v3917, 1.442695
  %v3919 = vpow.pop %v3918
  %3920 = vadd.xlane.f32.xlu0 %v3919
  %v3921 = vpop.xlane.xlu0 %3920
  %v3922 = vrcp.pop %v3921
  %v3923 = vmul.f32 %v3921, %v3922
  %v3924 = vsub.f32 1.0, %v3923
  %v3925 = vmul.f32 %v3922, %v3924
  %v3926 = vadd.f32 %v3922, %v3925
  %vm3927 = vweird.f32 %v3921
  %vm3928 = vweird.f32 %v3922
  %vm3929 = vmor %vm3927, %vm3928
  %v3930 = vsel %vm3929, %v3922, %v3926
  %v3931 = vand.u32 2147483647, %v3921
  %vm3932 = vcmp.eq.f32.partialorder %v3931, 8.507059e+37
  %v3933 = vand.u32 %v3921, 2147483648
  %v3934 = vor.u32 1.1754944e-38, %v3933
  %v3935 = vsel %vm3932, %v3934, %v3930
  %v3936 = vmul.f32 %v3919, %v3935
  %3937 = vst [vmem:[%s7] sm:$0xff] %v3936
  // Predicated region
  $region30: #{forward.1} parent=0 // pred_check
    _
  $region31: #{forward.1} parent=0 // pred_check_branch
    %3939 = sbr.rel (0) target = $region33
  $region32: #{forward.1} parent=0 // pred_region
    _
  $region33: #{forward.1} parent=0 // pred_fallthru
    _
  // Predicated region
  $region34: #{forward.1} parent=0 // pred_check
    _
  $region35: #{forward.1} parent=0 // pred_check_branch
    %3941 = sbr.rel (0) target = $region37
  $region36: #{forward.1} parent=0 // pred_region
    _
  $region37: #{forward.1} parent=0 // pred_fallthru
    _

</llo_original>
